<compile_context>
chip_gen: v7x
topology: tpu7x:2x2x1
jax: 0.10.0
libtpu: 0.0.40
codegen_flags: <defaults>
</compile_context>

<pallas_src>
import functools
import math

import jax
import jax.numpy as jnp
from jax.experimental import pallas as pl
from jax.experimental.pallas import tpu as pltpu


# ---------------------------------------------------------------------------
# tiling helpers
# ---------------------------------------------------------------------------
def _vmem_bytes_estimate(chunk, t, tk, d, ksize):
    io = 2 * 4 * chunk * t * d * 4                              # 3 in + 1 out slabs, 2 bufs
    msk = 2 * t * tk * 4
    wts = 2 * ((2 * ksize + 2) * d * d * 2 + 4 * d * 4)         # bf16 weights + f32 biases
    scratch = (2 * chunk * t * d + chunk * tk * d) * 4          # conv outs + head outs
    interm = 4 * chunk * t * tk * 4 + 6 * chunk * t * d * 4     # scores/softmax/temp margin
    return io + msk + wts + scratch + interm


def _choose_chunk(n_nodes, batch, t, tk, d, ksize, budget=40 * 2**20):
    """Largest divisor of n_nodes targeting ~1024 sublane rows that fits the
    VMEM budget; keep >= 2 total grid steps when possible (v7x has 2 TCs)."""
    pref = max(1, 1024 // max(t, 1))
    divisors = [c for c in range(1, n_nodes + 1) if n_nodes % c == 0]
    fitting = [c for c in divisors
               if c <= pref and _vmem_bytes_estimate(c, t, tk, d, ksize) <= budget]
    if not fitting:
        fitting = [1]
    chunk = max(fitting)
    if batch * (n_nodes // chunk) < 2:
        multi = [c for c in fitting if n_nodes // c >= 2]
        if multi:
            chunk = max(multi)
    return chunk


# ---------------------------------------------------------------------------
# in-kernel temporal conv: per-tap matmul accumulated into a VMEM scratch ref
# ---------------------------------------------------------------------------
def _conv_taps_into(x, w_ref, b_ref, out_ref, offs):
    """1xK temporal conv (Conv2d cross-correlation) into a VMEM scratch ref.

    x: (C, T_in, D) value.  w_ref: (K, D_in, D_out) bf16 with
    w[j, i, o] = W_torch[o, i, 0, j].  b_ref: (1, D) f32.
    out_ref: (C, T_out, D) f32 scratch.  offs[j] is the output-row offset of
    tap j, i.e.  out[t' + offs[j]] += x[t'] @ w[j]  for the valid rows.
    No zero-padded copy of x is materialized: each tap is one bf16 MXU matmul
    over the valid rows plus a sliced read-modify-write of the scratch.
    """
    C, t_in, D = x.shape
    t_out = out_ref.shape[1]
    out_ref[...] = jnp.broadcast_to(b_ref[...], out_ref.shape)   # init with bias
    for j, off in enumerate(offs):                               # static unroll (K taps)
        lo_in = max(0, -off)
        hi_in = min(t_in, t_out - off)
        L = hi_in - lo_in
        if L <= 0:
            continue
        lo_out = lo_in + off
        xj = x[:, lo_in:hi_in, :].reshape(C * L, D).astype(jnp.bfloat16)
        y = jnp.dot(xj, w_ref[j], preferred_element_type=jnp.float32)
        out_ref[:, lo_out:lo_out + L, :] += y.reshape(C, L, D)


# ---------------------------------------------------------------------------
# fused forward kernel: convs + value-linear + attention + output-linear
# ---------------------------------------------------------------------------
def _fused_mha_kernel(q_ref, k_ref, v_ref, m_ref,
                      wq_ref, bq_ref, wk_ref, bk_ref,
                      wv_ref, bv_ref, w1_ref, b1_ref,
                      o_ref, qc_ref, kc_ref, xh_ref,
                      *, h, d_k, offs_q, offs_k):
    qin = q_ref[...]                    # (C, T, D)
    kin = k_ref[...]                    # (C, T, D)
    vin = v_ref[...]                    # (C, T, D)
    madd = m_ref[...]                   # (T, Tk) additive mask (0 or -1e9), f32

    C, T, D = qin.shape
    Tk = kc_ref.shape[1]

    # --- temporal convolutions (query: causal, key: 'same').  The attention
    #     scale 1/sqrt(d_k) is already folded into wq/bq at init time.
    _conv_taps_into(qin, wq_ref, bq_ref, qc_ref, offs_q)
    _conv_taps_into(kin, wk_ref, bk_ref, kc_ref, offs_k)

    # --- value linear projection (bf16 MXU, f32 accumulate) -----------------
    v = jnp.dot(vin.reshape(C * T, D).astype(jnp.bfloat16), wv_ref[...],
                preferred_element_type=jnp.float32).reshape(C, T, D)
    vb = (v + bv_ref[...]).astype(jnp.bfloat16)

    # --- attention: bf16 operands, f32 softmax -------------------------------
    qb = qc_ref[...].astype(jnp.bfloat16)                          # (C, T, D)
    kTb = jnp.swapaxes(kc_ref[...], 1, 2).astype(jnp.bfloat16)     # (C, D, Tk), one transpose
    madd_full = jnp.broadcast_to(madd[None, :, :], (C, T, Tk))     # hoisted broadcast

    for hi in range(h):                                            # static unroll (heads)
        lo = hi * d_k
        s = jnp.einsum("ctd,cds->cts", qb[:, :, lo:lo + d_k],
                       kTb[:, lo:lo + d_k, :],
                       preferred_element_type=jnp.float32)         # (C, T, Tk)
        s = s + madd_full
        s = s - jnp.max(s, axis=-1, keepdims=True)
        p = jnp.exp(s)
        p = p * pl.reciprocal(jnp.sum(p, axis=-1, keepdims=True), approx=True)
        # dropout p=0.0 in the reference module -> identity.
        xh_ref[:, :, lo:lo + d_k] = jnp.einsum(
            "cts,csd->ctd", p.astype(jnp.bfloat16), vb[:, :, lo:lo + d_k],
            preferred_element_type=jnp.float32)

    # --- output linear projection --------------------------------------------
    xb = xh_ref[...].astype(jnp.bfloat16).reshape(C * T, D)
    y = jnp.dot(xb, w1_ref[...], preferred_element_type=jnp.float32).reshape(C, T, D)
    o_ref[...] = (y + b1_ref[...]).astype(o_ref.dtype)


# ---------------------------------------------------------------------------
# Module
# ---------------------------------------------------------------------------
class MHAAwareTemporalContextQcK1d:
    """JAX/Pallas port of MultiHeadAttentionAwareTemporalContex_qc_k1d."""

    def __init__(self, nb_head, d_model, kernel_size=3, dropout=0.0, key=None):
        assert d_model % nb_head == 0
        self.h = nb_head
        self.d_k = d_model // nb_head
        self.d_model = d_model
        self.kernel_size = kernel_size
        self.causal_padding = kernel_size - 1
        self.padding_1D = (kernel_size - 1) // 2
        self.dropout = dropout
        # TODO(synk): attention dropout with p>0 and the stored p_attn attribute
        # are not implemented (module default p=0.0 makes dropout the identity).

        key = jax.random.PRNGKey(0) if key is None else key
        ks = jax.random.split(key, 8)
        s = 0.1
        D, K = d_model, kernel_size
        # Reference (PyTorch-layout, f32) parameters.
        self.Wq = s * jax.random.normal(ks[0], (D, D, 1, K), jnp.float32)
        self.bq = s * jax.random.normal(ks[1], (D,), jnp.float32)
        self.Wk = s * jax.random.normal(ks[2], (D, D, 1, K), jnp.float32)
        self.bk = s * jax.random.normal(ks[3], (D,), jnp.float32)
        self.Wv0 = s * jax.random.normal(ks[4], (D, D), jnp.float32)
        self.bv0 = s * jax.random.normal(ks[5], (D,), jnp.float32)
        self.W1 = s * jax.random.normal(ks[6], (D, D), jnp.float32)
        self.b1 = s * jax.random.normal(ks[7], (D,), jnp.float32)

        # Kernel-facing layouts, built ONCE at init:
        #   conv: Wmat[j, i, o] = W[o, i, 0, j] -> (K, D_in, D_out), bf16 MXU operand.
        #   The 1/sqrt(d_k) attention scale is folded into the query conv weight+bias.
        scale = 1.0 / math.sqrt(self.d_k)
        self.Wq_mat = (jnp.transpose(self.Wq[:, :, 0, :], (2, 1, 0)) * scale
                       ).astype(jnp.bfloat16)
        self.bq_row = (self.bq * scale)[None, :]                       # f32 (1, D)
        self.Wk_mat = jnp.transpose(self.Wk[:, :, 0, :], (2, 1, 0)).astype(jnp.bfloat16)
        self.bk_row = self.bk[None, :]
        #   linear: (out, in) -> (in, out) so y = x @ W, bf16.
        self.WvT = self.Wv0.T.astype(jnp.bfloat16)
        self.bv_row = self.bv0[None, :]
        self.W1T = self.W1.T.astype(jnp.bfloat16)
        self.b1_row = self.b1[None, :]

    # -- forward ------------------------------------------------------------
    def __call__(self, query, key, value, mask=None):
        """query/key/value: (B, N, T, d_model); mask: (B, T, T) or None."""
        B, Nn, T, D = query.shape
        K = self.kernel_size
        Tk = T + 2 * self.padding_1D - K + 1
        h, d_k = self.h, self.d_k

        # output-row offset of each conv tap: out[t'+off] += x[t'] @ w[tap]
        offs_q = tuple(self.causal_padding - j for j in range(K))   # causal (left pad K-1)
        offs_k = tuple(self.padding_1D - j for j in range(K))       # 'same' (pad (K-1)//2)

        chunk = _choose_chunk(Nn, B, T, Tk, D, K)

        # Additive mask, exact masked_fill equivalent: -1e9 where mask == 0.
        if mask is None:
            mask_add = jnp.zeros((B, T, Tk), jnp.float32)
        else:
            mask_add = jnp.where(mask == 0, jnp.float32(-1e9), jnp.float32(0.0))

        kernel = functools.partial(_fused_mha_kernel, h=h, d_k=d_k,
                                   offs_q=offs_q, offs_k=offs_k)

        grid = (B, Nn // chunk)
        blk_act = pl.BlockSpec((None, chunk, T, D), lambda b, n: (b, n, 0, 0))
        blk_mask = pl.BlockSpec((None, T, Tk), lambda b, n: (b, 0, 0))
        blk_wconv = pl.BlockSpec((K, D, D), lambda b, n: (0, 0, 0))
        blk_wlin = pl.BlockSpec((D, D), lambda b, n: (0, 0))
        blk_bias = pl.BlockSpec((1, D), lambda b, n: (0, 0))
        out_spec = pl.BlockSpec((None, chunk, T, D), lambda b, n: (b, n, 0, 0))

        flops = (2 * B * Nn * T * D * D * (2 * K + 2)           # convs + value/out linears
                 + 4 * B * Nn * h * T * Tk * d_k)               # QK^T + PV
        cost = pl.CostEstimate(
            flops=flops,
            transcendentals=B * Nn * h * T * Tk,
            bytes_accessed=(4 * B * Nn * T * D * 4 + B * T * Tk * 4
                            + (2 * K + 2) * D * D * 2 + 4 * D * 4))

        vmem_limit = int(min(64 * 2**20,
                             max(32 * 2**20,
                                 2 * _vmem_bytes_estimate(chunk, T, Tk, D, K))))

        return pl.pallas_call(
            kernel,
            out_shape=jax.ShapeDtypeStruct((B, Nn, T, D), query.dtype),
            grid=grid,
            in_specs=[blk_act, blk_act, blk_act, blk_mask,
                      blk_wconv, blk_bias, blk_wconv, blk_bias,
                      blk_wlin, blk_bias, blk_wlin, blk_bias],
            out_specs=out_spec,
            scratch_shapes=[pltpu.VMEM((chunk, T, D), jnp.float32),    # q-conv output
                            pltpu.VMEM((chunk, Tk, D), jnp.float32),   # k-conv output
                            pltpu.VMEM((chunk, T, D), jnp.float32)],   # head outputs
            compiler_params=pltpu.CompilerParams(
                dimension_semantics=("parallel", "parallel"),
                vmem_limit_bytes=vmem_limit),
            cost_estimate=cost,
        )(query, key, value, mask_add,
          self.Wq_mat, self.bq_row, self.Wk_mat, self.bk_row,
          self.WvT, self.bv_row, self.W1T, self.b1_row)


# ---------------------------------------------------------------------------
# Pure-JAX f32 reference (mirrors the PyTorch forward op-for-op).
# ---------------------------------------------------------------------------
def reference_forward(m: MHAAwareTemporalContextQcK1d, query, key, value, mask):
    B, Nn, T, D = query.shape
    K = m.kernel_size
    dn = ("NCHW", "OIHW", "NCHW")

    qt = jnp.transpose(query, (0, 3, 1, 2))                     # (B, D, N, T)
    q_conv = jax.lax.conv_general_dilated(
        qt, m.Wq, (1, 1), [(0, 0), (K - 1, 0)], dimension_numbers=dn)
    q_conv = q_conv + m.bq[None, :, None, None]

    kt = jnp.transpose(key, (0, 3, 1, 2))
    p = m.padding_1D
    k_conv = jax.lax.conv_general_dilated(
        kt, m.Wk, (1, 1), [(0, 0), (p, p)], dimension_numbers=dn)
    k_conv = k_conv + m.bk[None, :, None, None]

    q5 = jnp.transpose(q_conv.reshape(B, m.h, m.d_k, Nn, T), (0, 3, 1, 4, 2))
    k5 = jnp.transpose(k_conv.reshape(B, m.h, m.d_k, Nn, -1), (0, 3, 1, 4, 2))

    v_lin = jnp.einsum("bntd,ed->bnte", value, m.Wv0) + m.bv0
    v5 = jnp.transpose(v_lin.reshape(B, Nn, T, m.h, m.d_k), (0, 1, 3, 2, 4))

    scores = jnp.einsum("bnhtd,bnhsd->bnhts", q5, k5) / math.sqrt(m.d_k)
    if mask is not None:
        scores = jnp.where(mask[:, None, None, :, :] == 0, -1e9, scores)
    pa = jax.nn.softmax(scores, axis=-1)
    x = jnp.einsum("bnhts,bnhsd->bnhtd", pa, v5)
    x = jnp.transpose(x, (0, 1, 3, 2, 4)).reshape(B, Nn, T, D)
    return jnp.einsum("bntd,ed->bnte", x, m.W1) + m.b1


# ---------------------------------------------------------------------------
if __name__ == "__main__":
    B, Nn, T, d_model, nb_head, ksz = 2, 3, 8, 32, 4, 3

    root = jax.random.PRNGKey(0)
    kq, kk, kv, kp = jax.random.split(root, 4)
    query = jax.random.normal(kq, (B, Nn, T, d_model), jnp.float32)
    key_in = jax.random.normal(kk, (B, Nn, T, d_model), jnp.float32)
    value = jax.random.normal(kv, (B, Nn, T, d_model), jnp.float32)
    # causal mask (batch, T, T), as the PyTorch module expects
    mask = jnp.broadcast_to(
        jnp.tril(jnp.ones((T, T), jnp.float32))[None], (B, T, T))

    module = MHAAwareTemporalContextQcK1d(nb_head, d_model, kernel_size=ksz,
                                          dropout=0.0, key=kp)

    out = jax.block_until_ready(module(query, key_in, value, mask))
    assert out.shape == (B, Nn, T, d_model)

    ref = jax.block_until_ready(
        reference_forward(module, query, key_in, value, mask))
    err = float(jnp.max(jnp.abs(out - ref)))
    ref_scale = float(jnp.max(jnp.abs(ref)))
    # bf16 MXU operands + approx-reciprocal softmax vs the f32 reference.
    tol = max(6e-2, 6e-2 * ref_scale)
    assert err < tol, f"mismatch vs reference: max abs err = {err} (tol {tol})"

    print("KERNEL_OK")
</pallas_src>

<mosaic_0001>
module attributes {stable_mosaic.version = 11 : i64} {
  func.func @_fused_mha_kernel(%arg0: i32, %arg1: i32, %arg2: memref<1x3x8x32xf32, #tpu.memory_space<vmem>>, %arg3: memref<1x3x8x32xf32, #tpu.memory_space<vmem>>, %arg4: memref<1x3x8x32xf32, #tpu.memory_space<vmem>>, %arg5: memref<1x8x8xf32, #tpu.memory_space<vmem>>, %arg6: memref<3x32x32xbf16, #tpu.memory_space<vmem>>, %arg7: memref<1x32xf32, #tpu.memory_space<vmem>>, %arg8: memref<3x32x32xbf16, #tpu.memory_space<vmem>>, %arg9: memref<1x32xf32, #tpu.memory_space<vmem>>, %arg10: memref<32x32xbf16, #tpu.memory_space<vmem>>, %arg11: memref<1x32xf32, #tpu.memory_space<vmem>>, %arg12: memref<32x32xbf16, #tpu.memory_space<vmem>>, %arg13: memref<1x32xf32, #tpu.memory_space<vmem>>, %arg14: memref<1x3x8x32xf32, #tpu.memory_space<vmem>>, %arg15: memref<3x8x32xf32, #tpu.memory_space<vmem>>, %arg16: memref<3x8x32xf32, #tpu.memory_space<vmem>>, %arg17: memref<3x8x32xf32, #tpu.memory_space<vmem>>) attributes {dimension_semantics = [#tpu.dimension_semantics<parallel>, #tpu.dimension_semantics<parallel>], iteration_bounds = array<i64: 2, 1>, scalar_prefetch = 0 : i64, scratch_operands = 3 : i64, tpu.core_type = #tpu.core_type<tc>, window_params = [{transform_indices = @transform_0, window_bounds = array<i64: 1, 3, 8, 32>}, {transform_indices = @transform_1, window_bounds = array<i64: 1, 3, 8, 32>}, {transform_indices = @transform_2, window_bounds = array<i64: 1, 3, 8, 32>}, {transform_indices = @transform_3, window_bounds = array<i64: 1, 8, 8>}, {pipeline_mode = #tpu.pipeline_mode<synchronous>, transform_indices = @transform_4, window_bounds = array<i64: 3, 32, 32>}, {pipeline_mode = #tpu.pipeline_mode<synchronous>, transform_indices = @transform_5, window_bounds = array<i64: 1, 32>}, {pipeline_mode = #tpu.pipeline_mode<synchronous>, transform_indices = @transform_6, window_bounds = array<i64: 3, 32, 32>}, {pipeline_mode = #tpu.pipeline_mode<synchronous>, transform_indices = @transform_7, window_bounds = array<i64: 1, 32>}, {pipeline_mode = #tpu.pipeline_mode<synchronous>, transform_indices = @transform_8, window_bounds = array<i64: 32, 32>}, {pipeline_mode = #tpu.pipeline_mode<synchronous>, transform_indices = @transform_9, window_bounds = array<i64: 1, 32>}, {pipeline_mode = #tpu.pipeline_mode<synchronous>, transform_indices = @transform_10, window_bounds = array<i64: 32, 32>}, {pipeline_mode = #tpu.pipeline_mode<synchronous>, transform_indices = @transform_11, window_bounds = array<i64: 1, 32>}, {transform_indices = @transform_12, window_bounds = array<i64: 1, 3, 8, 32>}]} {
    %c0 = arith.constant 0 : index
    %c0_0 = arith.constant 0 : index
    %c0_1 = arith.constant 0 : index
    %c0_2 = arith.constant 0 : index
    %0 = vector.load %arg2[%c0, %c0_0, %c0_1, %c0_2] : memref<1x3x8x32xf32, #tpu.memory_space<vmem>>, vector<1x3x8x32xf32>
    %1 = vector.shape_cast %0 : vector<1x3x8x32xf32> to vector<3x8x32xf32>
    %c0_3 = arith.constant 0 : index
    %c0_4 = arith.constant 0 : index
    %c0_5 = arith.constant 0 : index
    %c0_6 = arith.constant 0 : index
    %2 = vector.load %arg3[%c0_3, %c0_4, %c0_5, %c0_6] : memref<1x3x8x32xf32, #tpu.memory_space<vmem>>, vector<1x3x8x32xf32>
    %3 = vector.shape_cast %2 : vector<1x3x8x32xf32> to vector<3x8x32xf32>
    %c0_7 = arith.constant 0 : index
    %c0_8 = arith.constant 0 : index
    %c0_9 = arith.constant 0 : index
    %c0_10 = arith.constant 0 : index
    %4 = vector.load %arg4[%c0_7, %c0_8, %c0_9, %c0_10] : memref<1x3x8x32xf32, #tpu.memory_space<vmem>>, vector<1x3x8x32xf32>
    %5 = vector.shape_cast %4 : vector<1x3x8x32xf32> to vector<3x8x32xf32>
    %c0_11 = arith.constant 0 : index
    %c0_12 = arith.constant 0 : index
    %c0_13 = arith.constant 0 : index
    %6 = vector.load %arg5[%c0_11, %c0_12, %c0_13] : memref<1x8x8xf32, #tpu.memory_space<vmem>>, vector<1x8x8xf32>
    %7 = vector.shape_cast %6 : vector<1x8x8xf32> to vector<8x8xf32>
    %c0_14 = arith.constant 0 : index
    %c0_15 = arith.constant 0 : index
    %8 = vector.load %arg7[%c0_14, %c0_15] : memref<1x32xf32, #tpu.memory_space<vmem>>, vector<1x32xf32>
    %9 = vector.shape_cast %8 : vector<1x32xf32> to vector<1x1x32xf32>
    %10 = vector.broadcast %9 : vector<1x1x32xf32> to vector<3x8x32xf32>
    %c0_16 = arith.constant 0 : index
    %c0_17 = arith.constant 0 : index
    %c0_18 = arith.constant 0 : index
    %11 = vector.load %arg15[%c0_16, %c0_17, %c0_18] : memref<3x8x32xf32, #tpu.memory_space<vmem>>, vector<3x8x32xf32>
    tpu.vector_store %arg15[%c0_16, %c0_17, %c0_18], %10 {strides = array<i32>} : memref<3x8x32xf32, #tpu.memory_space<vmem>>, vector<3x8x32xf32>,
    %12 = vector.extract_strided_slice %1 {offsets = [0, 0, 0], sizes = [3, 6, 32], strides = [1, 1, 1]} : vector<3x8x32xf32> to vector<3x6x32xf32>
    %13 = vector.shape_cast %12 : vector<3x6x32xf32> to vector<18x32xf32>
    %14 = arith.truncf %13 : vector<18x32xf32> to vector<18x32xbf16>
    %c0_19 = arith.constant 0 : index
    %c0_20 = arith.constant 0 : index
    %c0_21 = arith.constant 0 : index
    %15 = vector.load %arg6[%c0_19, %c0_20, %c0_21] : memref<3x32x32xbf16, #tpu.memory_space<vmem>>, vector<1x32x32xbf16>
    %16 = vector.shape_cast %15 : vector<1x32x32xbf16> to vector<32x32xbf16>
    %cst = arith.constant dense<0.000000e+00> : vector<18x32xf32>
    %17 = tpu.matmul %14, %16, %cst {dimension_numbers = #tpu.dot_dimension_numbers<[1], [0], [0], [1], [0, 0, 1, 1], [], []>} : vector<18x32xbf16>, vector<32x32xbf16>, vector<18x32xf32> -> vector<18x32xf32>
    %c0_22 = arith.constant 0 : index
    %c2 = arith.constant 2 : index
    %c0_23 = arith.constant 0 : index
    %18 = vector.load %arg15[%c0_22, %c2, %c0_23] : memref<3x8x32xf32, #tpu.memory_space<vmem>>, vector<3x6x32xf32>
    %19 = vector.shape_cast %17 : vector<18x32xf32> to vector<3x6x32xf32>
    %20 = arith.addf %18, %19 : vector<3x6x32xf32>
    %c0_24 = arith.constant 0 : index
    %c2_25 = arith.constant 2 : index
    %c0_26 = arith.constant 0 : index
    %21 = vector.load %arg15[%c0_24, %c2_25, %c0_26] : memref<3x8x32xf32, #tpu.memory_space<vmem>>, vector<3x6x32xf32>
    tpu.vector_store %arg15[%c0_24, %c2_25, %c0_26], %20 {strides = array<i32>} : memref<3x8x32xf32, #tpu.memory_space<vmem>>, vector<3x6x32xf32>,
    %22 = vector.extract_strided_slice %1 {offsets = [0, 0, 0], sizes = [3, 7, 32], strides = [1, 1, 1]} : vector<3x8x32xf32> to vector<3x7x32xf32>
    %23 = vector.shape_cast %22 : vector<3x7x32xf32> to vector<21x32xf32>
    %24 = arith.truncf %23 : vector<21x32xf32> to vector<21x32xbf16>
    %c1 = arith.constant 1 : index
    %c0_27 = arith.constant 0 : index
    %c0_28 = arith.constant 0 : index
    %25 = vector.load %arg6[%c1, %c0_27, %c0_28] : memref<3x32x32xbf16, #tpu.memory_space<vmem>>, vector<1x32x32xbf16>
    %26 = vector.shape_cast %25 : vector<1x32x32xbf16> to vector<32x32xbf16>
    %cst_29 = arith.constant dense<0.000000e+00> : vector<21x32xf32>
    %27 = tpu.matmul %24, %26, %cst_29 {dimension_numbers = #tpu.dot_dimension_numbers<[1], [0], [0], [1], [0, 0, 1, 1], [], []>} : vector<21x32xbf16>, vector<32x32xbf16>, vector<21x32xf32> -> vector<21x32xf32>
    %c0_30 = arith.constant 0 : index
    %c1_31 = arith.constant 1 : index
    %c0_32 = arith.constant 0 : index
    %28 = vector.load %arg15[%c0_30, %c1_31, %c0_32] : memref<3x8x32xf32, #tpu.memory_space<vmem>>, vector<3x7x32xf32>
    %29 = vector.shape_cast %27 : vector<21x32xf32> to vector<3x7x32xf32>
    %30 = arith.addf %28, %29 : vector<3x7x32xf32>
    %c0_33 = arith.constant 0 : index
    %c1_34 = arith.constant 1 : index
    %c0_35 = arith.constant 0 : index
    %31 = vector.load %arg15[%c0_33, %c1_34, %c0_35] : memref<3x8x32xf32, #tpu.memory_space<vmem>>, vector<3x7x32xf32>
    tpu.vector_store %arg15[%c0_33, %c1_34, %c0_35], %30 {strides = array<i32>} : memref<3x8x32xf32, #tpu.memory_space<vmem>>, vector<3x7x32xf32>,
    %32 = vector.shape_cast %1 : vector<3x8x32xf32> to vector<24x32xf32>
    %33 = arith.truncf %32 : vector<24x32xf32> to vector<24x32xbf16>
    %c2_36 = arith.constant 2 : index
    %c0_37 = arith.constant 0 : index
    %c0_38 = arith.constant 0 : index
    %34 = vector.load %arg6[%c2_36, %c0_37, %c0_38] : memref<3x32x32xbf16, #tpu.memory_space<vmem>>, vector<1x32x32xbf16>
    %35 = vector.shape_cast %34 : vector<1x32x32xbf16> to vector<32x32xbf16>
    %cst_39 = arith.constant dense<0.000000e+00> : vector<24x32xf32>
    %36 = tpu.matmul %33, %35, %cst_39 {dimension_numbers = #tpu.dot_dimension_numbers<[1], [0], [0], [1], [0, 0, 1, 1], [], []>} : vector<24x32xbf16>, vector<32x32xbf16>, vector<24x32xf32> -> vector<24x32xf32>
    %c0_40 = arith.constant 0 : index
    %c0_41 = arith.constant 0 : index
    %c0_42 = arith.constant 0 : index
    %37 = vector.load %arg15[%c0_40, %c0_41, %c0_42] : memref<3x8x32xf32, #tpu.memory_space<vmem>>, vector<3x8x32xf32>
    %38 = vector.shape_cast %36 : vector<24x32xf32> to vector<3x8x32xf32>
    %39 = arith.addf %37, %38 : vector<3x8x32xf32>
    %c0_43 = arith.constant 0 : index
    %c0_44 = arith.constant 0 : index
    %c0_45 = arith.constant 0 : index
    %40 = vector.load %arg15[%c0_43, %c0_44, %c0_45] : memref<3x8x32xf32, #tpu.memory_space<vmem>>, vector<3x8x32xf32>
    tpu.vector_store %arg15[%c0_43, %c0_44, %c0_45], %39 {strides = array<i32>} : memref<3x8x32xf32, #tpu.memory_space<vmem>>, vector<3x8x32xf32>,
    %c0_46 = arith.constant 0 : index
    %c0_47 = arith.constant 0 : index
    %41 = vector.load %arg9[%c0_46, %c0_47] : memref<1x32xf32, #tpu.memory_space<vmem>>, vector<1x32xf32>
    %42 = vector.shape_cast %41 : vector<1x32xf32> to vector<1x1x32xf32>
    %43 = vector.broadcast %42 : vector<1x1x32xf32> to vector<3x8x32xf32>
    %c0_48 = arith.constant 0 : index
    %c0_49 = arith.constant 0 : index
    %c0_50 = arith.constant 0 : index
    %44 = vector.load %arg16[%c0_48, %c0_49, %c0_50] : memref<3x8x32xf32, #tpu.memory_space<vmem>>, vector<3x8x32xf32>
    tpu.vector_store %arg16[%c0_48, %c0_49, %c0_50], %43 {strides = array<i32>} : memref<3x8x32xf32, #tpu.memory_space<vmem>>, vector<3x8x32xf32>,
    %45 = vector.extract_strided_slice %3 {offsets = [0, 0, 0], sizes = [3, 7, 32], strides = [1, 1, 1]} : vector<3x8x32xf32> to vector<3x7x32xf32>
    %46 = vector.shape_cast %45 : vector<3x7x32xf32> to vector<21x32xf32>
    %47 = arith.truncf %46 : vector<21x32xf32> to vector<21x32xbf16>
    %c0_51 = arith.constant 0 : index
    %c0_52 = arith.constant 0 : index
    %c0_53 = arith.constant 0 : index
    %48 = vector.load %arg8[%c0_51, %c0_52, %c0_53] : memref<3x32x32xbf16, #tpu.memory_space<vmem>>, vector<1x32x32xbf16>
    %49 = vector.shape_cast %48 : vector<1x32x32xbf16> to vector<32x32xbf16>
    %cst_54 = arith.constant dense<0.000000e+00> : vector<21x32xf32>
    %50 = tpu.matmul %47, %49, %cst_54 {dimension_numbers = #tpu.dot_dimension_numbers<[1], [0], [0], [1], [0, 0, 1, 1], [], []>} : vector<21x32xbf16>, vector<32x32xbf16>, vector<21x32xf32> -> vector<21x32xf32>
    %c0_55 = arith.constant 0 : index
    %c1_56 = arith.constant 1 : index
    %c0_57 = arith.constant 0 : index
    %51 = vector.load %arg16[%c0_55, %c1_56, %c0_57] : memref<3x8x32xf32, #tpu.memory_space<vmem>>, vector<3x7x32xf32>
    %52 = vector.shape_cast %50 : vector<21x32xf32> to vector<3x7x32xf32>
    %53 = arith.addf %51, %52 : vector<3x7x32xf32>
    %c0_58 = arith.constant 0 : index
    %c1_59 = arith.constant 1 : index
    %c0_60 = arith.constant 0 : index
    %54 = vector.load %arg16[%c0_58, %c1_59, %c0_60] : memref<3x8x32xf32, #tpu.memory_space<vmem>>, vector<3x7x32xf32>
    tpu.vector_store %arg16[%c0_58, %c1_59, %c0_60], %53 {strides = array<i32>} : memref<3x8x32xf32, #tpu.memory_space<vmem>>, vector<3x7x32xf32>,
    %55 = vector.shape_cast %3 : vector<3x8x32xf32> to vector<24x32xf32>
    %56 = arith.truncf %55 : vector<24x32xf32> to vector<24x32xbf16>
    %c1_61 = arith.constant 1 : index
    %c0_62 = arith.constant 0 : index
    %c0_63 = arith.constant 0 : index
    %57 = vector.load %arg8[%c1_61, %c0_62, %c0_63] : memref<3x32x32xbf16, #tpu.memory_space<vmem>>, vector<1x32x32xbf16>
    %58 = vector.shape_cast %57 : vector<1x32x32xbf16> to vector<32x32xbf16>
    %cst_64 = arith.constant dense<0.000000e+00> : vector<24x32xf32>
    %59 = tpu.matmul %56, %58, %cst_64 {dimension_numbers = #tpu.dot_dimension_numbers<[1], [0], [0], [1], [0, 0, 1, 1], [], []>} : vector<24x32xbf16>, vector<32x32xbf16>, vector<24x32xf32> -> vector<24x32xf32>
    %c0_65 = arith.constant 0 : index
    %c0_66 = arith.constant 0 : index
    %c0_67 = arith.constant 0 : index
    %60 = vector.load %arg16[%c0_65, %c0_66, %c0_67] : memref<3x8x32xf32, #tpu.memory_space<vmem>>, vector<3x8x32xf32>
    %61 = vector.shape_cast %59 : vector<24x32xf32> to vector<3x8x32xf32>
    %62 = arith.addf %60, %61 : vector<3x8x32xf32>
    %c0_68 = arith.constant 0 : index
    %c0_69 = arith.constant 0 : index
    %c0_70 = arith.constant 0 : index
    %63 = vector.load %arg16[%c0_68, %c0_69, %c0_70] : memref<3x8x32xf32, #tpu.memory_space<vmem>>, vector<3x8x32xf32>
    tpu.vector_store %arg16[%c0_68, %c0_69, %c0_70], %62 {strides = array<i32>} : memref<3x8x32xf32, #tpu.memory_space<vmem>>, vector<3x8x32xf32>,
    %64 = vector.extract_strided_slice %3 {offsets = [0, 1, 0], sizes = [3, 7, 32], strides = [1, 1, 1]} : vector<3x8x32xf32> to vector<3x7x32xf32>
    %65 = vector.shape_cast %64 : vector<3x7x32xf32> to vector<21x32xf32>
    %66 = arith.truncf %65 : vector<21x32xf32> to vector<21x32xbf16>
    %c2_71 = arith.constant 2 : index
    %c0_72 = arith.constant 0 : index
    %c0_73 = arith.constant 0 : index
    %67 = vector.load %arg8[%c2_71, %c0_72, %c0_73] : memref<3x32x32xbf16, #tpu.memory_space<vmem>>, vector<1x32x32xbf16>
    %68 = vector.shape_cast %67 : vector<1x32x32xbf16> to vector<32x32xbf16>
    %cst_74 = arith.constant dense<0.000000e+00> : vector<21x32xf32>
    %69 = tpu.matmul %66, %68, %cst_74 {dimension_numbers = #tpu.dot_dimension_numbers<[1], [0], [0], [1], [0, 0, 1, 1], [], []>} : vector<21x32xbf16>, vector<32x32xbf16>, vector<21x32xf32> -> vector<21x32xf32>
    %c0_75 = arith.constant 0 : index
    %c0_76 = arith.constant 0 : index
    %c0_77 = arith.constant 0 : index
    %70 = vector.load %arg16[%c0_75, %c0_76, %c0_77] : memref<3x8x32xf32, #tpu.memory_space<vmem>>, vector<3x7x32xf32>
    %71 = vector.shape_cast %69 : vector<21x32xf32> to vector<3x7x32xf32>
    %72 = arith.addf %70, %71 : vector<3x7x32xf32>
    %c0_78 = arith.constant 0 : index
    %c0_79 = arith.constant 0 : index
    %c0_80 = arith.constant 0 : index
    %73 = vector.load %arg16[%c0_78, %c0_79, %c0_80] : memref<3x8x32xf32, #tpu.memory_space<vmem>>, vector<3x7x32xf32>
    tpu.vector_store %arg16[%c0_78, %c0_79, %c0_80], %72 {strides = array<i32>} : memref<3x8x32xf32, #tpu.memory_space<vmem>>, vector<3x7x32xf32>,
    %74 = vector.shape_cast %5 : vector<3x8x32xf32> to vector<24x32xf32>
    %75 = arith.truncf %74 : vector<24x32xf32> to vector<24x32xbf16>
    %c0_81 = arith.constant 0 : index
    %c0_82 = arith.constant 0 : index
    %76 = vector.load %arg10[%c0_81, %c0_82] : memref<32x32xbf16, #tpu.memory_space<vmem>>, vector<32x32xbf16>
    %cst_83 = arith.constant dense<0.000000e+00> : vector<24x32xf32>
    %77 = tpu.matmul %75, %76, %cst_83 {dimension_numbers = #tpu.dot_dimension_numbers<[1], [0], [0], [1], [0, 0, 1, 1], [], []>} : vector<24x32xbf16>, vector<32x32xbf16>, vector<24x32xf32> -> vector<24x32xf32>
    %78 = vector.shape_cast %77 : vector<24x32xf32> to vector<3x8x32xf32>
    %c0_84 = arith.constant 0 : index
    %c0_85 = arith.constant 0 : index
    %79 = vector.load %arg11[%c0_84, %c0_85] : memref<1x32xf32, #tpu.memory_space<vmem>>, vector<1x32xf32>
    %80 = vector.shape_cast %79 : vector<1x32xf32> to vector<1x1x32xf32>
    %81 = vector.broadcast %80 : vector<1x1x32xf32> to vector<3x8x32xf32>
    %82 = arith.addf %78, %81 : vector<3x8x32xf32>
    %83 = arith.truncf %82 : vector<3x8x32xf32> to vector<3x8x32xbf16>
    %c0_86 = arith.constant 0 : index
    %c0_87 = arith.constant 0 : index
    %c0_88 = arith.constant 0 : index
    %84 = vector.load %arg15[%c0_86, %c0_87, %c0_88] : memref<3x8x32xf32, #tpu.memory_space<vmem>>, vector<3x8x32xf32>
    %85 = arith.truncf %84 : vector<3x8x32xf32> to vector<3x8x32xbf16>
    %c0_89 = arith.constant 0 : index
    %c0_90 = arith.constant 0 : index
    %c0_91 = arith.constant 0 : index
    %86 = vector.load %arg16[%c0_89, %c0_90, %c0_91] : memref<3x8x32xf32, #tpu.memory_space<vmem>>, vector<3x8x32xf32>
    %87 = tpu.transpose %86, [0, 2, 1] : vector<3x8x32xf32> -> vector<3x32x8xf32>
    %88 = arith.truncf %87 : vector<3x32x8xf32> to vector<3x32x8xbf16>
    %89 = vector.shape_cast %7 : vector<8x8xf32> to vector<1x8x8xf32>
    %90 = vector.shape_cast %89 : vector<1x8x8xf32> to vector<1x8x8xf32>
    %91 = vector.broadcast %90 : vector<1x8x8xf32> to vector<3x8x8xf32>
    %92 = vector.extract_strided_slice %85 {offsets = [0, 0, 0], sizes = [3, 8, 8], strides = [1, 1, 1]} : vector<3x8x32xbf16> to vector<3x8x8xbf16>
    %93 = vector.extract_strided_slice %88 {offsets = [0, 0, 0], sizes = [3, 8, 8], strides = [1, 1, 1]} : vector<3x32x8xbf16> to vector<3x8x8xbf16>
    "tpu.trace_start"() <{level = 10 : i32, message = "ctd,cds->cts"}> : () -> ()
    %cst_92 = arith.constant dense<0.000000e+00> : vector<3x8x8xf32>
    %94 = tpu.matmul %92, %93, %cst_92 {dimension_numbers = #tpu.dot_dimension_numbers<[2], [1], [1], [2], [0, 0, 0, 1, 1, 2], [0], [0]>} : vector<3x8x8xbf16>, vector<3x8x8xbf16>, vector<3x8x8xf32> -> vector<3x8x8xf32>
    "tpu.trace_stop"() : () -> ()
    %95 = arith.addf %94, %91 : vector<3x8x8xf32>
    %cst_93 = arith.constant dense<0xFF800000> : vector<3x8xf32>
    %96 = vector.multi_reduction <maximumf>, %95, %cst_93 [2] : vector<3x8x8xf32> to vector<3x8xf32>
    %97 = vector.shape_cast %96 : vector<3x8xf32> to vector<3x8x1xf32>
    %98 = vector.broadcast %97 : vector<3x8x1xf32> to vector<3x8x8xf32>
    %99 = arith.subf %95, %98 : vector<3x8x8xf32>
    %100 = math.exp %99 : vector<3x8x8xf32>
    %cst_94 = arith.constant dense<0.000000e+00> : vector<3x8xf32>
    %101 = vector.multi_reduction <add>, %100, %cst_94 [2] : vector<3x8x8xf32> to vector<3x8xf32>
    %102 = vector.shape_cast %101 : vector<3x8xf32> to vector<3x8x1xf32>
    %103 = tpu.reciprocal %102 {approx = true} : vector<3x8x1xf32> -> vector<3x8x1xf32>
    %104 = vector.broadcast %103 : vector<3x8x1xf32> to vector<3x8x8xf32>
    %105 = arith.mulf %100, %104 : vector<3x8x8xf32>
    %106 = arith.truncf %105 : vector<3x8x8xf32> to vector<3x8x8xbf16>
    %107 = vector.extract_strided_slice %83 {offsets = [0, 0, 0], sizes = [3, 8, 8], strides = [1, 1, 1]} : vector<3x8x32xbf16> to vector<3x8x8xbf16>
    "tpu.trace_start"() <{level = 10 : i32, message = "cts,csd->ctd"}> : () -> ()
    %cst_95 = arith.constant dense<0.000000e+00> : vector<3x8x8xf32>
    %108 = tpu.matmul %106, %107, %cst_95 {dimension_numbers = #tpu.dot_dimension_numbers<[2], [1], [1], [2], [0, 0, 0, 1, 1, 2], [0], [0]>} : vector<3x8x8xbf16>, vector<3x8x8xbf16>, vector<3x8x8xf32> -> vector<3x8x8xf32>
    "tpu.trace_stop"() : () -> ()
    %c0_96 = arith.constant 0 : index
    %c0_97 = arith.constant 0 : index
    %c0_98 = arith.constant 0 : index
    %109 = vector.load %arg17[%c0_96, %c0_97, %c0_98] : memref<3x8x32xf32, #tpu.memory_space<vmem>>, vector<3x8x8xf32>
    tpu.vector_store %arg17[%c0_96, %c0_97, %c0_98], %108 {strides = array<i32>} : memref<3x8x32xf32, #tpu.memory_space<vmem>>, vector<3x8x8xf32>,
    %110 = vector.extract_strided_slice %85 {offsets = [0, 0, 8], sizes = [3, 8, 8], strides = [1, 1, 1]} : vector<3x8x32xbf16> to vector<3x8x8xbf16>
    %111 = vector.extract_strided_slice %88 {offsets = [0, 8, 0], sizes = [3, 8, 8], strides = [1, 1, 1]} : vector<3x32x8xbf16> to vector<3x8x8xbf16>
    "tpu.trace_start"() <{level = 10 : i32, message = "ctd,cds->cts"}> : () -> ()
    %cst_99 = arith.constant dense<0.000000e+00> : vector<3x8x8xf32>
    %112 = tpu.matmul %110, %111, %cst_99 {dimension_numbers = #tpu.dot_dimension_numbers<[2], [1], [1], [2], [0, 0, 0, 1, 1, 2], [0], [0]>} : vector<3x8x8xbf16>, vector<3x8x8xbf16>, vector<3x8x8xf32> -> vector<3x8x8xf32>
    "tpu.trace_stop"() : () -> ()
    %113 = arith.addf %112, %91 : vector<3x8x8xf32>
    %cst_100 = arith.constant dense<0xFF800000> : vector<3x8xf32>
    %114 = vector.multi_reduction <maximumf>, %113, %cst_100 [2] : vector<3x8x8xf32> to vector<3x8xf32>
    %115 = vector.shape_cast %114 : vector<3x8xf32> to vector<3x8x1xf32>
    %116 = vector.broadcast %115 : vector<3x8x1xf32> to vector<3x8x8xf32>
    %117 = arith.subf %113, %116 : vector<3x8x8xf32>
    %118 = math.exp %117 : vector<3x8x8xf32>
    %cst_101 = arith.constant dense<0.000000e+00> : vector<3x8xf32>
    %119 = vector.multi_reduction <add>, %118, %cst_101 [2] : vector<3x8x8xf32> to vector<3x8xf32>
    %120 = vector.shape_cast %119 : vector<3x8xf32> to vector<3x8x1xf32>
    %121 = tpu.reciprocal %120 {approx = true} : vector<3x8x1xf32> -> vector<3x8x1xf32>
    %122 = vector.broadcast %121 : vector<3x8x1xf32> to vector<3x8x8xf32>
    %123 = arith.mulf %118, %122 : vector<3x8x8xf32>
    %124 = arith.truncf %123 : vector<3x8x8xf32> to vector<3x8x8xbf16>
    %125 = vector.extract_strided_slice %83 {offsets = [0, 0, 8], sizes = [3, 8, 8], strides = [1, 1, 1]} : vector<3x8x32xbf16> to vector<3x8x8xbf16>
    "tpu.trace_start"() <{level = 10 : i32, message = "cts,csd->ctd"}> : () -> ()
    %cst_102 = arith.constant dense<0.000000e+00> : vector<3x8x8xf32>
    %126 = tpu.matmul %124, %125, %cst_102 {dimension_numbers = #tpu.dot_dimension_numbers<[2], [1], [1], [2], [0, 0, 0, 1, 1, 2], [0], [0]>} : vector<3x8x8xbf16>, vector<3x8x8xbf16>, vector<3x8x8xf32> -> vector<3x8x8xf32>
    "tpu.trace_stop"() : () -> ()
    %c0_103 = arith.constant 0 : index
    %c0_104 = arith.constant 0 : index
    %c8 = arith.constant 8 : index
    %127 = vector.load %arg17[%c0_103, %c0_104, %c8] : memref<3x8x32xf32, #tpu.memory_space<vmem>>, vector<3x8x8xf32>
    tpu.vector_store %arg17[%c0_103, %c0_104, %c8], %126 {strides = array<i32>} : memref<3x8x32xf32, #tpu.memory_space<vmem>>, vector<3x8x8xf32>,
    %128 = vector.extract_strided_slice %85 {offsets = [0, 0, 16], sizes = [3, 8, 8], strides = [1, 1, 1]} : vector<3x8x32xbf16> to vector<3x8x8xbf16>
    %129 = vector.extract_strided_slice %88 {offsets = [0, 16, 0], sizes = [3, 8, 8], strides = [1, 1, 1]} : vector<3x32x8xbf16> to vector<3x8x8xbf16>
    "tpu.trace_start"() <{level = 10 : i32, message = "ctd,cds->cts"}> : () -> ()
    %cst_105 = arith.constant dense<0.000000e+00> : vector<3x8x8xf32>
    %130 = tpu.matmul %128, %129, %cst_105 {dimension_numbers = #tpu.dot_dimension_numbers<[2], [1], [1], [2], [0, 0, 0, 1, 1, 2], [0], [0]>} : vector<3x8x8xbf16>, vector<3x8x8xbf16>, vector<3x8x8xf32> -> vector<3x8x8xf32>
    "tpu.trace_stop"() : () -> ()
    %131 = arith.addf %130, %91 : vector<3x8x8xf32>
    %cst_106 = arith.constant dense<0xFF800000> : vector<3x8xf32>
    %132 = vector.multi_reduction <maximumf>, %131, %cst_106 [2] : vector<3x8x8xf32> to vector<3x8xf32>
    %133 = vector.shape_cast %132 : vector<3x8xf32> to vector<3x8x1xf32>
    %134 = vector.broadcast %133 : vector<3x8x1xf32> to vector<3x8x8xf32>
    %135 = arith.subf %131, %134 : vector<3x8x8xf32>
    %136 = math.exp %135 : vector<3x8x8xf32>
    %cst_107 = arith.constant dense<0.000000e+00> : vector<3x8xf32>
    %137 = vector.multi_reduction <add>, %136, %cst_107 [2] : vector<3x8x8xf32> to vector<3x8xf32>
    %138 = vector.shape_cast %137 : vector<3x8xf32> to vector<3x8x1xf32>
    %139 = tpu.reciprocal %138 {approx = true} : vector<3x8x1xf32> -> vector<3x8x1xf32>
    %140 = vector.broadcast %139 : vector<3x8x1xf32> to vector<3x8x8xf32>
    %141 = arith.mulf %136, %140 : vector<3x8x8xf32>
    %142 = arith.truncf %141 : vector<3x8x8xf32> to vector<3x8x8xbf16>
    %143 = vector.extract_strided_slice %83 {offsets = [0, 0, 16], sizes = [3, 8, 8], strides = [1, 1, 1]} : vector<3x8x32xbf16> to vector<3x8x8xbf16>
    "tpu.trace_start"() <{level = 10 : i32, message = "cts,csd->ctd"}> : () -> ()
    %cst_108 = arith.constant dense<0.000000e+00> : vector<3x8x8xf32>
    %144 = tpu.matmul %142, %143, %cst_108 {dimension_numbers = #tpu.dot_dimension_numbers<[2], [1], [1], [2], [0, 0, 0, 1, 1, 2], [0], [0]>} : vector<3x8x8xbf16>, vector<3x8x8xbf16>, vector<3x8x8xf32> -> vector<3x8x8xf32>
    "tpu.trace_stop"() : () -> ()
    %c0_109 = arith.constant 0 : index
    %c0_110 = arith.constant 0 : index
    %c16 = arith.constant 16 : index
    %145 = vector.load %arg17[%c0_109, %c0_110, %c16] : memref<3x8x32xf32, #tpu.memory_space<vmem>>, vector<3x8x8xf32>
    tpu.vector_store %arg17[%c0_109, %c0_110, %c16], %144 {strides = array<i32>} : memref<3x8x32xf32, #tpu.memory_space<vmem>>, vector<3x8x8xf32>,
    %146 = vector.extract_strided_slice %85 {offsets = [0, 0, 24], sizes = [3, 8, 8], strides = [1, 1, 1]} : vector<3x8x32xbf16> to vector<3x8x8xbf16>
    %147 = vector.extract_strided_slice %88 {offsets = [0, 24, 0], sizes = [3, 8, 8], strides = [1, 1, 1]} : vector<3x32x8xbf16> to vector<3x8x8xbf16>
    "tpu.trace_start"() <{level = 10 : i32, message = "ctd,cds->cts"}> : () -> ()
    %cst_111 = arith.constant dense<0.000000e+00> : vector<3x8x8xf32>
    %148 = tpu.matmul %146, %147, %cst_111 {dimension_numbers = #tpu.dot_dimension_numbers<[2], [1], [1], [2], [0, 0, 0, 1, 1, 2], [0], [0]>} : vector<3x8x8xbf16>, vector<3x8x8xbf16>, vector<3x8x8xf32> -> vector<3x8x8xf32>
    "tpu.trace_stop"() : () -> ()
    %149 = arith.addf %148, %91 : vector<3x8x8xf32>
    %cst_112 = arith.constant dense<0xFF800000> : vector<3x8xf32>
    %150 = vector.multi_reduction <maximumf>, %149, %cst_112 [2] : vector<3x8x8xf32> to vector<3x8xf32>
    %151 = vector.shape_cast %150 : vector<3x8xf32> to vector<3x8x1xf32>
    %152 = vector.broadcast %151 : vector<3x8x1xf32> to vector<3x8x8xf32>
    %153 = arith.subf %149, %152 : vector<3x8x8xf32>
    %154 = math.exp %153 : vector<3x8x8xf32>
    %cst_113 = arith.constant dense<0.000000e+00> : vector<3x8xf32>
    %155 = vector.multi_reduction <add>, %154, %cst_113 [2] : vector<3x8x8xf32> to vector<3x8xf32>
    %156 = vector.shape_cast %155 : vector<3x8xf32> to vector<3x8x1xf32>
    %157 = tpu.reciprocal %156 {approx = true} : vector<3x8x1xf32> -> vector<3x8x1xf32>
    %158 = vector.broadcast %157 : vector<3x8x1xf32> to vector<3x8x8xf32>
    %159 = arith.mulf %154, %158 : vector<3x8x8xf32>
    %160 = arith.truncf %159 : vector<3x8x8xf32> to vector<3x8x8xbf16>
    %161 = vector.extract_strided_slice %83 {offsets = [0, 0, 24], sizes = [3, 8, 8], strides = [1, 1, 1]} : vector<3x8x32xbf16> to vector<3x8x8xbf16>
    "tpu.trace_start"() <{level = 10 : i32, message = "cts,csd->ctd"}> : () -> ()
    %cst_114 = arith.constant dense<0.000000e+00> : vector<3x8x8xf32>
    %162 = tpu.matmul %160, %161, %cst_114 {dimension_numbers = #tpu.dot_dimension_numbers<[2], [1], [1], [2], [0, 0, 0, 1, 1, 2], [0], [0]>} : vector<3x8x8xbf16>, vector<3x8x8xbf16>, vector<3x8x8xf32> -> vector<3x8x8xf32>
    "tpu.trace_stop"() : () -> ()
    %c0_115 = arith.constant 0 : index
    %c0_116 = arith.constant 0 : index
    %c24 = arith.constant 24 : index
    %163 = vector.load %arg17[%c0_115, %c0_116, %c24] : memref<3x8x32xf32, #tpu.memory_space<vmem>>, vector<3x8x8xf32>
    tpu.vector_store %arg17[%c0_115, %c0_116, %c24], %162 {strides = array<i32>} : memref<3x8x32xf32, #tpu.memory_space<vmem>>, vector<3x8x8xf32>,
    %c0_117 = arith.constant 0 : index
    %c0_118 = arith.constant 0 : index
    %c0_119 = arith.constant 0 : index
    %164 = vector.load %arg17[%c0_117, %c0_118, %c0_119] : memref<3x8x32xf32, #tpu.memory_space<vmem>>, vector<3x8x32xf32>
    %165 = arith.truncf %164 : vector<3x8x32xf32> to vector<3x8x32xbf16>
    %166 = vector.shape_cast %165 : vector<3x8x32xbf16> to vector<24x32xbf16>
    %c0_120 = arith.constant 0 : index
    %c0_121 = arith.constant 0 : index
    %167 = vector.load %arg12[%c0_120, %c0_121] : memref<32x32xbf16, #tpu.memory_space<vmem>>, vector<32x32xbf16>
    %cst_122 = arith.constant dense<0.000000e+00> : vector<24x32xf32>
    %168 = tpu.matmul %166, %167, %cst_122 {dimension_numbers = #tpu.dot_dimension_numbers<[1], [0], [0], [1], [0, 0, 1, 1], [], []>} : vector<24x32xbf16>, vector<32x32xbf16>, vector<24x32xf32> -> vector<24x32xf32>
    %169 = vector.shape_cast %168 : vector<24x32xf32> to vector<3x8x32xf32>
    %c0_123 = arith.constant 0 : index
    %c0_124 = arith.constant 0 : index
    %170 = vector.load %arg13[%c0_123, %c0_124] : memref<1x32xf32, #tpu.memory_space<vmem>>, vector<1x32xf32>
    %171 = vector.shape_cast %170 : vector<1x32xf32> to vector<1x1x32xf32>
    %172 = vector.broadcast %171 : vector<1x1x32xf32> to vector<3x8x32xf32>
    %173 = arith.addf %169, %172 : vector<3x8x32xf32>
    %c0_125 = arith.constant 0 : index
    %c0_126 = arith.constant 0 : index
    %c0_127 = arith.constant 0 : index
    %c0_128 = arith.constant 0 : index
    %174 = vector.load %arg14[%c0_125, %c0_126, %c0_127, %c0_128] : memref<1x3x8x32xf32, #tpu.memory_space<vmem>>, vector<1x3x8x32xf32>
    %175 = vector.shape_cast %174 : vector<1x3x8x32xf32> to vector<3x8x32xf32>
    %176 = vector.shape_cast %173 : vector<3x8x32xf32> to vector<1x3x8x32xf32>
    tpu.vector_store %arg14[%c0_125, %c0_126, %c0_127, %c0_128], %176 {strides = array<i32>} : memref<1x3x8x32xf32, #tpu.memory_space<vmem>>, vector<1x3x8x32xf32>,
    return
  }
  func.func @transform_0(%arg0: i32, %arg1: i32) -> (i32, i32, i32, i32) {
    %c0_i32 = arith.constant 0 : i32
    %c0_i32_0 = arith.constant 0 : i32
    %c0_i32_1 = arith.constant 0 : i32
    return %arg0, %arg1, %c0_i32, %c0_i32_0 : i32, i32, i32, i32
  }
  func.func @transform_1(%arg0: i32, %arg1: i32) -> (i32, i32, i32, i32) {
    %c0_i32 = arith.constant 0 : i32
    %c0_i32_0 = arith.constant 0 : i32
    %c0_i32_1 = arith.constant 0 : i32
    return %arg0, %arg1, %c0_i32, %c0_i32_0 : i32, i32, i32, i32
  }
  func.func @transform_2(%arg0: i32, %arg1: i32) -> (i32, i32, i32, i32) {
    %c0_i32 = arith.constant 0 : i32
    %c0_i32_0 = arith.constant 0 : i32
    %c0_i32_1 = arith.constant 0 : i32
    return %arg0, %arg1, %c0_i32, %c0_i32_0 : i32, i32, i32, i32
  }
  func.func @transform_3(%arg0: i32, %arg1: i32) -> (i32, i32, i32) {
    %c0_i32 = arith.constant 0 : i32
    %c0_i32_0 = arith.constant 0 : i32
    %c0_i32_1 = arith.constant 0 : i32
    return %arg0, %c0_i32, %c0_i32_0 : i32, i32, i32
  }
  func.func @transform_4(%arg0: i32, %arg1: i32) -> (i32, i32, i32) {
    %c0_i32 = arith.constant 0 : i32
    %c0_i32_0 = arith.constant 0 : i32
    %c0_i32_1 = arith.constant 0 : i32
    %c0_i32_2 = arith.constant 0 : i32
    return %c0_i32, %c0_i32_0, %c0_i32_1 : i32, i32, i32
  }
  func.func @transform_5(%arg0: i32, %arg1: i32) -> (i32, i32) {
    %c0_i32 = arith.constant 0 : i32
    %c0_i32_0 = arith.constant 0 : i32
    %c0_i32_1 = arith.constant 0 : i32
    return %c0_i32, %c0_i32_0 : i32, i32
  }
  func.func @transform_6(%arg0: i32, %arg1: i32) -> (i32, i32, i32) {
    %c0_i32 = arith.constant 0 : i32
    %c0_i32_0 = arith.constant 0 : i32
    %c0_i32_1 = arith.constant 0 : i32
    %c0_i32_2 = arith.constant 0 : i32
    return %c0_i32, %c0_i32_0, %c0_i32_1 : i32, i32, i32
  }
  func.func @transform_7(%arg0: i32, %arg1: i32) -> (i32, i32) {
    %c0_i32 = arith.constant 0 : i32
    %c0_i32_0 = arith.constant 0 : i32
    %c0_i32_1 = arith.constant 0 : i32
    return %c0_i32, %c0_i32_0 : i32, i32
  }
  func.func @transform_8(%arg0: i32, %arg1: i32) -> (i32, i32) {
    %c0_i32 = arith.constant 0 : i32
    %c0_i32_0 = arith.constant 0 : i32
    %c0_i32_1 = arith.constant 0 : i32
    return %c0_i32, %c0_i32_0 : i32, i32
  }
  func.func @transform_9(%arg0: i32, %arg1: i32) -> (i32, i32) {
    %c0_i32 = arith.constant 0 : i32
    %c0_i32_0 = arith.constant 0 : i32
    %c0_i32_1 = arith.constant 0 : i32
    return %c0_i32, %c0_i32_0 : i32, i32
  }
  func.func @transform_10(%arg0: i32, %arg1: i32) -> (i32, i32) {
    %c0_i32 = arith.constant 0 : i32
    %c0_i32_0 = arith.constant 0 : i32
    %c0_i32_1 = arith.constant 0 : i32
    return %c0_i32, %c0_i32_0 : i32, i32
  }
  func.func @transform_11(%arg0: i32, %arg1: i32) -> (i32, i32) {
    %c0_i32 = arith.constant 0 : i32
    %c0_i32_0 = arith.constant 0 : i32
    %c0_i32_1 = arith.constant 0 : i32
    return %c0_i32, %c0_i32_0 : i32, i32
  }
  func.func @transform_12(%arg0: i32, %arg1: i32) -> (i32, i32, i32, i32) {
    %c0_i32 = arith.constant 0 : i32
    %c0_i32_0 = arith.constant 0 : i32
    %c0_i32_1 = arith.constant 0 : i32
    return %arg0, %arg1, %c0_i32, %c0_i32_0 : i32, i32, i32, i32
  }
}

</mosaic_0001>

<llo_original>
// kernel: tpu_custom_call.1
$region0: #{tpu_custom_call.1}
  #allocation0 [shape = 'u32[]', space=smem, size = 0x4, offset = 0x4, fixed_abs, tag = 'smem constant byte address 0x4 - core index']
  #allocation1 [shape = 'u32[144,128]{1,0:T(1,128)}', space=vmem, size = 0x12000, scoped, tag = 'internal scratch']
  #allocation2 [shape = 'f32[3,8,32]{2,1,0:T(8,128)}', space=vmem, size = 0x3000, scoped, tag = 'scratch operand']
  #allocation3 [shape = 'f32[3,8,32]{2,1,0:T(8,128)}', space=vmem, size = 0x3000, scoped, tag = 'scratch operand']
  #allocation4 [shape = 'f32[3,8,32]{2,1,0:T(8,128)}', space=vmem, size = 0x3000, scoped, tag = 'scratch operand']
  %s0 = inlined_call_operand.hbm [shape: f32[2,3,8,32], index: 0, kind: input, shape index: {}]
  %s1 = inlined_call_operand.hbm [shape: f32[2,3,8,32], index: 1, kind: input, shape index: {}]
  %s2 = inlined_call_operand.hbm [shape: f32[2,3,8,32], index: 2, kind: input, shape index: {}]
  %s3 = inlined_call_operand.hbm [shape: f32[2,8,8], index: 3, kind: input, shape index: {}]
  %s4 = inlined_call_operand.hbm [shape: bf16[3,32,32], index: 4, kind: input, shape index: {}]
  %s5 = inlined_call_operand.vmem [shape: f32[1,32], index: 5, kind: input, shape index: {}]
  %s6 = inlined_call_operand.hbm [shape: bf16[3,32,32], index: 6, kind: input, shape index: {}]
  %s7 = inlined_call_operand.vmem [shape: f32[1,32], index: 7, kind: input, shape index: {}]
  %s8 = inlined_call_operand.vmem [shape: bf16[32,32], index: 8, kind: input, shape index: {}]
  %s9 = inlined_call_operand.hbm [shape: f32[1,32], index: 9, kind: input, shape index: {}]
  %s10 = inlined_call_operand.vmem [shape: bf16[32,32], index: 10, kind: input, shape index: {}]
  %s11 = inlined_call_operand.vmem [shape: f32[1,32], index: 11, kind: input, shape index: {}]
  %s12 = inlined_call_operand.hbm [shape: f32[2,3,8,32], index: 12, kind: output, shape index: {}]
  %s13 = sld [smem:[#allocation0]]
  $region109: #{tpu_custom_call.1} parent=0
    _
  %s15 = ssub.s32 1, %s13
  %s16 = scalar_select 0, %s15, %s13
  $region1: #{tpu_custom_call.1} parent=0
    #allocation5 [shape = 'u8[24576]{0}', space=vmem, size = 0x6000, scoped, tag = 'input window, operand 0']
    #allocation6 [shape = 's32[2]{0}', space=sflag, size = 0x8, scoped, tag = 'scoped memory for tpu_custom_call.1']
    #allocation7 [shape = 's32[2]{0}', space=sflag, size = 0x8, scoped, tag = 'scoped memory for tpu_custom_call.1']
    #allocation8 [shape = 'u8[24576]{0}', space=vmem, size = 0x6000, scoped, tag = 'input window, operand 1']
    #allocation9 [shape = 's32[2]{0}', space=sflag, size = 0x8, scoped, tag = 'scoped memory for tpu_custom_call.1']
    #allocation10 [shape = 'u8[24576]{0}', space=vmem, size = 0x6000, scoped, tag = 'input window, operand 2']
    #allocation11 [shape = 'u8[8192]{0}', space=vmem, size = 0x2000, scoped, tag = 'input window, operand 3']
    #allocation12 [shape = 's32[2]{0}', space=sflag, size = 0x8, scoped, tag = 'scoped memory for tpu_custom_call.1']
    #allocation13 [shape = 'u8[24576]{0}', space=vmem, size = 0x6000, scoped, tag = 'input window, operand 4, single buffered']
    #allocation14 [shape = 'u8[24576]{0}', space=vmem, size = 0x6000, scoped, tag = 'input window, operand 6, single buffered']
    #allocation15 [shape = 's32[1]{0}', space=sflag, size = 0x4, scoped, tag = 'scoped memory for tpu_custom_call.1']
    #allocation16 [shape = 'u8[512]{0}', space=vmem, size = 0x400, scoped, tag = 'input window, operand 9, single buffered']
    #allocation17 [shape = 'u8[24576]{0}', space=vmem, size = 0x6000, scoped, tag = 'output window, operand 0']
    %17 = vsyncpa [#allocation6], 0
    %s18 = scalar_lea.sflag [#allocation6], 1
    %19 = vsyncpa %s18, 0
    %20 = vsyncpa [#allocation9], 0
    %s21 = scalar_lea.sflag [#allocation9], 1
    %22 = vsyncpa %s21, 0
    %23 = vsyncpa [#allocation12], 0
    %s24 = scalar_lea.sflag [#allocation12], 1
    %25 = vsyncpa %s24, 0
    %26 = vsyncpa [#allocation15], 0
    %27 = vsyncpa [#allocation7], 0
    %s28 = scalar_lea.sflag [#allocation7], 1
    %29 = vsyncpa %s28, 0
    loop: start=0, step=1, limit=4
    $region2: #{tpu_custom_call.1} parent=1 // loop_pre_header
      _
    $region3: #{tpu_custom_call.1} parent=1 // loop_header
      %s31 = sphi 0, %s35
      %p32 = scmp.ge.s32.totalorder %s31, 4
      %s38 = sphi 0, %s50
      %s39 = sphi 0, %s46
      %s40 = sphi 0, %s38
      %s41 = sphi 0, %s39
      %s42 = sphi 0, %s40
      %s43 = sphi 0, %s41
      %s55 = sphi 0, %s57
      %s58 = sphi 0, %s55
      %s59 = sphi 0, %s58
      %s75 = sphi 0, %s59
      %s83 = sphi 0, %s85
      %s86 = sphi 0, %s83
      %s87 = sphi 0, %s86
      %s103 = sphi 0, %s87
      %s111 = sphi 0, %s113
      %s114 = sphi 0, %s111
      %s115 = sphi 0, %s114
      %s131 = sphi 0, %s115
      %s137 = sphi 0, %s139
      %s140 = sphi 0, %s137
      %s141 = sphi 0, %s140
      %s157 = sphi 0, %s141
      %s161 = sphi 0, %s161
      %s163 = sphi 0, %s161
      %s164 = sphi 0, %s163
      %s178 = sphi 0, %s164
      %s182 = sphi 0, %s182
      %s184 = sphi 0, %s182
      %s185 = sphi 0, %s184
      %s199 = sphi 0, %s185
      %s203 = sphi 0, %s203
      %s205 = sphi 0, %s203
      %s206 = sphi 0, %s205
      %s220 = sphi 0, %s206
      %s224 = sphi 0, %s224
      %s226 = sphi 0, %s224
      %s227 = sphi 0, %s226
      %s241 = sphi 0, %s227
      %s245 = sphi 0, %s245
      %s247 = sphi 0, %s245
      %s248 = sphi 0, %s247
      %s262 = sphi 0, %s248
      %s266 = sphi 0, %s266
      %s268 = sphi 0, %s266
      %s269 = sphi 0, %s268
      %s283 = sphi 0, %s269
      %s287 = sphi 0, %s287
      %s289 = sphi 0, %s287
      %s290 = sphi 0, %s289
      %s304 = sphi 0, %s290
      %s308 = sphi 0, %s308
      %s310 = sphi 0, %s308
      %s311 = sphi 0, %s310
      %s325 = sphi 0, %s311
      %s333 = sphi 0, %s335
      %s336 = sphi 0, %s333
      %s337 = sphi 0, %s336
      %s353 = sphi 0, %s337
    $region4: #{tpu_custom_call.1} parent=1 // loop_header_branch
      %34 = sbr.rel (%p32) target = $region8
    $region5: #{tpu_custom_call.1} parent=1 // loop_body
      %s36 = ssub.s32 %s31, 1
      %s37 = ssub.s32 %s31, 2
      %s44 = sadd.s32 1, %s39
      %p45 = scmp.ge.s32.totalorder %s44, 1
      %s46 = scalar_select %p45, 0, %s44
      %s47 = sadd.s32 1, %s38
      %s48 = scalar_select %p45, %s47, %s38
      %p49 = scmp.ge.s32.totalorder %s48, 2
      %s50 = scalar_select %p49, 0, %s48
      %s51 = ssub.s32 %s38, %s50
      %s52 = ssub.s32 %s39, %s46
      %s53 = sor.u32 %s51, %s52
      %p54 = scmp.eq.s32.totalorder %s53, 0
      %s56 = sadd.s32 %s55, 1
      %s57 = scalar_select %p54, %s55, %s56
      %p60 = pneg %p54
      %p61 = scmp.eq.s32.totalorder %s31, 1
      %p62 = por %p60, %p61
      %p63 = scmp.ne.s32.totalorder %s55, %s58
      %p64 = scmp.eq.s32.totalorder %s31, 0
      %p65 = por %p63, %p64
      %p66 = scmp.ne.s32.totalorder %s55, %s58
      %p67 = scmp.eq.s32.totalorder %s36, 1
      %p68 = por %p66, %p67
      %p69 = scmp.ne.s32.totalorder %s58, %s59
      %p70 = scmp.eq.s32.totalorder %s36, 0
      %p71 = por %p69, %p70
      %p72 = scmp.ne.s32.totalorder %s58, %s59
      %p73 = scmp.eq.s32.totalorder %s37, 1
      %p74 = por %p72, %p73
      %p76 = scmp.ne.s32.totalorder %s59, %s75
      %p77 = scmp.eq.s32.totalorder %s37, 0
      %p78 = por %p76, %p77
      %s79 = ssub.s32 %s38, %s50
      %s80 = ssub.s32 %s39, %s46
      %s81 = sor.u32 %s79, %s80
      %p82 = scmp.eq.s32.totalorder %s81, 0
      %s84 = sadd.s32 %s83, 1
      %s85 = scalar_select %p82, %s83, %s84
      %p88 = pneg %p82
      %p89 = scmp.eq.s32.totalorder %s31, 1
      %p90 = por %p88, %p89
      %p91 = scmp.ne.s32.totalorder %s83, %s86
      %p92 = scmp.eq.s32.totalorder %s31, 0
      %p93 = por %p91, %p92
      %p94 = scmp.ne.s32.totalorder %s83, %s86
      %p95 = scmp.eq.s32.totalorder %s36, 1
      %p96 = por %p94, %p95
      %p97 = scmp.ne.s32.totalorder %s86, %s87
      %p98 = scmp.eq.s32.totalorder %s36, 0
      %p99 = por %p97, %p98
      %p100 = scmp.ne.s32.totalorder %s86, %s87
      %p101 = scmp.eq.s32.totalorder %s37, 1
      %p102 = por %p100, %p101
      %p104 = scmp.ne.s32.totalorder %s87, %s103
      %p105 = scmp.eq.s32.totalorder %s37, 0
      %p106 = por %p104, %p105
      %s107 = ssub.s32 %s38, %s50
      %s108 = ssub.s32 %s39, %s46
      %s109 = sor.u32 %s107, %s108
      %p110 = scmp.eq.s32.totalorder %s109, 0
      %s112 = sadd.s32 %s111, 1
      %s113 = scalar_select %p110, %s111, %s112
      %p116 = pneg %p110
      %p117 = scmp.eq.s32.totalorder %s31, 1
      %p118 = por %p116, %p117
      %p119 = scmp.ne.s32.totalorder %s111, %s114
      %p120 = scmp.eq.s32.totalorder %s31, 0
      %p121 = por %p119, %p120
      %p122 = scmp.ne.s32.totalorder %s111, %s114
      %p123 = scmp.eq.s32.totalorder %s36, 1
      %p124 = por %p122, %p123
      %p125 = scmp.ne.s32.totalorder %s114, %s115
      %p126 = scmp.eq.s32.totalorder %s36, 0
      %p127 = por %p125, %p126
      %p128 = scmp.ne.s32.totalorder %s114, %s115
      %p129 = scmp.eq.s32.totalorder %s37, 1
      %p130 = por %p128, %p129
      %p132 = scmp.ne.s32.totalorder %s115, %s131
      %p133 = scmp.eq.s32.totalorder %s37, 0
      %p134 = por %p132, %p133
      %s135 = ssub.s32 %s38, %s50
      %p136 = scmp.eq.s32.totalorder %s135, 0
      %s138 = sadd.s32 %s137, 1
      %s139 = scalar_select %p136, %s137, %s138
      %p142 = pneg %p136
      %p143 = scmp.eq.s32.totalorder %s31, 1
      %p144 = por %p142, %p143
      %p145 = scmp.ne.s32.totalorder %s137, %s140
      %p146 = scmp.eq.s32.totalorder %s31, 0
      %p147 = por %p145, %p146
      %p148 = scmp.ne.s32.totalorder %s137, %s140
      %p149 = scmp.eq.s32.totalorder %s36, 1
      %p150 = por %p148, %p149
      %p151 = scmp.ne.s32.totalorder %s140, %s141
      %p152 = scmp.eq.s32.totalorder %s36, 0
      %p153 = por %p151, %p152
      %p154 = scmp.ne.s32.totalorder %s140, %s141
      %p155 = scmp.eq.s32.totalorder %s37, 1
      %p156 = por %p154, %p155
      %p158 = scmp.ne.s32.totalorder %s141, %s157
      %p159 = scmp.eq.s32.totalorder %s37, 0
      %p160 = por %p158, %p159
      %s162 = sadd.s32 %s161, 1
      %p165 = scmp.eq.s32.totalorder %s31, 1
      %p166 = scmp.ne.s32.totalorder %s161, %s163
      %p167 = scmp.eq.s32.totalorder %s31, 0
      %p168 = por %p166, %p167
      %p169 = scmp.ne.s32.totalorder %s161, %s163
      %p170 = scmp.eq.s32.totalorder %s36, 1
      %p171 = por %p169, %p170
      %p172 = scmp.ne.s32.totalorder %s163, %s164
      %p173 = scmp.eq.s32.totalorder %s36, 0
      %p174 = por %p172, %p173
      %p175 = scmp.ne.s32.totalorder %s163, %s164
      %p176 = scmp.eq.s32.totalorder %s37, 1
      %p177 = por %p175, %p176
      %p179 = scmp.ne.s32.totalorder %s164, %s178
      %p180 = scmp.eq.s32.totalorder %s37, 0
      %p181 = por %p179, %p180
      %s183 = sadd.s32 %s182, 1
      %p186 = scmp.eq.s32.totalorder %s31, 1
      %p187 = scmp.ne.s32.totalorder %s182, %s184
      %p188 = scmp.eq.s32.totalorder %s31, 0
      %p189 = por %p187, %p188
      %p190 = scmp.ne.s32.totalorder %s182, %s184
      %p191 = scmp.eq.s32.totalorder %s36, 1
      %p192 = por %p190, %p191
      %p193 = scmp.ne.s32.totalorder %s184, %s185
      %p194 = scmp.eq.s32.totalorder %s36, 0
      %p195 = por %p193, %p194
      %p196 = scmp.ne.s32.totalorder %s184, %s185
      %p197 = scmp.eq.s32.totalorder %s37, 1
      %p198 = por %p196, %p197
      %p200 = scmp.ne.s32.totalorder %s185, %s199
      %p201 = scmp.eq.s32.totalorder %s37, 0
      %p202 = por %p200, %p201
      %s204 = sadd.s32 %s203, 1
      %p207 = scmp.eq.s32.totalorder %s31, 1
      %p208 = scmp.ne.s32.totalorder %s203, %s205
      %p209 = scmp.eq.s32.totalorder %s31, 0
      %p210 = por %p208, %p209
      %p211 = scmp.ne.s32.totalorder %s203, %s205
      %p212 = scmp.eq.s32.totalorder %s36, 1
      %p213 = por %p211, %p212
      %p214 = scmp.ne.s32.totalorder %s205, %s206
      %p215 = scmp.eq.s32.totalorder %s36, 0
      %p216 = por %p214, %p215
      %p217 = scmp.ne.s32.totalorder %s205, %s206
      %p218 = scmp.eq.s32.totalorder %s37, 1
      %p219 = por %p217, %p218
      %p221 = scmp.ne.s32.totalorder %s206, %s220
      %p222 = scmp.eq.s32.totalorder %s37, 0
      %p223 = por %p221, %p222
      %s225 = sadd.s32 %s224, 1
      %p228 = scmp.eq.s32.totalorder %s31, 1
      %p229 = scmp.ne.s32.totalorder %s224, %s226
      %p230 = scmp.eq.s32.totalorder %s31, 0
      %p231 = por %p229, %p230
      %p232 = scmp.ne.s32.totalorder %s224, %s226
      %p233 = scmp.eq.s32.totalorder %s36, 1
      %p234 = por %p232, %p233
      %p235 = scmp.ne.s32.totalorder %s226, %s227
      %p236 = scmp.eq.s32.totalorder %s36, 0
      %p237 = por %p235, %p236
      %p238 = scmp.ne.s32.totalorder %s226, %s227
      %p239 = scmp.eq.s32.totalorder %s37, 1
      %p240 = por %p238, %p239
      %p242 = scmp.ne.s32.totalorder %s227, %s241
      %p243 = scmp.eq.s32.totalorder %s37, 0
      %p244 = por %p242, %p243
      %s246 = sadd.s32 %s245, 1
      %p249 = scmp.eq.s32.totalorder %s31, 1
      %p250 = scmp.ne.s32.totalorder %s245, %s247
      %p251 = scmp.eq.s32.totalorder %s31, 0
      %p252 = por %p250, %p251
      %p253 = scmp.ne.s32.totalorder %s245, %s247
      %p254 = scmp.eq.s32.totalorder %s36, 1
      %p255 = por %p253, %p254
      %p256 = scmp.ne.s32.totalorder %s247, %s248
      %p257 = scmp.eq.s32.totalorder %s36, 0
      %p258 = por %p256, %p257
      %p259 = scmp.ne.s32.totalorder %s247, %s248
      %p260 = scmp.eq.s32.totalorder %s37, 1
      %p261 = por %p259, %p260
      %p263 = scmp.ne.s32.totalorder %s248, %s262
      %p264 = scmp.eq.s32.totalorder %s37, 0
      %p265 = por %p263, %p264
      %s267 = sadd.s32 %s266, 1
      %p270 = scmp.eq.s32.totalorder %s31, 1
      %p271 = scmp.ne.s32.totalorder %s266, %s268
      %p272 = scmp.eq.s32.totalorder %s31, 0
      %p273 = por %p271, %p272
      %p274 = scmp.ne.s32.totalorder %s266, %s268
      %p275 = scmp.eq.s32.totalorder %s36, 1
      %p276 = por %p274, %p275
      %p277 = scmp.ne.s32.totalorder %s268, %s269
      %p278 = scmp.eq.s32.totalorder %s36, 0
      %p279 = por %p277, %p278
      %p280 = scmp.ne.s32.totalorder %s268, %s269
      %p281 = scmp.eq.s32.totalorder %s37, 1
      %p282 = por %p280, %p281
      %p284 = scmp.ne.s32.totalorder %s269, %s283
      %p285 = scmp.eq.s32.totalorder %s37, 0
      %p286 = por %p284, %p285
      %s288 = sadd.s32 %s287, 1
      %p291 = scmp.eq.s32.totalorder %s31, 1
      %p292 = scmp.ne.s32.totalorder %s287, %s289
      %p293 = scmp.eq.s32.totalorder %s31, 0
      %p294 = por %p292, %p293
      %p295 = scmp.ne.s32.totalorder %s287, %s289
      %p296 = scmp.eq.s32.totalorder %s36, 1
      %p297 = por %p295, %p296
      %p298 = scmp.ne.s32.totalorder %s289, %s290
      %p299 = scmp.eq.s32.totalorder %s36, 0
      %p300 = por %p298, %p299
      %p301 = scmp.ne.s32.totalorder %s289, %s290
      %p302 = scmp.eq.s32.totalorder %s37, 1
      %p303 = por %p301, %p302
      %p305 = scmp.ne.s32.totalorder %s290, %s304
      %p306 = scmp.eq.s32.totalorder %s37, 0
      %p307 = por %p305, %p306
      %s309 = sadd.s32 %s308, 1
      %p312 = scmp.eq.s32.totalorder %s31, 1
      %p313 = scmp.ne.s32.totalorder %s308, %s310
      %p314 = scmp.eq.s32.totalorder %s31, 0
      %p315 = por %p313, %p314
      %p316 = scmp.ne.s32.totalorder %s308, %s310
      %p317 = scmp.eq.s32.totalorder %s36, 1
      %p318 = por %p316, %p317
      %p319 = scmp.ne.s32.totalorder %s310, %s311
      %p320 = scmp.eq.s32.totalorder %s36, 0
      %p321 = por %p319, %p320
      %p322 = scmp.ne.s32.totalorder %s310, %s311
      %p323 = scmp.eq.s32.totalorder %s37, 1
      %p324 = por %p322, %p323
      %p326 = scmp.ne.s32.totalorder %s311, %s325
      %p327 = scmp.eq.s32.totalorder %s37, 0
      %p328 = por %p326, %p327
      %s329 = ssub.s32 %s38, %s50
      %s330 = ssub.s32 %s39, %s46
      %s331 = sor.u32 %s329, %s330
      %p332 = scmp.eq.s32.totalorder %s331, 0
      %s334 = sadd.s32 %s333, 1
      %s335 = scalar_select %p332, %s333, %s334
      %p338 = pneg %p332
      %p339 = scmp.eq.s32.totalorder %s31, 1
      %p340 = por %p338, %p339
      %p341 = scmp.ne.s32.totalorder %s333, %s336
      %p342 = scmp.eq.s32.totalorder %s31, 0
      %p343 = por %p341, %p342
      %p344 = scmp.ne.s32.totalorder %s333, %s336
      %p345 = scmp.eq.s32.totalorder %s36, 1
      %p346 = por %p344, %p345
      %p347 = scmp.ne.s32.totalorder %s336, %s337
      %p348 = scmp.eq.s32.totalorder %s36, 0
      %p349 = por %p347, %p348
      %p350 = scmp.ne.s32.totalorder %s336, %s337
      %p351 = scmp.eq.s32.totalorder %s37, 1
      %p352 = por %p350, %p351
      %p354 = scmp.ne.s32.totalorder %s337, %s353
      %p355 = scmp.eq.s32.totalorder %s37, 0
      %p356 = por %p354, %p355
      %p357 = scmp.le.s32.totalorder 1, %s31
      %p358 = scmp.lt.s32.totalorder %s31, 3
      %p359 = pnand %p357, %p358
      %p360 = pneg %p359
      // Predicated region
      $region9: #{tpu_custom_call.1} parent=5 // pred_check
        _
      $region10: #{tpu_custom_call.1} parent=5 // pred_check_branch
        %362 = sbr.rel (%p359) target = $region12
      $region11: #{tpu_custom_call.1} parent=5 // pred_region
        %s363 = ssub.s32 %s31, 1
        // Predicated region
        $region13: #{tpu_custom_call.1} parent=11 // pred_check
          %p364 = pneg %p174
        $region14: #{tpu_custom_call.1} parent=11 // pred_check_branch
          %366 = sbr.rel (%p364) target = $region16
        $region15: #{tpu_custom_call.1} parent=11 // pred_region
          %s368 = ssub.s32 768, 768
          %369 = vsyncadd [#allocation12], %s368
          %s370 = sshll.u32 [#allocation13], 4
          %s371 = int_to_ptr.vmem [resolvable:$true] %s370
          %376 = dma.hbm_to_vmem [thread:$0]  %s4, 768, %s371, [#allocation12], 64, 64, 4
        $region16: #{tpu_custom_call.1} parent=11 // pred_fallthru
          _
        // Predicated region
        $region17: #{tpu_custom_call.1} parent=11 // pred_check
          %p377 = pneg %p195
        $region18: #{tpu_custom_call.1} parent=11 // pred_check_branch
          %379 = sbr.rel (%p377) target = $region20
        $region19: #{tpu_custom_call.1} parent=11 // pred_region
          _
        $region20: #{tpu_custom_call.1} parent=11 // pred_fallthru
          _
        // Predicated region
        $region21: #{tpu_custom_call.1} parent=11 // pred_check
          %p380 = pneg %p216
        $region22: #{tpu_custom_call.1} parent=11 // pred_check_branch
          %382 = sbr.rel (%p380) target = $region24
        $region23: #{tpu_custom_call.1} parent=11 // pred_region
          %s384 = ssub.s32 768, 768
          %385 = vsyncadd [#allocation15], %s384
          %s386 = sshll.u32 [#allocation14], 4
          %s387 = int_to_ptr.vmem [resolvable:$true] %s386
          %392 = dma.hbm_to_vmem [thread:$0]  %s6, 768, %s387, [#allocation15], 64, 64, 4
        $region24: #{tpu_custom_call.1} parent=11 // pred_fallthru
          _
        // Predicated region
        $region25: #{tpu_custom_call.1} parent=11 // pred_check
          %p393 = pneg %p237
        $region26: #{tpu_custom_call.1} parent=11 // pred_check_branch
          %395 = sbr.rel (%p393) target = $region28
        $region27: #{tpu_custom_call.1} parent=11 // pred_region
          _
        $region28: #{tpu_custom_call.1} parent=11 // pred_fallthru
          _
        // Predicated region
        $region29: #{tpu_custom_call.1} parent=11 // pred_check
          %p396 = pneg %p258
        $region30: #{tpu_custom_call.1} parent=11 // pred_check_branch
          %398 = sbr.rel (%p396) target = $region32
        $region31: #{tpu_custom_call.1} parent=11 // pred_region
          _
        $region32: #{tpu_custom_call.1} parent=11 // pred_fallthru
          _
        // Predicated region
        $region33: #{tpu_custom_call.1} parent=11 // pred_check
          %p399 = pneg %p279
        $region34: #{tpu_custom_call.1} parent=11 // pred_check_branch
          %401 = sbr.rel (%p399) target = $region36
        $region35: #{tpu_custom_call.1} parent=11 // pred_region
          %s403 = ssub.s32 16, 16
          %404 = vsyncadd [#allocation15], %s403
          %s406 = sshll.u32 [#allocation16], 4
          %s407 = int_to_ptr.vmem [resolvable:$true] %s406
          %409 = dma.hbm_to_vmem [thread:$0]  %s9, 16, %s407, [#allocation15]
        $region36: #{tpu_custom_call.1} parent=11 // pred_fallthru
          _
        // Predicated region
        $region37: #{tpu_custom_call.1} parent=11 // pred_check
          %p410 = pneg %p300
        $region38: #{tpu_custom_call.1} parent=11 // pred_check_branch
          %412 = sbr.rel (%p410) target = $region40
        $region39: #{tpu_custom_call.1} parent=11 // pred_region
          _
        $region40: #{tpu_custom_call.1} parent=11 // pred_fallthru
          _
        // Predicated region
        $region41: #{tpu_custom_call.1} parent=11 // pred_check
          %p413 = pneg %p321
        $region42: #{tpu_custom_call.1} parent=11 // pred_check_branch
          %415 = sbr.rel (%p413) target = $region44
        $region43: #{tpu_custom_call.1} parent=11 // pred_region
          _
        $region44: #{tpu_custom_call.1} parent=11 // pred_fallthru
          _
      $region12: #{tpu_custom_call.1} parent=5 // pred_fallthru
        _
      %p416 = scmp.lt.s32.totalorder %s31, 2
      // Predicated region
      $region45: #{tpu_custom_call.1} parent=5 // pred_check
        %p417 = pneg %p416
      $region46: #{tpu_custom_call.1} parent=5 // pred_check_branch
        %419 = sbr.rel (%p417) target = $region48
      $region47: #{tpu_custom_call.1} parent=5 // pred_region
        // Predicated region
        $region49: #{tpu_custom_call.1} parent=47 // pred_check
          %p420 = pneg %p65
        $region50: #{tpu_custom_call.1} parent=47 // pred_check_branch
          %422 = sbr.rel (%p420) target = $region52
        $region51: #{tpu_custom_call.1} parent=47 // pred_region
          %s423 = sand.u32 %s55, 1
          %s424 = scalar_lea.sflag [#allocation6], %s423
          %s425 = sand.u32 %s55, 1
          %s426 = smul.addr %s425, 24
          %s427 = scalar_lea.vmem [#allocation5], %s426
          %s428 = smul.u32 3, %s39
          %s430 = ssub.s32 384, 384
          %431 = vsyncadd %s424, %s430
          %s432 = smul.addr %s38, 3
          %s433 = sadd.s32 %s428, %s432
          %s434 = smul.addr %s433, 128
          %s435 = scalar_lea.hbm %s0, %s434
          %s436 = sshll.u32 %s427, 4
          %s437 = int_to_ptr.vmem [resolvable:$true] %s436
          %442 = dma.hbm_to_vmem [thread:$0]  %s435, 384, %s437, %s424, 128, 128, 8
        $region52: #{tpu_custom_call.1} parent=47 // pred_fallthru
          _
        // Predicated region
        $region53: #{tpu_custom_call.1} parent=47 // pred_check
          %p443 = pneg %p93
        $region54: #{tpu_custom_call.1} parent=47 // pred_check_branch
          %445 = sbr.rel (%p443) target = $region56
        $region55: #{tpu_custom_call.1} parent=47 // pred_region
          %s446 = sand.u32 %s31, 1
          %s447 = scalar_lea.sflag [#allocation9], %s446
          %s448 = sand.u32 %s83, 1
          %s449 = smul.addr %s448, 24
          %s450 = scalar_lea.vmem [#allocation8], %s449
          %s451 = smul.u32 3, %s39
          %s453 = ssub.s32 384, 384
          %454 = vsyncadd %s447, %s453
          %s455 = smul.addr %s38, 3
          %s456 = sadd.s32 %s451, %s455
          %s457 = smul.addr %s456, 128
          %s458 = scalar_lea.hbm %s1, %s457
          %s459 = sshll.u32 %s450, 4
          %s460 = int_to_ptr.vmem [resolvable:$true] %s459
          %465 = dma.hbm_to_vmem [thread:$0]  %s458, 384, %s460, %s447, 128, 128, 8
        $region56: #{tpu_custom_call.1} parent=47 // pred_fallthru
          _
        // Predicated region
        $region57: #{tpu_custom_call.1} parent=47 // pred_check
          %p466 = pneg %p121
        $region58: #{tpu_custom_call.1} parent=47 // pred_check_branch
          %468 = sbr.rel (%p466) target = $region60
        $region59: #{tpu_custom_call.1} parent=47 // pred_region
          %s469 = sand.u32 %s31, 1
          %s470 = scalar_lea.sflag [#allocation9], %s469
          %s471 = sand.u32 %s111, 1
          %s472 = smul.addr %s471, 24
          %s473 = scalar_lea.vmem [#allocation10], %s472
          %s474 = smul.u32 3, %s39
          %s476 = ssub.s32 384, 384
          %477 = vsyncadd %s470, %s476
          %s478 = smul.addr %s38, 3
          %s479 = sadd.s32 %s474, %s478
          %s480 = smul.addr %s479, 128
          %s481 = scalar_lea.hbm %s2, %s480
          %s482 = sshll.u32 %s473, 4
          %s483 = int_to_ptr.vmem [resolvable:$true] %s482
          %488 = dma.hbm_to_vmem [thread:$0]  %s481, 384, %s483, %s470, 128, 128, 8
        $region60: #{tpu_custom_call.1} parent=47 // pred_fallthru
          _
        // Predicated region
        $region61: #{tpu_custom_call.1} parent=47 // pred_check
          %p489 = pneg %p147
        $region62: #{tpu_custom_call.1} parent=47 // pred_check_branch
          %491 = sbr.rel (%p489) target = $region64
        $region63: #{tpu_custom_call.1} parent=47 // pred_region
          %s492 = sand.u32 %s31, 1
          %s493 = scalar_lea.sflag [#allocation12], %s492
          %s494 = sand.u32 %s137, 1
          %s495 = smul.addr %s494, 8
          %s496 = scalar_lea.vmem [#allocation11], %s495
          %s498 = ssub.s32 128, 128
          %499 = vsyncadd %s493, %s498
          %s500 = smul.addr %s38, 128
          %s501 = scalar_lea.hbm %s3, %s500
          %s503 = sshll.u32 %s496, 4
          %s504 = int_to_ptr.vmem [resolvable:$true] %s503
          %506 = dma.hbm_to_vmem [thread:$0]  %s501, 128, %s504, %s493
        $region64: #{tpu_custom_call.1} parent=47 // pred_fallthru
          _
      $region48: #{tpu_custom_call.1} parent=5 // pred_fallthru
        _
      %p507 = scmp.le.s32.totalorder 1, %s31
      %p508 = scmp.lt.s32.totalorder %s31, 3
      %p509 = pnand %p507, %p508
      %p510 = pneg %p509
      // Predicated region
      $region65: #{tpu_custom_call.1} parent=5 // pred_check
        _
      $region66: #{tpu_custom_call.1} parent=5 // pred_check_branch
        %512 = sbr.rel (%p509) target = $region68
      $region67: #{tpu_custom_call.1} parent=5 // pred_region
        %s513 = ssub.s32 %s31, 1
        %s514 = sand.u32 %s58, 1
        %s515 = scalar_lea.sflag [#allocation6], %s514
        %s516 = sand.u32 %s58, 1
        %s517 = smul.addr %s516, 24
        %s518 = scalar_lea.vmem [#allocation5], %s517
        // Predicated region
        $region69: #{tpu_custom_call.1} parent=67 // pred_check
          %p519 = pneg %p71
        $region70: #{tpu_custom_call.1} parent=67 // pred_check_branch
          %521 = sbr.rel (%p519) target = $region72
        $region71: #{tpu_custom_call.1} parent=67 // pred_region
          %522 = dma.done %s515, 384
        $region72: #{tpu_custom_call.1} parent=67 // pred_fallthru
          _
        %s523 = sand.u32 %s36, 1
        %s524 = scalar_lea.sflag [#allocation9], %s523
        %s525 = sand.u32 %s86, 1
        %s526 = smul.addr %s525, 24
        %s527 = scalar_lea.vmem [#allocation8], %s526
        // Predicated region
        $region73: #{tpu_custom_call.1} parent=67 // pred_check
          %p528 = pneg %p99
        $region74: #{tpu_custom_call.1} parent=67 // pred_check_branch
          %530 = sbr.rel (%p528) target = $region76
        $region75: #{tpu_custom_call.1} parent=67 // pred_region
          %531 = dma.done %s524, 384
        $region76: #{tpu_custom_call.1} parent=67 // pred_fallthru
          _
        %s532 = sand.u32 %s36, 1
        %s533 = scalar_lea.sflag [#allocation9], %s532
        %s534 = sand.u32 %s114, 1
        %s535 = smul.addr %s534, 24
        %s536 = scalar_lea.vmem [#allocation10], %s535
        // Predicated region
        $region77: #{tpu_custom_call.1} parent=67 // pred_check
          %p537 = pneg %p127
        $region78: #{tpu_custom_call.1} parent=67 // pred_check_branch
          %539 = sbr.rel (%p537) target = $region80
        $region79: #{tpu_custom_call.1} parent=67 // pred_region
          %540 = dma.done %s533, 384
        $region80: #{tpu_custom_call.1} parent=67 // pred_fallthru
          _
        %s541 = sand.u32 %s36, 1
        %s542 = scalar_lea.sflag [#allocation12], %s541
        %s543 = sand.u32 %s140, 1
        %s544 = smul.addr %s543, 8
        %s545 = scalar_lea.vmem [#allocation11], %s544
        // Predicated region
        $region81: #{tpu_custom_call.1} parent=67 // pred_check
          %p546 = pneg %p153
        $region82: #{tpu_custom_call.1} parent=67 // pred_check_branch
          %548 = sbr.rel (%p546) target = $region84
        $region83: #{tpu_custom_call.1} parent=67 // pred_region
          %549 = dma.done %s542, 128
        $region84: #{tpu_custom_call.1} parent=67 // pred_fallthru
          _
        // Predicated region
        $region85: #{tpu_custom_call.1} parent=67 // pred_check
          %p550 = pneg %p174
        $region86: #{tpu_custom_call.1} parent=67 // pred_check_branch
          %552 = sbr.rel (%p550) target = $region88
        $region87: #{tpu_custom_call.1} parent=67 // pred_region
          %553 = dma.done [#allocation12], 768
        $region88: #{tpu_custom_call.1} parent=67 // pred_fallthru
          _
        // Predicated region
        $region89: #{tpu_custom_call.1} parent=67 // pred_check
          %p554 = pneg %p216
        $region90: #{tpu_custom_call.1} parent=67 // pred_check_branch
          %556 = sbr.rel (%p554) target = $region92
        $region91: #{tpu_custom_call.1} parent=67 // pred_region
          %557 = dma.done [#allocation15], 768
        $region92: #{tpu_custom_call.1} parent=67 // pred_fallthru
          _
        // Predicated region
        $region93: #{tpu_custom_call.1} parent=67 // pred_check
          %p558 = pneg %p279
        $region94: #{tpu_custom_call.1} parent=67 // pred_check_branch
          %560 = sbr.rel (%p558) target = $region96
        $region95: #{tpu_custom_call.1} parent=67 // pred_region
          %561 = dma.done [#allocation15], 16
        $region96: #{tpu_custom_call.1} parent=67 // pred_fallthru
          _
        %s562 = sand.u32 %s58, 1
        %s563 = scalar_lea.sflag [#allocation6], %s562
        %s564 = sand.u32 %s58, 1
        %s565 = smul.addr %s564, 24
        %s566 = scalar_lea.vmem [#allocation5], %s565
        %p567 = pneg %p71
        %p568 = pneg %p68
        %s569 = sand.u32 %s36, 1
        %s570 = scalar_lea.sflag [#allocation9], %s569
        %s571 = sand.u32 %s86, 1
        %s572 = smul.addr %s571, 24
        %s573 = scalar_lea.vmem [#allocation8], %s572
        %p574 = pneg %p99
        %p575 = pneg %p96
        %s576 = sand.u32 %s36, 1
        %s577 = scalar_lea.sflag [#allocation9], %s576
        %s578 = sand.u32 %s114, 1
        %s579 = smul.addr %s578, 24
        %s580 = scalar_lea.vmem [#allocation10], %s579
        %p581 = pneg %p127
        %p582 = pneg %p124
        %s583 = sand.u32 %s36, 1
        %s584 = scalar_lea.sflag [#allocation12], %s583
        %s585 = sand.u32 %s140, 1
        %s586 = smul.addr %s585, 8
        %s587 = scalar_lea.vmem [#allocation11], %s586
        %p588 = pneg %p153
        %p589 = pneg %p150
        %p590 = pneg %p174
        %p591 = pneg %p171
        %p592 = pneg %p195
        %p593 = pneg %p192
        %p594 = pneg %p216
        %p595 = pneg %p213
        %p596 = pneg %p237
        %p597 = pneg %p234
        %p598 = pneg %p258
        %p599 = pneg %p255
        %p600 = pneg %p279
        %p601 = pneg %p276
        %p602 = pneg %p300
        %p603 = pneg %p297
        %p604 = pneg %p321
        %p605 = pneg %p318
        %p606 = pneg %p349
        %p607 = pneg %p346
        %s608 = sand.u32 %s336, 1
        %s609 = scalar_lea.sflag [#allocation7], %s608
        %s610 = sand.u32 %s336, 1
        %s611 = smul.addr %s610, 24
        %s612 = scalar_lea.vmem [#allocation17], %s611
        %s613 = smul.u32 3, %s41
        %s614 = smul.u32 3, %s41
        %s615 = smul.u32 3, %s41
        %s616 = smul.u32 3, %s41
        %v618 = vld [vmem:[%s518] sm:$0xff]
        %v619 = vld [vmem:[%s518 + $0x8] sm:$0xff]
        %v620 = vld [vmem:[%s518 + $0x10] sm:$0xff]
        %v621 = vld [vmem:[%s527] sm:$0xff]
        %v622 = vld [vmem:[%s527 + $0x8] sm:$0xff]
        %v623 = vld [vmem:[%s527 + $0x10] sm:$0xff]
        %v624 = vld [vmem:[%s536] sm:$0xff]
        %v625 = vld [vmem:[%s536 + $0x8] sm:$0xff]
        %v626 = vld [vmem:[%s536 + $0x10] sm:$0xff]
        %v627 = vld [vmem:[%s545] sm:$0xff]
        %v628 = vld [vmem:[%s5] sm:$0x1]
        %v630 = vlaneseq
        %v631 = vshrl.u32 %v630, 7
        %v632 = vsub.s32 0, %v631
        %v633 = vrot.slane %v628, %v632
        %vm635 = vcmask 261120
        %636 = vst.msk [vmem:[#allocation2] sm:$0xff] %vm635, %v633
        %637 = vst.msk [vmem:[#allocation2 + $0x8] sm:$0xff] %vm635, %v633
        %638 = vst.msk [vmem:[#allocation2 + $0x10] sm:$0xff] %vm635, %v633
        %v642 = vcombine.high %v618, %v618
        %v644 = vunpack.c.l.s4 1983009808
        %v645 = vunpack.c.0.s8 %v644
        %v646 = vlaneseq
        %v647 = vshrl.u32 %v646, 7
        %v648 = vsub.s32 %v645, %v647
        %v649 = vrot.slane %v618, %v648
        %v651 = vunpack.c.l.s4 1983009808
        %v652 = vunpack.c.0.s8 %v651
        %v653 = vlaneseq
        %v654 = vshrl.u32 %v653, 7
        %v655 = vsub.s32 %v652, %v654
        %v656 = vrot.slane %v642, %v655
        %v657 = vcombine.high %v649, %v649
        %v658 = vcombine.high %v619, %v619
        %v660 = vunpack.c.l.s4 1983009808
        %v661 = vunpack.c.0.s8 %v660
        %v662 = vlaneseq
        %v663 = vshrl.u32 %v662, 7
        %v664 = vsub.s32 %v661, %v663
        %v665 = vrot.slane %v619, %v664
        %v667 = vunpack.c.l.s4 1983009808
        %v668 = vunpack.c.0.s8 %v667
        %v669 = vlaneseq
        %v670 = vshrl.u32 %v669, 7
        %v671 = vsub.s32 %v668, %v670
        %v672 = vrot.slane %v658, %v671
        %v673 = vcombine.high %v665, %v665
        %v674 = vcombine.high %v620, %v620
        %v676 = vunpack.c.l.s4 1983009808
        %v677 = vunpack.c.0.s8 %v676
        %v678 = vlaneseq
        %v679 = vshrl.u32 %v678, 7
        %v680 = vsub.s32 %v677, %v679
        %v681 = vrot.slane %v620, %v680
        %v683 = vunpack.c.l.s4 1983009808
        %v684 = vunpack.c.0.s8 %v683
        %v685 = vlaneseq
        %v686 = vshrl.u32 %v685, 7
        %v687 = vsub.s32 %v684, %v686
        %v688 = vrot.slane %v674, %v687
        %v689 = vcombine.high %v681, %v681
        %v690 = vcombine.low %v649, %v657
        %v691 = vcombine.low %v656, %v665
        %v693 = vunpack.c.l.s4 1983009808
        %v694 = vunpack.c.0.s8 %v693
        %v695 = vlaneseq
        %v696 = vshrl.u32 %v695, 7
        %v697 = vsub.s32 %v694, %v696
        %v698 = vrot.slane %v690, %v697
        %v700 = vunpack.c.l.s4 1983009808
        %v701 = vunpack.c.0.s8 %v700
        %v702 = vlaneseq
        %v703 = vshrl.u32 %v702, 7
        %v704 = vsub.s32 %v701, %v703
        %v705 = vrot.slane %v691, %v704
        %v706 = vcombine.low %v698, %v705
        %v707 = vcombine.low %v673, %v672
        %v708 = vcombine.low %v681, %v689
        %v710 = vunpack.c.l.s4 1983009808
        %v711 = vunpack.c.0.s8 %v710
        %v712 = vlaneseq
        %v713 = vshrl.u32 %v712, 7
        %v714 = vsub.s32 %v711, %v713
        %v715 = vrot.slane %v707, %v714
        %v717 = vunpack.c.l.s4 1983009808
        %v718 = vunpack.c.0.s8 %v717
        %v719 = vlaneseq
        %v720 = vshrl.u32 %v719, 7
        %v721 = vsub.s32 %v718, %v720
        %v722 = vrot.slane %v708, %v721
        %v723 = vcombine.low %v715, %v722
        %v725 = vunpack.c.l.s4 1983009808
        %v726 = vunpack.c.0.s8 %v725
        %v727 = vlaneseq
        %v728 = vshrl.u32 %v727, 7
        %v729 = vsub.s32 %v726, %v728
        %v730 = vrot.slane %v688, %v729
        %v734 = vpack.c.bf16 %v723, %v706
        %v735 = vpack.c.bf16 %v730, %v730
        %v736 = vld [vmem:[#allocation13] sm:$0xf]
        %v737 = vld [vmem:[#allocation13 + $0x4] sm:$0xf]
        %v738 = vld [vmem:[#allocation13 + $0x8] sm:$0xf]
        %v739 = vld [vmem:[#allocation13 + $0xc] sm:$0xf]
        %v744 = vunpack.c.l.b16 %v736
        %v745 = vunpack.c.l.b16 %v737
        %v746 = vunpack.c.l.b16 %v738
        %v747 = vunpack.c.l.b16 %v739
        %v748 = vpack.c.b16 %v745, %v744
        %v749 = vpack.c.b16 %v747, %v746
        %v753 = vsel %vm635, %v734, 0
        %v756 = vsel %vm635, %v735, 0
        %758 = vmatprep.subr.bf16.mxu0 0
        %759 = vmatpush1.bf16.msra.mxu0 %v748
        %760 = vmatprep.subr.bf16.mxu0 0
        %761 = vmatpush1.bf16.msra.mxu0 %v749
        %762 = vmatprep.subr.bf16.mxu0 0
        %763 = vmatpush1.bf16.msra.mxu0 0
        %764 = vmatprep.subr.bf16.mxu0 0
        %765 = vmatpush1.bf16.msra.mxu0 0
        %766 = vmatprep.subr.bf16.mxu0 0
        %767 = vmatpush1.bf16.msra.mxu0 0
        %768 = vmatprep.subr.bf16.mxu0 0
        %769 = vmatpush1.bf16.msra.mxu0 0
        %770 = vmatprep.subr.bf16.mxu0 0
        %771 = vmatpush1.bf16.msra.mxu0 0
        %772 = vmatprep.subr.bf16.mxu0 0
        %773 = vmatpush1.bf16.msra.mxu0 0
        %774 = vmatprep.subr.bf16.mxu0 0
        %775 = vmatpush1.bf16.msra.mxu0 0
        %776 = vmatprep.subr.bf16.mxu0 0
        %777 = vmatpush1.bf16.msra.mxu0 0
        %778 = vmatprep.subr.bf16.mxu0 0
        %779 = vmatpush1.bf16.msra.mxu0 0
        %780 = vmatprep.subr.bf16.mxu0 0
        %781 = vmatpush1.bf16.msra.mxu0 0
        %782 = vmatprep.subr.bf16.mxu0 0
        %783 = vmatpush1.bf16.msra.mxu0 0
        %784 = vmatprep.subr.bf16.mxu0 0
        %785 = vmatpush1.bf16.msra.mxu0 0
        %786 = vmatprep.subr.bf16.mxu0 0
        %787 = vmatpush1.bf16.msra.mxu0 0
        %788 = vmatprep.subr.bf16.mxu0 0
        %789 = vmatpush1.bf16.msra.mxu0 0
        %790 = vmatprep.mubr.bf16.mxu0 0
        %791 = vmatmul.mubr.bf16.gmra.mrb[0].mxu0 %v753
        %v792 = vpop.f32.mrb[0].mxu0
        %v793 = vadd.f32 0.0, %v792
        %v794 = vpop.f32.mrb[0].mxu0
        %v795 = vpop.f32.mrb[0].mxu0
        %v796 = vadd.f32 0.0, %v795
        %v797 = vpop.f32.mrb[0].mxu0
        %798 = vmatprep.mubr.bf16.mxu0 0
        %799 = vmatmul.mubr.bf16.gmra.mrb[0].mxu0 %v756
        %v800 = vpop.f32.mrb[0].mxu0
        %v801 = vadd.f32 0.0, %v800
        %v802 = vpop.f32.mrb[0].mxu0
        %v803 = vpop.f32.mrb[0].mxu0
        %v804 = vpop.f32.mrb[0].mxu0
        %805 = vdwg.mxu0
        %v806 = vld [vmem:[#allocation2 + $0x2] sm:$0x3f]
        %v807 = vld [vmem:[#allocation2 + $0xa] sm:$0x3f]
        %v808 = vld [vmem:[#allocation2 + $0x12] sm:$0x3f]
        %v812 = vcombine.high %v793, %v793
        %v814 = vunpack.c.l.s4 1983009808
        %v815 = vunpack.c.0.s8 %v814
        %v816 = vlaneseq
        %v817 = vshrl.u32 %v816, 7
        %v818 = vsub.s32 %v815, %v817
        %v819 = vrot.slane %v793, %v818
        %v821 = vunpack.c.l.s4 1983009808
        %v822 = vunpack.c.0.s8 %v821
        %v823 = vlaneseq
        %v824 = vshrl.u32 %v823, 7
        %v825 = vsub.s32 %v822, %v824
        %v826 = vrot.slane %v812, %v825
        %v827 = vcombine.high %v819, %v819
        %v828 = vcombine.high %v826, %v826
        %v829 = vcombine.high %v796, %v796
        %v831 = vunpack.c.l.s4 1983009808
        %v832 = vunpack.c.0.s8 %v831
        %v833 = vlaneseq
        %v834 = vshrl.u32 %v833, 7
        %v835 = vsub.s32 %v832, %v834
        %v836 = vrot.slane %v796, %v835
        %v838 = vunpack.c.l.s4 1983009808
        %v839 = vunpack.c.0.s8 %v838
        %v840 = vlaneseq
        %v841 = vshrl.u32 %v840, 7
        %v842 = vsub.s32 %v839, %v841
        %v843 = vrot.slane %v829, %v842
        %v844 = vcombine.high %v836, %v836
        %v845 = vcombine.high %v843, %v843
        %v847 = vunpack.c.l.s4 1983009808
        %v848 = vunpack.c.0.s8 %v847
        %v849 = vlaneseq
        %v850 = vshrl.u32 %v849, 7
        %v851 = vsub.s32 %v848, %v850
        %v852 = vrot.slane %v801, %v851
        %v853 = vcombine.low %v819, %v827
        %v855 = vunpack.c.l.s4 1983009808
        %v856 = vunpack.c.0.s8 %v855
        %v857 = vlaneseq
        %v858 = vshrl.u32 %v857, 7
        %v859 = vsub.s32 %v856, %v858
        %v860 = vrot.slane %v853, %v859
        %v862 = vunpack.c.l.s4 1983009808
        %v863 = vunpack.c.0.s8 %v862
        %v864 = vlaneseq
        %v865 = vshrl.u32 %v864, 7
        %v866 = vsub.s32 %v863, %v865
        %v867 = vrot.slane %v826, %v866
        %v868 = vcombine.low %v860, %v867
        %v869 = vcombine.low %v828, %v836
        %v871 = vunpack.c.l.s4 1983009808
        %v872 = vunpack.c.0.s8 %v871
        %v873 = vlaneseq
        %v874 = vshrl.u32 %v873, 7
        %v875 = vsub.s32 %v872, %v874
        %v876 = vrot.slane %v869, %v875
        %v878 = vunpack.c.l.s4 1983009808
        %v879 = vunpack.c.0.s8 %v878
        %v880 = vlaneseq
        %v881 = vshrl.u32 %v880, 7
        %v882 = vsub.s32 %v879, %v881
        %v883 = vrot.slane %v844, %v882
        %v884 = vcombine.low %v876, %v883
        %v885 = vcombine.low %v843, %v845
        %v887 = vunpack.c.l.s4 1983009808
        %v888 = vunpack.c.0.s8 %v887
        %v889 = vlaneseq
        %v890 = vshrl.u32 %v889, 7
        %v891 = vsub.s32 %v888, %v890
        %v892 = vrot.slane %v885, %v891
        %v894 = vunpack.c.l.s4 1983009808
        %v895 = vunpack.c.0.s8 %v894
        %v896 = vlaneseq
        %v897 = vshrl.u32 %v896, 7
        %v898 = vsub.s32 %v895, %v897
        %v899 = vrot.slane %v852, %v898
        %v900 = vcombine.low %v892, %v899
        %v904 = vadd.f32 %v806, %v868
        %v905 = vadd.f32 %v807, %v884
        %v906 = vadd.f32 %v808, %v900
        %vm907 = vcmask 259072
        %908 = vst.msk [vmem:[#allocation2 + $0x2] sm:$0x3f] %vm907, %v904
        %909 = vst.msk [vmem:[#allocation2 + $0xa] sm:$0x3f] %vm907, %v905
        %910 = vst.msk [vmem:[#allocation2 + $0x12] sm:$0x3f] %vm907, %v906
        %v912 = vunpack.c.l.s4 1966171168
        %v913 = vunpack.c.0.s8 %v912
        %v914 = vlaneseq
        %v915 = vshrl.u32 %v914, 7
        %v916 = vsub.s32 %v913, %v915
        %v917 = vrot.slane %v618, %v916
        %v919 = vunpack.c.l.s4 1966171168
        %v920 = vunpack.c.0.s8 %v919
        %v921 = vlaneseq
        %v922 = vshrl.u32 %v921, 7
        %v923 = vsub.s32 %v920, %v922
        %v924 = vrot.slane %v642, %v923
        %v925 = vcombine.high %v917, %v917
        %v926 = vcombine.high %v924, %v924
        %v928 = vunpack.c.l.s4 1966171168
        %v929 = vunpack.c.0.s8 %v928
        %v930 = vlaneseq
        %v931 = vshrl.u32 %v930, 7
        %v932 = vsub.s32 %v929, %v931
        %v933 = vrot.slane %v917, %v932
        %v935 = vunpack.c.l.s4 1966171168
        %v936 = vunpack.c.0.s8 %v935
        %v937 = vlaneseq
        %v938 = vshrl.u32 %v937, 7
        %v939 = vsub.s32 %v936, %v938
        %v940 = vrot.slane %v924, %v939
        %v942 = vunpack.c.l.s4 1966171168
        %v943 = vunpack.c.0.s8 %v942
        %v944 = vlaneseq
        %v945 = vshrl.u32 %v944, 7
        %v946 = vsub.s32 %v943, %v945
        %v947 = vrot.slane %v925, %v946
        %v949 = vunpack.c.l.s4 1966171168
        %v950 = vunpack.c.0.s8 %v949
        %v951 = vlaneseq
        %v952 = vshrl.u32 %v951, 7
        %v953 = vsub.s32 %v950, %v952
        %v954 = vrot.slane %v926, %v953
        %v955 = vcombine.high %v933, %v933
        %v956 = vcombine.high %v940, %v940
        %v957 = vcombine.high %v947, %v947
        %v959 = vunpack.c.l.s4 1966171168
        %v960 = vunpack.c.0.s8 %v959
        %v961 = vlaneseq
        %v962 = vshrl.u32 %v961, 7
        %v963 = vsub.s32 %v960, %v962
        %v964 = vrot.slane %v619, %v963
        %v966 = vunpack.c.l.s4 1966171168
        %v967 = vunpack.c.0.s8 %v966
        %v968 = vlaneseq
        %v969 = vshrl.u32 %v968, 7
        %v970 = vsub.s32 %v967, %v969
        %v971 = vrot.slane %v658, %v970
        %v972 = vcombine.high %v964, %v964
        %v973 = vcombine.high %v971, %v971
        %v975 = vunpack.c.l.s4 1966171168
        %v976 = vunpack.c.0.s8 %v975
        %v977 = vlaneseq
        %v978 = vshrl.u32 %v977, 7
        %v979 = vsub.s32 %v976, %v978
        %v980 = vrot.slane %v964, %v979
        %v982 = vunpack.c.l.s4 1966171168
        %v983 = vunpack.c.0.s8 %v982
        %v984 = vlaneseq
        %v985 = vshrl.u32 %v984, 7
        %v986 = vsub.s32 %v983, %v985
        %v987 = vrot.slane %v971, %v986
        %v989 = vunpack.c.l.s4 1966171168
        %v990 = vunpack.c.0.s8 %v989
        %v991 = vlaneseq
        %v992 = vshrl.u32 %v991, 7
        %v993 = vsub.s32 %v990, %v992
        %v994 = vrot.slane %v972, %v993
        %v996 = vunpack.c.l.s4 1966171168
        %v997 = vunpack.c.0.s8 %v996
        %v998 = vlaneseq
        %v999 = vshrl.u32 %v998, 7
        %v1000 = vsub.s32 %v997, %v999
        %v1001 = vrot.slane %v973, %v1000
        %v1002 = vcombine.high %v980, %v980
        %v1003 = vcombine.high %v987, %v987
        %v1004 = vcombine.high %v994, %v994
        %v1006 = vunpack.c.l.s4 1966171168
        %v1007 = vunpack.c.0.s8 %v1006
        %v1008 = vlaneseq
        %v1009 = vshrl.u32 %v1008, 7
        %v1010 = vsub.s32 %v1007, %v1009
        %v1011 = vrot.slane %v620, %v1010
        %v1013 = vunpack.c.l.s4 1966171168
        %v1014 = vunpack.c.0.s8 %v1013
        %v1015 = vlaneseq
        %v1016 = vshrl.u32 %v1015, 7
        %v1017 = vsub.s32 %v1014, %v1016
        %v1018 = vrot.slane %v674, %v1017
        %v1019 = vcombine.high %v1011, %v1011
        %v1020 = vcombine.high %v1018, %v1018
        %v1022 = vunpack.c.l.s4 1966171168
        %v1023 = vunpack.c.0.s8 %v1022
        %v1024 = vlaneseq
        %v1025 = vshrl.u32 %v1024, 7
        %v1026 = vsub.s32 %v1023, %v1025
        %v1027 = vrot.slane %v1011, %v1026
        %v1029 = vunpack.c.l.s4 1966171168
        %v1030 = vunpack.c.0.s8 %v1029
        %v1031 = vlaneseq
        %v1032 = vshrl.u32 %v1031, 7
        %v1033 = vsub.s32 %v1030, %v1032
        %v1034 = vrot.slane %v1018, %v1033
        %v1036 = vunpack.c.l.s4 1966171168
        %v1037 = vunpack.c.0.s8 %v1036
        %v1038 = vlaneseq
        %v1039 = vshrl.u32 %v1038, 7
        %v1040 = vsub.s32 %v1037, %v1039
        %v1041 = vrot.slane %v1019, %v1040
        %v1043 = vunpack.c.l.s4 1966171168
        %v1044 = vunpack.c.0.s8 %v1043
        %v1045 = vlaneseq
        %v1046 = vshrl.u32 %v1045, 7
        %v1047 = vsub.s32 %v1044, %v1046
        %v1048 = vrot.slane %v1020, %v1047
        %v1049 = vcombine.high %v1027, %v1027
        %v1050 = vcombine.high %v1034, %v1034
        %v1051 = vcombine.high %v1041, %v1041
        %v1052 = vcombine.low %v933, %v947
        %v1053 = vcombine.low %v955, %v957
        %v1054 = vcombine.low %v940, %v954
        %v1055 = vcombine.low %v956, %v980
        %v1057 = vunpack.c.l.s4 1966171168
        %v1058 = vunpack.c.0.s8 %v1057
        %v1059 = vlaneseq
        %v1060 = vshrl.u32 %v1059, 7
        %v1061 = vsub.s32 %v1058, %v1060
        %v1062 = vrot.slane %v1052, %v1061
        %v1064 = vunpack.c.l.s4 1966171168
        %v1065 = vunpack.c.0.s8 %v1064
        %v1066 = vlaneseq
        %v1067 = vshrl.u32 %v1066, 7
        %v1068 = vsub.s32 %v1065, %v1067
        %v1069 = vrot.slane %v1053, %v1068
        %v1071 = vunpack.c.l.s4 1966171168
        %v1072 = vunpack.c.0.s8 %v1071
        %v1073 = vlaneseq
        %v1074 = vshrl.u32 %v1073, 7
        %v1075 = vsub.s32 %v1072, %v1074
        %v1076 = vrot.slane %v1054, %v1075
        %v1078 = vunpack.c.l.s4 1966171168
        %v1079 = vunpack.c.0.s8 %v1078
        %v1080 = vlaneseq
        %v1081 = vshrl.u32 %v1080, 7
        %v1082 = vsub.s32 %v1079, %v1081
        %v1083 = vrot.slane %v1055, %v1082
        %v1084 = vcombine.low %v1062, %v1069
        %v1085 = vcombine.low %v1076, %v1083
        %v1087 = vunpack.c.l.s4 1966171168
        %v1088 = vunpack.c.0.s8 %v1087
        %v1089 = vlaneseq
        %v1090 = vshrl.u32 %v1089, 7
        %v1091 = vsub.s32 %v1088, %v1090
        %v1092 = vrot.slane %v1084, %v1091
        %v1094 = vunpack.c.l.s4 1966171168
        %v1095 = vunpack.c.0.s8 %v1094
        %v1096 = vlaneseq
        %v1097 = vshrl.u32 %v1096, 7
        %v1098 = vsub.s32 %v1095, %v1097
        %v1099 = vrot.slane %v1085, %v1098
        %v1100 = vcombine.low %v1092, %v1099
        %v1101 = vcombine.low %v994, %v1002
        %v1102 = vcombine.low %v1004, %v987
        %v1103 = vcombine.low %v1001, %v1003
        %v1104 = vcombine.low %v1027, %v1041
        %v1106 = vunpack.c.l.s4 1966171168
        %v1107 = vunpack.c.0.s8 %v1106
        %v1108 = vlaneseq
        %v1109 = vshrl.u32 %v1108, 7
        %v1110 = vsub.s32 %v1107, %v1109
        %v1111 = vrot.slane %v1101, %v1110
        %v1113 = vunpack.c.l.s4 1966171168
        %v1114 = vunpack.c.0.s8 %v1113
        %v1115 = vlaneseq
        %v1116 = vshrl.u32 %v1115, 7
        %v1117 = vsub.s32 %v1114, %v1116
        %v1118 = vrot.slane %v1102, %v1117
        %v1120 = vunpack.c.l.s4 1966171168
        %v1121 = vunpack.c.0.s8 %v1120
        %v1122 = vlaneseq
        %v1123 = vshrl.u32 %v1122, 7
        %v1124 = vsub.s32 %v1121, %v1123
        %v1125 = vrot.slane %v1103, %v1124
        %v1127 = vunpack.c.l.s4 1966171168
        %v1128 = vunpack.c.0.s8 %v1127
        %v1129 = vlaneseq
        %v1130 = vshrl.u32 %v1129, 7
        %v1131 = vsub.s32 %v1128, %v1130
        %v1132 = vrot.slane %v1104, %v1131
        %v1133 = vcombine.low %v1111, %v1118
        %v1134 = vcombine.low %v1125, %v1132
        %v1136 = vunpack.c.l.s4 1966171168
        %v1137 = vunpack.c.0.s8 %v1136
        %v1138 = vlaneseq
        %v1139 = vshrl.u32 %v1138, 7
        %v1140 = vsub.s32 %v1137, %v1139
        %v1141 = vrot.slane %v1133, %v1140
        %v1143 = vunpack.c.l.s4 1966171168
        %v1144 = vunpack.c.0.s8 %v1143
        %v1145 = vlaneseq
        %v1146 = vshrl.u32 %v1145, 7
        %v1147 = vsub.s32 %v1144, %v1146
        %v1148 = vrot.slane %v1134, %v1147
        %v1149 = vcombine.low %v1141, %v1148
        %v1150 = vcombine.low %v1049, %v1051
        %v1151 = vcombine.low %v1034, %v1048
        %v1153 = vunpack.c.l.s4 1966171168
        %v1154 = vunpack.c.0.s8 %v1153
        %v1155 = vlaneseq
        %v1156 = vshrl.u32 %v1155, 7
        %v1157 = vsub.s32 %v1154, %v1156
        %v1158 = vrot.slane %v1150, %v1157
        %v1160 = vunpack.c.l.s4 1966171168
        %v1161 = vunpack.c.0.s8 %v1160
        %v1162 = vlaneseq
        %v1163 = vshrl.u32 %v1162, 7
        %v1164 = vsub.s32 %v1161, %v1163
        %v1165 = vrot.slane %v1151, %v1164
        %v1167 = vunpack.c.l.s4 1966171168
        %v1168 = vunpack.c.0.s8 %v1167
        %v1169 = vlaneseq
        %v1170 = vshrl.u32 %v1169, 7
        %v1171 = vsub.s32 %v1168, %v1170
        %v1172 = vrot.slane %v1050, %v1171
        %v1173 = vcombine.low %v1158, %v1165
        %v1175 = vunpack.c.l.s4 1966171168
        %v1176 = vunpack.c.0.s8 %v1175
        %v1177 = vlaneseq
        %v1178 = vshrl.u32 %v1177, 7
        %v1179 = vsub.s32 %v1176, %v1178
        %v1180 = vrot.slane %v1173, %v1179
        %v1182 = vunpack.c.l.s4 1966171168
        %v1183 = vunpack.c.0.s8 %v1182
        %v1184 = vlaneseq
        %v1185 = vshrl.u32 %v1184, 7
        %v1186 = vsub.s32 %v1183, %v1185
        %v1187 = vrot.slane %v1172, %v1186
        %v1188 = vcombine.low %v1180, %v1187
        %v1192 = vpack.c.bf16 %v1149, %v1100
        %v1193 = vpack.c.bf16 %v1188, %v1188
        %s1194 = scalar_lea.vmem [#allocation13], 16
        %v1195 = vld [vmem:[%s1194] sm:$0xf]
        %v1196 = vld [vmem:[%s1194 + $0x4] sm:$0xf]
        %v1197 = vld [vmem:[%s1194 + $0x8] sm:$0xf]
        %v1198 = vld [vmem:[%s1194 + $0xc] sm:$0xf]
        %v1203 = vunpack.c.l.b16 %v1195
        %v1204 = vunpack.c.l.b16 %v1196
        %v1205 = vunpack.c.l.b16 %v1197
        %v1206 = vunpack.c.l.b16 %v1198
        %v1207 = vpack.c.b16 %v1204, %v1203
        %v1208 = vpack.c.b16 %v1206, %v1205
        %v1212 = vsel %vm635, %v1192, 0
        %v1215 = vsel %vm635, %v1193, 0
        %1217 = vmatprep.subr.bf16.mxu0 0
        %1218 = vmatpush1.bf16.msra.mxu0 %v1207
        %1219 = vmatprep.subr.bf16.mxu0 0
        %1220 = vmatpush1.bf16.msra.mxu0 %v1208
        %1221 = vmatprep.subr.bf16.mxu0 0
        %1222 = vmatpush1.bf16.msra.mxu0 0
        %1223 = vmatprep.subr.bf16.mxu0 0
        %1224 = vmatpush1.bf16.msra.mxu0 0
        %1225 = vmatprep.subr.bf16.mxu0 0
        %1226 = vmatpush1.bf16.msra.mxu0 0
        %1227 = vmatprep.subr.bf16.mxu0 0
        %1228 = vmatpush1.bf16.msra.mxu0 0
        %1229 = vmatprep.subr.bf16.mxu0 0
        %1230 = vmatpush1.bf16.msra.mxu0 0
        %1231 = vmatprep.subr.bf16.mxu0 0
        %1232 = vmatpush1.bf16.msra.mxu0 0
        %1233 = vmatprep.subr.bf16.mxu0 0
        %1234 = vmatpush1.bf16.msra.mxu0 0
        %1235 = vmatprep.subr.bf16.mxu0 0
        %1236 = vmatpush1.bf16.msra.mxu0 0
        %1237 = vmatprep.subr.bf16.mxu0 0
        %1238 = vmatpush1.bf16.msra.mxu0 0
        %1239 = vmatprep.subr.bf16.mxu0 0
        %1240 = vmatpush1.bf16.msra.mxu0 0
        %1241 = vmatprep.subr.bf16.mxu0 0
        %1242 = vmatpush1.bf16.msra.mxu0 0
        %1243 = vmatprep.subr.bf16.mxu0 0
        %1244 = vmatpush1.bf16.msra.mxu0 0
        %1245 = vmatprep.subr.bf16.mxu0 0
        %1246 = vmatpush1.bf16.msra.mxu0 0
        %1247 = vmatprep.subr.bf16.mxu0 0
        %1248 = vmatpush1.bf16.msra.mxu0 0
        %1249 = vmatprep.mubr.bf16.mxu0 0
        %1250 = vmatmul.mubr.bf16.gmra.mrb[0].mxu0 %v1212
        %v1251 = vpop.f32.mrb[0].mxu0
        %v1252 = vadd.f32 0.0, %v1251
        %v1253 = vpop.f32.mrb[0].mxu0
        %v1254 = vpop.f32.mrb[0].mxu0
        %v1255 = vadd.f32 0.0, %v1254
        %v1256 = vpop.f32.mrb[0].mxu0
        %1257 = vmatprep.mubr.bf16.mxu0 0
        %1258 = vmatmul.mubr.bf16.gmra.mrb[0].mxu0 %v1215
        %v1259 = vpop.f32.mrb[0].mxu0
        %v1260 = vadd.f32 0.0, %v1259
        %v1261 = vpop.f32.mrb[0].mxu0
        %v1262 = vpop.f32.mrb[0].mxu0
        %v1263 = vpop.f32.mrb[0].mxu0
        %1264 = vdwg.mxu0
        %v1265 = vld [vmem:[#allocation2 + $0x1] sm:$0x7f]
        %v1266 = vld [vmem:[#allocation2 + $0x9] sm:$0x7f]
        %v1267 = vld [vmem:[#allocation2 + $0x11] sm:$0x7f]
        %v1271 = vcombine.high %v1252, %v1252
        %v1273 = vunpack.c.l.s4 1966171168
        %v1274 = vunpack.c.0.s8 %v1273
        %v1275 = vlaneseq
        %v1276 = vshrl.u32 %v1275, 7
        %v1277 = vsub.s32 %v1274, %v1276
        %v1278 = vrot.slane %v1252, %v1277
        %v1280 = vunpack.c.l.s4 1966171168
        %v1281 = vunpack.c.0.s8 %v1280
        %v1282 = vlaneseq
        %v1283 = vshrl.u32 %v1282, 7
        %v1284 = vsub.s32 %v1281, %v1283
        %v1285 = vrot.slane %v1271, %v1284
        %v1286 = vcombine.high %v1278, %v1278
        %v1287 = vcombine.high %v1285, %v1285
        %v1289 = vunpack.c.l.s4 1966171168
        %v1290 = vunpack.c.0.s8 %v1289
        %v1291 = vlaneseq
        %v1292 = vshrl.u32 %v1291, 7
        %v1293 = vsub.s32 %v1290, %v1292
        %v1294 = vrot.slane %v1278, %v1293
        %v1296 = vunpack.c.l.s4 1966171168
        %v1297 = vunpack.c.0.s8 %v1296
        %v1298 = vlaneseq
        %v1299 = vshrl.u32 %v1298, 7
        %v1300 = vsub.s32 %v1297, %v1299
        %v1301 = vrot.slane %v1285, %v1300
        %v1303 = vunpack.c.l.s4 1966171168
        %v1304 = vunpack.c.0.s8 %v1303
        %v1305 = vlaneseq
        %v1306 = vshrl.u32 %v1305, 7
        %v1307 = vsub.s32 %v1304, %v1306
        %v1308 = vrot.slane %v1286, %v1307
        %v1310 = vunpack.c.l.s4 1966171168
        %v1311 = vunpack.c.0.s8 %v1310
        %v1312 = vlaneseq
        %v1313 = vshrl.u32 %v1312, 7
        %v1314 = vsub.s32 %v1311, %v1313
        %v1315 = vrot.slane %v1287, %v1314
        %v1316 = vcombine.high %v1294, %v1294
        %v1317 = vcombine.high %v1301, %v1301
        %v1318 = vcombine.high %v1308, %v1308
        %v1319 = vcombine.high %v1315, %v1315
        %v1320 = vcombine.high %v1255, %v1255
        %v1322 = vunpack.c.l.s4 1966171168
        %v1323 = vunpack.c.0.s8 %v1322
        %v1324 = vlaneseq
        %v1325 = vshrl.u32 %v1324, 7
        %v1326 = vsub.s32 %v1323, %v1325
        %v1327 = vrot.slane %v1255, %v1326
        %v1329 = vunpack.c.l.s4 1966171168
        %v1330 = vunpack.c.0.s8 %v1329
        %v1331 = vlaneseq
        %v1332 = vshrl.u32 %v1331, 7
        %v1333 = vsub.s32 %v1330, %v1332
        %v1334 = vrot.slane %v1320, %v1333
        %v1335 = vcombine.high %v1327, %v1327
        %v1336 = vcombine.high %v1334, %v1334
        %v1338 = vunpack.c.l.s4 1966171168
        %v1339 = vunpack.c.0.s8 %v1338
        %v1340 = vlaneseq
        %v1341 = vshrl.u32 %v1340, 7
        %v1342 = vsub.s32 %v1339, %v1341
        %v1343 = vrot.slane %v1327, %v1342
        %v1345 = vunpack.c.l.s4 1966171168
        %v1346 = vunpack.c.0.s8 %v1345
        %v1347 = vlaneseq
        %v1348 = vshrl.u32 %v1347, 7
        %v1349 = vsub.s32 %v1346, %v1348
        %v1350 = vrot.slane %v1334, %v1349
        %v1352 = vunpack.c.l.s4 1966171168
        %v1353 = vunpack.c.0.s8 %v1352
        %v1354 = vlaneseq
        %v1355 = vshrl.u32 %v1354, 7
        %v1356 = vsub.s32 %v1353, %v1355
        %v1357 = vrot.slane %v1335, %v1356
        %v1359 = vunpack.c.l.s4 1966171168
        %v1360 = vunpack.c.0.s8 %v1359
        %v1361 = vlaneseq
        %v1362 = vshrl.u32 %v1361, 7
        %v1363 = vsub.s32 %v1360, %v1362
        %v1364 = vrot.slane %v1336, %v1363
        %v1365 = vcombine.high %v1343, %v1343
        %v1366 = vcombine.high %v1350, %v1350
        %v1367 = vcombine.high %v1357, %v1357
        %v1368 = vcombine.high %v1364, %v1364
        %v1369 = vcombine.high %v1260, %v1260
        %v1371 = vunpack.c.l.s4 1966171168
        %v1372 = vunpack.c.0.s8 %v1371
        %v1373 = vlaneseq
        %v1374 = vshrl.u32 %v1373, 7
        %v1375 = vsub.s32 %v1372, %v1374
        %v1376 = vrot.slane %v1260, %v1375
        %v1378 = vunpack.c.l.s4 1966171168
        %v1379 = vunpack.c.0.s8 %v1378
        %v1380 = vlaneseq
        %v1381 = vshrl.u32 %v1380, 7
        %v1382 = vsub.s32 %v1379, %v1381
        %v1383 = vrot.slane %v1369, %v1382
        %v1384 = vcombine.high %v1376, %v1376
        %v1386 = vunpack.c.l.s4 1966171168
        %v1387 = vunpack.c.0.s8 %v1386
        %v1388 = vlaneseq
        %v1389 = vshrl.u32 %v1388, 7
        %v1390 = vsub.s32 %v1387, %v1389
        %v1391 = vrot.slane %v1376, %v1390
        %v1393 = vunpack.c.l.s4 1966171168
        %v1394 = vunpack.c.0.s8 %v1393
        %v1395 = vlaneseq
        %v1396 = vshrl.u32 %v1395, 7
        %v1397 = vsub.s32 %v1394, %v1396
        %v1398 = vrot.slane %v1383, %v1397
        %v1400 = vunpack.c.l.s4 1966171168
        %v1401 = vunpack.c.0.s8 %v1400
        %v1402 = vlaneseq
        %v1403 = vshrl.u32 %v1402, 7
        %v1404 = vsub.s32 %v1401, %v1403
        %v1405 = vrot.slane %v1384, %v1404
        %v1406 = vcombine.high %v1391, %v1391
        %v1407 = vcombine.high %v1405, %v1405
        %v1408 = vcombine.low %v1294, %v1308
        %v1409 = vcombine.low %v1316, %v1318
        %v1410 = vcombine.low %v1301, %v1315
        %v1412 = vunpack.c.l.s4 1966171168
        %v1413 = vunpack.c.0.s8 %v1412
        %v1414 = vlaneseq
        %v1415 = vshrl.u32 %v1414, 7
        %v1416 = vsub.s32 %v1413, %v1415
        %v1417 = vrot.slane %v1408, %v1416
        %v1419 = vunpack.c.l.s4 1966171168
        %v1420 = vunpack.c.0.s8 %v1419
        %v1421 = vlaneseq
        %v1422 = vshrl.u32 %v1421, 7
        %v1423 = vsub.s32 %v1420, %v1422
        %v1424 = vrot.slane %v1409, %v1423
        %v1426 = vunpack.c.l.s4 1966171168
        %v1427 = vunpack.c.0.s8 %v1426
        %v1428 = vlaneseq
        %v1429 = vshrl.u32 %v1428, 7
        %v1430 = vsub.s32 %v1427, %v1429
        %v1431 = vrot.slane %v1410, %v1430
        %v1433 = vunpack.c.l.s4 1966171168
        %v1434 = vunpack.c.0.s8 %v1433
        %v1435 = vlaneseq
        %v1436 = vshrl.u32 %v1435, 7
        %v1437 = vsub.s32 %v1434, %v1436
        %v1438 = vrot.slane %v1317, %v1437
        %v1439 = vcombine.low %v1417, %v1424
        %v1440 = vcombine.low %v1431, %v1438
        %v1442 = vunpack.c.l.s4 1966171168
        %v1443 = vunpack.c.0.s8 %v1442
        %v1444 = vlaneseq
        %v1445 = vshrl.u32 %v1444, 7
        %v1446 = vsub.s32 %v1443, %v1445
        %v1447 = vrot.slane %v1439, %v1446
        %v1449 = vunpack.c.l.s4 1966171168
        %v1450 = vunpack.c.0.s8 %v1449
        %v1451 = vlaneseq
        %v1452 = vshrl.u32 %v1451, 7
        %v1453 = vsub.s32 %v1450, %v1452
        %v1454 = vrot.slane %v1440, %v1453
        %v1455 = vcombine.low %v1447, %v1454
        %v1456 = vcombine.low %v1319, %v1343
        %v1457 = vcombine.low %v1357, %v1365
        %v1458 = vcombine.low %v1367, %v1350
        %v1460 = vunpack.c.l.s4 1966171168
        %v1461 = vunpack.c.0.s8 %v1460
        %v1462 = vlaneseq
        %v1463 = vshrl.u32 %v1462, 7
        %v1464 = vsub.s32 %v1461, %v1463
        %v1465 = vrot.slane %v1456, %v1464
        %v1467 = vunpack.c.l.s4 1966171168
        %v1468 = vunpack.c.0.s8 %v1467
        %v1469 = vlaneseq
        %v1470 = vshrl.u32 %v1469, 7
        %v1471 = vsub.s32 %v1468, %v1470
        %v1472 = vrot.slane %v1457, %v1471
        %v1474 = vunpack.c.l.s4 1966171168
        %v1475 = vunpack.c.0.s8 %v1474
        %v1476 = vlaneseq
        %v1477 = vshrl.u32 %v1476, 7
        %v1478 = vsub.s32 %v1475, %v1477
        %v1479 = vrot.slane %v1458, %v1478
        %v1481 = vunpack.c.l.s4 1966171168
        %v1482 = vunpack.c.0.s8 %v1481
        %v1483 = vlaneseq
        %v1484 = vshrl.u32 %v1483, 7
        %v1485 = vsub.s32 %v1482, %v1484
        %v1486 = vrot.slane %v1364, %v1485
        %v1487 = vcombine.low %v1465, %v1472
        %v1488 = vcombine.low %v1479, %v1486
        %v1490 = vunpack.c.l.s4 1966171168
        %v1491 = vunpack.c.0.s8 %v1490
        %v1492 = vlaneseq
        %v1493 = vshrl.u32 %v1492, 7
        %v1494 = vsub.s32 %v1491, %v1493
        %v1495 = vrot.slane %v1487, %v1494
        %v1497 = vunpack.c.l.s4 1966171168
        %v1498 = vunpack.c.0.s8 %v1497
        %v1499 = vlaneseq
        %v1500 = vshrl.u32 %v1499, 7
        %v1501 = vsub.s32 %v1498, %v1500
        %v1502 = vrot.slane %v1488, %v1501
        %v1503 = vcombine.low %v1495, %v1502
        %v1504 = vcombine.low %v1366, %v1368
        %v1505 = vcombine.low %v1391, %v1405
        %v1506 = vcombine.low %v1406, %v1407
        %v1508 = vunpack.c.l.s4 1966171168
        %v1509 = vunpack.c.0.s8 %v1508
        %v1510 = vlaneseq
        %v1511 = vshrl.u32 %v1510, 7
        %v1512 = vsub.s32 %v1509, %v1511
        %v1513 = vrot.slane %v1504, %v1512
        %v1515 = vunpack.c.l.s4 1966171168
        %v1516 = vunpack.c.0.s8 %v1515
        %v1517 = vlaneseq
        %v1518 = vshrl.u32 %v1517, 7
        %v1519 = vsub.s32 %v1516, %v1518
        %v1520 = vrot.slane %v1505, %v1519
        %v1522 = vunpack.c.l.s4 1966171168
        %v1523 = vunpack.c.0.s8 %v1522
        %v1524 = vlaneseq
        %v1525 = vshrl.u32 %v1524, 7
        %v1526 = vsub.s32 %v1523, %v1525
        %v1527 = vrot.slane %v1506, %v1526
        %v1529 = vunpack.c.l.s4 1966171168
        %v1530 = vunpack.c.0.s8 %v1529
        %v1531 = vlaneseq
        %v1532 = vshrl.u32 %v1531, 7
        %v1533 = vsub.s32 %v1530, %v1532
        %v1534 = vrot.slane %v1398, %v1533
        %v1535 = vcombine.low %v1513, %v1520
        %v1536 = vcombine.low %v1527, %v1534
        %v1538 = vunpack.c.l.s4 1966171168
        %v1539 = vunpack.c.0.s8 %v1538
        %v1540 = vlaneseq
        %v1541 = vshrl.u32 %v1540, 7
        %v1542 = vsub.s32 %v1539, %v1541
        %v1543 = vrot.slane %v1535, %v1542
        %v1545 = vunpack.c.l.s4 1966171168
        %v1546 = vunpack.c.0.s8 %v1545
        %v1547 = vlaneseq
        %v1548 = vshrl.u32 %v1547, 7
        %v1549 = vsub.s32 %v1546, %v1548
        %v1550 = vrot.slane %v1536, %v1549
        %v1551 = vcombine.low %v1543, %v1550
        %v1555 = vadd.f32 %v1265, %v1455
        %v1556 = vadd.f32 %v1266, %v1503
        %v1557 = vadd.f32 %v1267, %v1551
        %vm1558 = vcmask 260096
        %1559 = vst.msk [vmem:[#allocation2 + $0x1] sm:$0x7f] %vm1558, %v1555
        %1560 = vst.msk [vmem:[#allocation2 + $0x9] sm:$0x7f] %vm1558, %v1556
        %1561 = vst.msk [vmem:[#allocation2 + $0x11] sm:$0x7f] %vm1558, %v1557
        %v1562 = vpack.c.bf16 %v619, %v618
        %v1563 = vpack.c.bf16 %v620, %v620
        %s1564 = scalar_lea.vmem [#allocation13], 32
        %v1565 = vld [vmem:[%s1564] sm:$0xf]
        %v1566 = vld [vmem:[%s1564 + $0x4] sm:$0xf]
        %v1567 = vld [vmem:[%s1564 + $0x8] sm:$0xf]
        %v1568 = vld [vmem:[%s1564 + $0xc] sm:$0xf]
        %v1573 = vunpack.c.l.b16 %v1565
        %v1574 = vunpack.c.l.b16 %v1566
        %v1575 = vunpack.c.l.b16 %v1567
        %v1576 = vunpack.c.l.b16 %v1568
        %v1577 = vpack.c.b16 %v1574, %v1573
        %v1578 = vpack.c.b16 %v1576, %v1575
        %v1582 = vsel %vm635, %v1562, 0
        %v1585 = vsel %vm635, %v1563, 0
        %1587 = vmatprep.subr.bf16.mxu0 0
        %1588 = vmatpush1.bf16.msra.mxu0 %v1577
        %1589 = vmatprep.subr.bf16.mxu0 0
        %1590 = vmatpush1.bf16.msra.mxu0 %v1578
        %1591 = vmatprep.subr.bf16.mxu0 0
        %1592 = vmatpush1.bf16.msra.mxu0 0
        %1593 = vmatprep.subr.bf16.mxu0 0
        %1594 = vmatpush1.bf16.msra.mxu0 0
        %1595 = vmatprep.subr.bf16.mxu0 0
        %1596 = vmatpush1.bf16.msra.mxu0 0
        %1597 = vmatprep.subr.bf16.mxu0 0
        %1598 = vmatpush1.bf16.msra.mxu0 0
        %1599 = vmatprep.subr.bf16.mxu0 0
        %1600 = vmatpush1.bf16.msra.mxu0 0
        %1601 = vmatprep.subr.bf16.mxu0 0
        %1602 = vmatpush1.bf16.msra.mxu0 0
        %1603 = vmatprep.subr.bf16.mxu0 0
        %1604 = vmatpush1.bf16.msra.mxu0 0
        %1605 = vmatprep.subr.bf16.mxu0 0
        %1606 = vmatpush1.bf16.msra.mxu0 0
        %1607 = vmatprep.subr.bf16.mxu0 0
        %1608 = vmatpush1.bf16.msra.mxu0 0
        %1609 = vmatprep.subr.bf16.mxu0 0
        %1610 = vmatpush1.bf16.msra.mxu0 0
        %1611 = vmatprep.subr.bf16.mxu0 0
        %1612 = vmatpush1.bf16.msra.mxu0 0
        %1613 = vmatprep.subr.bf16.mxu0 0
        %1614 = vmatpush1.bf16.msra.mxu0 0
        %1615 = vmatprep.subr.bf16.mxu0 0
        %1616 = vmatpush1.bf16.msra.mxu0 0
        %1617 = vmatprep.subr.bf16.mxu0 0
        %1618 = vmatpush1.bf16.msra.mxu0 0
        %1619 = vmatprep.mubr.bf16.mxu0 0
        %1620 = vmatmul.mubr.bf16.gmra.mrb[0].mxu0 %v1582
        %v1621 = vpop.f32.mrb[0].mxu0
        %v1622 = vadd.f32 0.0, %v1621
        %v1623 = vpop.f32.mrb[0].mxu0
        %v1624 = vpop.f32.mrb[0].mxu0
        %v1625 = vadd.f32 0.0, %v1624
        %v1626 = vpop.f32.mrb[0].mxu0
        %1627 = vmatprep.mubr.bf16.mxu0 0
        %1628 = vmatmul.mubr.bf16.gmra.mrb[0].mxu0 %v1585
        %v1629 = vpop.f32.mrb[0].mxu0
        %v1630 = vadd.f32 0.0, %v1629
        %v1631 = vpop.f32.mrb[0].mxu0
        %v1632 = vpop.f32.mrb[0].mxu0
        %v1633 = vpop.f32.mrb[0].mxu0
        %1634 = vdwg.mxu0
        %v1635 = vld [vmem:[#allocation2] sm:$0xff]
        %v1636 = vld [vmem:[#allocation2 + $0x8] sm:$0xff]
        %v1637 = vld [vmem:[#allocation2 + $0x10] sm:$0xff]
        %v1638 = vadd.f32 %v1635, %v1622
        %v1639 = vadd.f32 %v1636, %v1625
        %v1640 = vadd.f32 %v1637, %v1630
        %1641 = vst.msk [vmem:[#allocation2] sm:$0xff] %vm635, %v1638
        %1642 = vst.msk [vmem:[#allocation2 + $0x8] sm:$0xff] %vm635, %v1639
        %1643 = vst.msk [vmem:[#allocation2 + $0x10] sm:$0xff] %vm635, %v1640
        %v1644 = vld [vmem:[%s7] sm:$0x1]
        %v1646 = vlaneseq
        %v1647 = vshrl.u32 %v1646, 7
        %v1648 = vsub.s32 0, %v1647
        %v1649 = vrot.slane %v1644, %v1648
        %1651 = vst.msk [vmem:[#allocation3] sm:$0xff] %vm635, %v1649
        %1652 = vst.msk [vmem:[#allocation3 + $0x8] sm:$0xff] %vm635, %v1649
        %1653 = vst.msk [vmem:[#allocation3 + $0x10] sm:$0xff] %vm635, %v1649
        %v1657 = vcombine.high %v621, %v621
        %v1659 = vunpack.c.l.s4 1966171168
        %v1660 = vunpack.c.0.s8 %v1659
        %v1661 = vlaneseq
        %v1662 = vshrl.u32 %v1661, 7
        %v1663 = vsub.s32 %v1660, %v1662
        %v1664 = vrot.slane %v621, %v1663
        %v1666 = vunpack.c.l.s4 1966171168
        %v1667 = vunpack.c.0.s8 %v1666
        %v1668 = vlaneseq
        %v1669 = vshrl.u32 %v1668, 7
        %v1670 = vsub.s32 %v1667, %v1669
        %v1671 = vrot.slane %v1657, %v1670
        %v1672 = vcombine.high %v1664, %v1664
        %v1673 = vcombine.high %v1671, %v1671
        %v1675 = vunpack.c.l.s4 1966171168
        %v1676 = vunpack.c.0.s8 %v1675
        %v1677 = vlaneseq
        %v1678 = vshrl.u32 %v1677, 7
        %v1679 = vsub.s32 %v1676, %v1678
        %v1680 = vrot.slane %v1664, %v1679
        %v1682 = vunpack.c.l.s4 1966171168
        %v1683 = vunpack.c.0.s8 %v1682
        %v1684 = vlaneseq
        %v1685 = vshrl.u32 %v1684, 7
        %v1686 = vsub.s32 %v1683, %v1685
        %v1687 = vrot.slane %v1671, %v1686
        %v1689 = vunpack.c.l.s4 1966171168
        %v1690 = vunpack.c.0.s8 %v1689
        %v1691 = vlaneseq
        %v1692 = vshrl.u32 %v1691, 7
        %v1693 = vsub.s32 %v1690, %v1692
        %v1694 = vrot.slane %v1672, %v1693
        %v1696 = vunpack.c.l.s4 1966171168
        %v1697 = vunpack.c.0.s8 %v1696
        %v1698 = vlaneseq
        %v1699 = vshrl.u32 %v1698, 7
        %v1700 = vsub.s32 %v1697, %v1699
        %v1701 = vrot.slane %v1673, %v1700
        %v1702 = vcombine.high %v1680, %v1680
        %v1703 = vcombine.high %v1687, %v1687
        %v1704 = vcombine.high %v1694, %v1694
        %v1705 = vcombine.high %v622, %v622
        %v1707 = vunpack.c.l.s4 1966171168
        %v1708 = vunpack.c.0.s8 %v1707
        %v1709 = vlaneseq
        %v1710 = vshrl.u32 %v1709, 7
        %v1711 = vsub.s32 %v1708, %v1710
        %v1712 = vrot.slane %v622, %v1711
        %v1714 = vunpack.c.l.s4 1966171168
        %v1715 = vunpack.c.0.s8 %v1714
        %v1716 = vlaneseq
        %v1717 = vshrl.u32 %v1716, 7
        %v1718 = vsub.s32 %v1715, %v1717
        %v1719 = vrot.slane %v1705, %v1718
        %v1720 = vcombine.high %v1712, %v1712
        %v1721 = vcombine.high %v1719, %v1719
        %v1723 = vunpack.c.l.s4 1966171168
        %v1724 = vunpack.c.0.s8 %v1723
        %v1725 = vlaneseq
        %v1726 = vshrl.u32 %v1725, 7
        %v1727 = vsub.s32 %v1724, %v1726
        %v1728 = vrot.slane %v1712, %v1727
        %v1730 = vunpack.c.l.s4 1966171168
        %v1731 = vunpack.c.0.s8 %v1730
        %v1732 = vlaneseq
        %v1733 = vshrl.u32 %v1732, 7
        %v1734 = vsub.s32 %v1731, %v1733
        %v1735 = vrot.slane %v1719, %v1734
        %v1737 = vunpack.c.l.s4 1966171168
        %v1738 = vunpack.c.0.s8 %v1737
        %v1739 = vlaneseq
        %v1740 = vshrl.u32 %v1739, 7
        %v1741 = vsub.s32 %v1738, %v1740
        %v1742 = vrot.slane %v1720, %v1741
        %v1744 = vunpack.c.l.s4 1966171168
        %v1745 = vunpack.c.0.s8 %v1744
        %v1746 = vlaneseq
        %v1747 = vshrl.u32 %v1746, 7
        %v1748 = vsub.s32 %v1745, %v1747
        %v1749 = vrot.slane %v1721, %v1748
        %v1750 = vcombine.high %v1728, %v1728
        %v1751 = vcombine.high %v1735, %v1735
        %v1752 = vcombine.high %v1742, %v1742
        %v1753 = vcombine.high %v623, %v623
        %v1755 = vunpack.c.l.s4 1966171168
        %v1756 = vunpack.c.0.s8 %v1755
        %v1757 = vlaneseq
        %v1758 = vshrl.u32 %v1757, 7
        %v1759 = vsub.s32 %v1756, %v1758
        %v1760 = vrot.slane %v623, %v1759
        %v1762 = vunpack.c.l.s4 1966171168
        %v1763 = vunpack.c.0.s8 %v1762
        %v1764 = vlaneseq
        %v1765 = vshrl.u32 %v1764, 7
        %v1766 = vsub.s32 %v1763, %v1765
        %v1767 = vrot.slane %v1753, %v1766
        %v1768 = vcombine.high %v1760, %v1760
        %v1769 = vcombine.high %v1767, %v1767
        %v1771 = vunpack.c.l.s4 1966171168
        %v1772 = vunpack.c.0.s8 %v1771
        %v1773 = vlaneseq
        %v1774 = vshrl.u32 %v1773, 7
        %v1775 = vsub.s32 %v1772, %v1774
        %v1776 = vrot.slane %v1760, %v1775
        %v1778 = vunpack.c.l.s4 1966171168
        %v1779 = vunpack.c.0.s8 %v1778
        %v1780 = vlaneseq
        %v1781 = vshrl.u32 %v1780, 7
        %v1782 = vsub.s32 %v1779, %v1781
        %v1783 = vrot.slane %v1767, %v1782
        %v1785 = vunpack.c.l.s4 1966171168
        %v1786 = vunpack.c.0.s8 %v1785
        %v1787 = vlaneseq
        %v1788 = vshrl.u32 %v1787, 7
        %v1789 = vsub.s32 %v1786, %v1788
        %v1790 = vrot.slane %v1768, %v1789
        %v1792 = vunpack.c.l.s4 1966171168
        %v1793 = vunpack.c.0.s8 %v1792
        %v1794 = vlaneseq
        %v1795 = vshrl.u32 %v1794, 7
        %v1796 = vsub.s32 %v1793, %v1795
        %v1797 = vrot.slane %v1769, %v1796
        %v1798 = vcombine.high %v1776, %v1776
        %v1799 = vcombine.high %v1783, %v1783
        %v1800 = vcombine.high %v1790, %v1790
        %v1801 = vcombine.low %v1680, %v1694
        %v1802 = vcombine.low %v1702, %v1704
        %v1803 = vcombine.low %v1687, %v1701
        %v1804 = vcombine.low %v1703, %v1728
        %v1806 = vunpack.c.l.s4 1966171168
        %v1807 = vunpack.c.0.s8 %v1806
        %v1808 = vlaneseq
        %v1809 = vshrl.u32 %v1808, 7
        %v1810 = vsub.s32 %v1807, %v1809
        %v1811 = vrot.slane %v1801, %v1810
        %v1813 = vunpack.c.l.s4 1966171168
        %v1814 = vunpack.c.0.s8 %v1813
        %v1815 = vlaneseq
        %v1816 = vshrl.u32 %v1815, 7
        %v1817 = vsub.s32 %v1814, %v1816
        %v1818 = vrot.slane %v1802, %v1817
        %v1820 = vunpack.c.l.s4 1966171168
        %v1821 = vunpack.c.0.s8 %v1820
        %v1822 = vlaneseq
        %v1823 = vshrl.u32 %v1822, 7
        %v1824 = vsub.s32 %v1821, %v1823
        %v1825 = vrot.slane %v1803, %v1824
        %v1827 = vunpack.c.l.s4 1966171168
        %v1828 = vunpack.c.0.s8 %v1827
        %v1829 = vlaneseq
        %v1830 = vshrl.u32 %v1829, 7
        %v1831 = vsub.s32 %v1828, %v1830
        %v1832 = vrot.slane %v1804, %v1831
        %v1833 = vcombine.low %v1811, %v1818
        %v1834 = vcombine.low %v1825, %v1832
        %v1836 = vunpack.c.l.s4 1966171168
        %v1837 = vunpack.c.0.s8 %v1836
        %v1838 = vlaneseq
        %v1839 = vshrl.u32 %v1838, 7
        %v1840 = vsub.s32 %v1837, %v1839
        %v1841 = vrot.slane %v1833, %v1840
        %v1843 = vunpack.c.l.s4 1966171168
        %v1844 = vunpack.c.0.s8 %v1843
        %v1845 = vlaneseq
        %v1846 = vshrl.u32 %v1845, 7
        %v1847 = vsub.s32 %v1844, %v1846
        %v1848 = vrot.slane %v1834, %v1847
        %v1849 = vcombine.low %v1841, %v1848
        %v1850 = vcombine.low %v1742, %v1750
        %v1851 = vcombine.low %v1752, %v1735
        %v1852 = vcombine.low %v1749, %v1751
        %v1853 = vcombine.low %v1776, %v1790
        %v1855 = vunpack.c.l.s4 1966171168
        %v1856 = vunpack.c.0.s8 %v1855
        %v1857 = vlaneseq
        %v1858 = vshrl.u32 %v1857, 7
        %v1859 = vsub.s32 %v1856, %v1858
        %v1860 = vrot.slane %v1850, %v1859
        %v1862 = vunpack.c.l.s4 1966171168
        %v1863 = vunpack.c.0.s8 %v1862
        %v1864 = vlaneseq
        %v1865 = vshrl.u32 %v1864, 7
        %v1866 = vsub.s32 %v1863, %v1865
        %v1867 = vrot.slane %v1851, %v1866
        %v1869 = vunpack.c.l.s4 1966171168
        %v1870 = vunpack.c.0.s8 %v1869
        %v1871 = vlaneseq
        %v1872 = vshrl.u32 %v1871, 7
        %v1873 = vsub.s32 %v1870, %v1872
        %v1874 = vrot.slane %v1852, %v1873
        %v1876 = vunpack.c.l.s4 1966171168
        %v1877 = vunpack.c.0.s8 %v1876
        %v1878 = vlaneseq
        %v1879 = vshrl.u32 %v1878, 7
        %v1880 = vsub.s32 %v1877, %v1879
        %v1881 = vrot.slane %v1853, %v1880
        %v1882 = vcombine.low %v1860, %v1867
        %v1883 = vcombine.low %v1874, %v1881
        %v1885 = vunpack.c.l.s4 1966171168
        %v1886 = vunpack.c.0.s8 %v1885
        %v1887 = vlaneseq
        %v1888 = vshrl.u32 %v1887, 7
        %v1889 = vsub.s32 %v1886, %v1888
        %v1890 = vrot.slane %v1882, %v1889
        %v1892 = vunpack.c.l.s4 1966171168
        %v1893 = vunpack.c.0.s8 %v1892
        %v1894 = vlaneseq
        %v1895 = vshrl.u32 %v1894, 7
        %v1896 = vsub.s32 %v1893, %v1895
        %v1897 = vrot.slane %v1883, %v1896
        %v1898 = vcombine.low %v1890, %v1897
        %v1899 = vcombine.low %v1798, %v1800
        %v1900 = vcombine.low %v1783, %v1797
        %v1902 = vunpack.c.l.s4 1966171168
        %v1903 = vunpack.c.0.s8 %v1902
        %v1904 = vlaneseq
        %v1905 = vshrl.u32 %v1904, 7
        %v1906 = vsub.s32 %v1903, %v1905
        %v1907 = vrot.slane %v1899, %v1906
        %v1909 = vunpack.c.l.s4 1966171168
        %v1910 = vunpack.c.0.s8 %v1909
        %v1911 = vlaneseq
        %v1912 = vshrl.u32 %v1911, 7
        %v1913 = vsub.s32 %v1910, %v1912
        %v1914 = vrot.slane %v1900, %v1913
        %v1916 = vunpack.c.l.s4 1966171168
        %v1917 = vunpack.c.0.s8 %v1916
        %v1918 = vlaneseq
        %v1919 = vshrl.u32 %v1918, 7
        %v1920 = vsub.s32 %v1917, %v1919
        %v1921 = vrot.slane %v1799, %v1920
        %v1922 = vcombine.low %v1907, %v1914
        %v1924 = vunpack.c.l.s4 1966171168
        %v1925 = vunpack.c.0.s8 %v1924
        %v1926 = vlaneseq
        %v1927 = vshrl.u32 %v1926, 7
        %v1928 = vsub.s32 %v1925, %v1927
        %v1929 = vrot.slane %v1922, %v1928
        %v1931 = vunpack.c.l.s4 1966171168
        %v1932 = vunpack.c.0.s8 %v1931
        %v1933 = vlaneseq
        %v1934 = vshrl.u32 %v1933, 7
        %v1935 = vsub.s32 %v1932, %v1934
        %v1936 = vrot.slane %v1921, %v1935
        %v1937 = vcombine.low %v1929, %v1936
        %v1941 = vpack.c.bf16 %v1898, %v1849
        %v1942 = vpack.c.bf16 %v1937, %v1937
        %v1943 = vld [vmem:[#allocation14] sm:$0xf]
        %v1944 = vld [vmem:[#allocation14 + $0x4] sm:$0xf]
        %v1945 = vld [vmem:[#allocation14 + $0x8] sm:$0xf]
        %v1946 = vld [vmem:[#allocation14 + $0xc] sm:$0xf]
        %v1951 = vunpack.c.l.b16 %v1943
        %v1952 = vunpack.c.l.b16 %v1944
        %v1953 = vunpack.c.l.b16 %v1945
        %v1954 = vunpack.c.l.b16 %v1946
        %v1955 = vpack.c.b16 %v1952, %v1951
        %v1956 = vpack.c.b16 %v1954, %v1953
        %v1960 = vsel %vm635, %v1941, 0
        %v1963 = vsel %vm635, %v1942, 0
        %1965 = vmatprep.subr.bf16.mxu0 0
        %1966 = vmatpush1.bf16.msra.mxu0 %v1955
        %1967 = vmatprep.subr.bf16.mxu0 0
        %1968 = vmatpush1.bf16.msra.mxu0 %v1956
        %1969 = vmatprep.subr.bf16.mxu0 0
        %1970 = vmatpush1.bf16.msra.mxu0 0
        %1971 = vmatprep.subr.bf16.mxu0 0
        %1972 = vmatpush1.bf16.msra.mxu0 0
        %1973 = vmatprep.subr.bf16.mxu0 0
        %1974 = vmatpush1.bf16.msra.mxu0 0
        %1975 = vmatprep.subr.bf16.mxu0 0
        %1976 = vmatpush1.bf16.msra.mxu0 0
        %1977 = vmatprep.subr.bf16.mxu0 0
        %1978 = vmatpush1.bf16.msra.mxu0 0
        %1979 = vmatprep.subr.bf16.mxu0 0
        %1980 = vmatpush1.bf16.msra.mxu0 0
        %1981 = vmatprep.subr.bf16.mxu0 0
        %1982 = vmatpush1.bf16.msra.mxu0 0
        %1983 = vmatprep.subr.bf16.mxu0 0
        %1984 = vmatpush1.bf16.msra.mxu0 0
        %1985 = vmatprep.subr.bf16.mxu0 0
        %1986 = vmatpush1.bf16.msra.mxu0 0
        %1987 = vmatprep.subr.bf16.mxu0 0
        %1988 = vmatpush1.bf16.msra.mxu0 0
        %1989 = vmatprep.subr.bf16.mxu0 0
        %1990 = vmatpush1.bf16.msra.mxu0 0
        %1991 = vmatprep.subr.bf16.mxu0 0
        %1992 = vmatpush1.bf16.msra.mxu0 0
        %1993 = vmatprep.subr.bf16.mxu0 0
        %1994 = vmatpush1.bf16.msra.mxu0 0
        %1995 = vmatprep.subr.bf16.mxu0 0
        %1996 = vmatpush1.bf16.msra.mxu0 0
        %1997 = vmatprep.mubr.bf16.mxu0 0
        %1998 = vmatmul.mubr.bf16.gmra.mrb[0].mxu0 %v1960
        %v1999 = vpop.f32.mrb[0].mxu0
        %v2000 = vadd.f32 0.0, %v1999
        %v2001 = vpop.f32.mrb[0].mxu0
        %v2002 = vpop.f32.mrb[0].mxu0
        %v2003 = vadd.f32 0.0, %v2002
        %v2004 = vpop.f32.mrb[0].mxu0
        %2005 = vmatprep.mubr.bf16.mxu0 0
        %2006 = vmatmul.mubr.bf16.gmra.mrb[0].mxu0 %v1963
        %v2007 = vpop.f32.mrb[0].mxu0
        %v2008 = vadd.f32 0.0, %v2007
        %v2009 = vpop.f32.mrb[0].mxu0
        %v2010 = vpop.f32.mrb[0].mxu0
        %v2011 = vpop.f32.mrb[0].mxu0
        %2012 = vdwg.mxu0
        %v2013 = vld [vmem:[#allocation3 + $0x1] sm:$0x7f]
        %v2014 = vld [vmem:[#allocation3 + $0x9] sm:$0x7f]
        %v2015 = vld [vmem:[#allocation3 + $0x11] sm:$0x7f]
        %v2019 = vcombine.high %v2000, %v2000
        %v2021 = vunpack.c.l.s4 1966171168
        %v2022 = vunpack.c.0.s8 %v2021
        %v2023 = vlaneseq
        %v2024 = vshrl.u32 %v2023, 7
        %v2025 = vsub.s32 %v2022, %v2024
        %v2026 = vrot.slane %v2000, %v2025
        %v2028 = vunpack.c.l.s4 1966171168
        %v2029 = vunpack.c.0.s8 %v2028
        %v2030 = vlaneseq
        %v2031 = vshrl.u32 %v2030, 7
        %v2032 = vsub.s32 %v2029, %v2031
        %v2033 = vrot.slane %v2019, %v2032
        %v2034 = vcombine.high %v2026, %v2026
        %v2035 = vcombine.high %v2033, %v2033
        %v2037 = vunpack.c.l.s4 1966171168
        %v2038 = vunpack.c.0.s8 %v2037
        %v2039 = vlaneseq
        %v2040 = vshrl.u32 %v2039, 7
        %v2041 = vsub.s32 %v2038, %v2040
        %v2042 = vrot.slane %v2026, %v2041
        %v2044 = vunpack.c.l.s4 1966171168
        %v2045 = vunpack.c.0.s8 %v2044
        %v2046 = vlaneseq
        %v2047 = vshrl.u32 %v2046, 7
        %v2048 = vsub.s32 %v2045, %v2047
        %v2049 = vrot.slane %v2033, %v2048
        %v2051 = vunpack.c.l.s4 1966171168
        %v2052 = vunpack.c.0.s8 %v2051
        %v2053 = vlaneseq
        %v2054 = vshrl.u32 %v2053, 7
        %v2055 = vsub.s32 %v2052, %v2054
        %v2056 = vrot.slane %v2034, %v2055
        %v2058 = vunpack.c.l.s4 1966171168
        %v2059 = vunpack.c.0.s8 %v2058
        %v2060 = vlaneseq
        %v2061 = vshrl.u32 %v2060, 7
        %v2062 = vsub.s32 %v2059, %v2061
        %v2063 = vrot.slane %v2035, %v2062
        %v2064 = vcombine.high %v2042, %v2042
        %v2065 = vcombine.high %v2049, %v2049
        %v2066 = vcombine.high %v2056, %v2056
        %v2067 = vcombine.high %v2063, %v2063
        %v2068 = vcombine.high %v2003, %v2003
        %v2070 = vunpack.c.l.s4 1966171168
        %v2071 = vunpack.c.0.s8 %v2070
        %v2072 = vlaneseq
        %v2073 = vshrl.u32 %v2072, 7
        %v2074 = vsub.s32 %v2071, %v2073
        %v2075 = vrot.slane %v2003, %v2074
        %v2077 = vunpack.c.l.s4 1966171168
        %v2078 = vunpack.c.0.s8 %v2077
        %v2079 = vlaneseq
        %v2080 = vshrl.u32 %v2079, 7
        %v2081 = vsub.s32 %v2078, %v2080
        %v2082 = vrot.slane %v2068, %v2081
        %v2083 = vcombine.high %v2075, %v2075
        %v2084 = vcombine.high %v2082, %v2082
        %v2086 = vunpack.c.l.s4 1966171168
        %v2087 = vunpack.c.0.s8 %v2086
        %v2088 = vlaneseq
        %v2089 = vshrl.u32 %v2088, 7
        %v2090 = vsub.s32 %v2087, %v2089
        %v2091 = vrot.slane %v2075, %v2090
        %v2093 = vunpack.c.l.s4 1966171168
        %v2094 = vunpack.c.0.s8 %v2093
        %v2095 = vlaneseq
        %v2096 = vshrl.u32 %v2095, 7
        %v2097 = vsub.s32 %v2094, %v2096
        %v2098 = vrot.slane %v2082, %v2097
        %v2100 = vunpack.c.l.s4 1966171168
        %v2101 = vunpack.c.0.s8 %v2100
        %v2102 = vlaneseq
        %v2103 = vshrl.u32 %v2102, 7
        %v2104 = vsub.s32 %v2101, %v2103
        %v2105 = vrot.slane %v2083, %v2104
        %v2107 = vunpack.c.l.s4 1966171168
        %v2108 = vunpack.c.0.s8 %v2107
        %v2109 = vlaneseq
        %v2110 = vshrl.u32 %v2109, 7
        %v2111 = vsub.s32 %v2108, %v2110
        %v2112 = vrot.slane %v2084, %v2111
        %v2113 = vcombine.high %v2091, %v2091
        %v2114 = vcombine.high %v2098, %v2098
        %v2115 = vcombine.high %v2105, %v2105
        %v2116 = vcombine.high %v2112, %v2112
        %v2117 = vcombine.high %v2008, %v2008
        %v2119 = vunpack.c.l.s4 1966171168
        %v2120 = vunpack.c.0.s8 %v2119
        %v2121 = vlaneseq
        %v2122 = vshrl.u32 %v2121, 7
        %v2123 = vsub.s32 %v2120, %v2122
        %v2124 = vrot.slane %v2008, %v2123
        %v2126 = vunpack.c.l.s4 1966171168
        %v2127 = vunpack.c.0.s8 %v2126
        %v2128 = vlaneseq
        %v2129 = vshrl.u32 %v2128, 7
        %v2130 = vsub.s32 %v2127, %v2129
        %v2131 = vrot.slane %v2117, %v2130
        %v2132 = vcombine.high %v2124, %v2124
        %v2134 = vunpack.c.l.s4 1966171168
        %v2135 = vunpack.c.0.s8 %v2134
        %v2136 = vlaneseq
        %v2137 = vshrl.u32 %v2136, 7
        %v2138 = vsub.s32 %v2135, %v2137
        %v2139 = vrot.slane %v2124, %v2138
        %v2141 = vunpack.c.l.s4 1966171168
        %v2142 = vunpack.c.0.s8 %v2141
        %v2143 = vlaneseq
        %v2144 = vshrl.u32 %v2143, 7
        %v2145 = vsub.s32 %v2142, %v2144
        %v2146 = vrot.slane %v2131, %v2145
        %v2148 = vunpack.c.l.s4 1966171168
        %v2149 = vunpack.c.0.s8 %v2148
        %v2150 = vlaneseq
        %v2151 = vshrl.u32 %v2150, 7
        %v2152 = vsub.s32 %v2149, %v2151
        %v2153 = vrot.slane %v2132, %v2152
        %v2154 = vcombine.high %v2139, %v2139
        %v2155 = vcombine.high %v2153, %v2153
        %v2156 = vcombine.low %v2042, %v2056
        %v2157 = vcombine.low %v2064, %v2066
        %v2158 = vcombine.low %v2049, %v2063
        %v2160 = vunpack.c.l.s4 1966171168
        %v2161 = vunpack.c.0.s8 %v2160
        %v2162 = vlaneseq
        %v2163 = vshrl.u32 %v2162, 7
        %v2164 = vsub.s32 %v2161, %v2163
        %v2165 = vrot.slane %v2156, %v2164
        %v2167 = vunpack.c.l.s4 1966171168
        %v2168 = vunpack.c.0.s8 %v2167
        %v2169 = vlaneseq
        %v2170 = vshrl.u32 %v2169, 7
        %v2171 = vsub.s32 %v2168, %v2170
        %v2172 = vrot.slane %v2157, %v2171
        %v2174 = vunpack.c.l.s4 1966171168
        %v2175 = vunpack.c.0.s8 %v2174
        %v2176 = vlaneseq
        %v2177 = vshrl.u32 %v2176, 7
        %v2178 = vsub.s32 %v2175, %v2177
        %v2179 = vrot.slane %v2158, %v2178
        %v2181 = vunpack.c.l.s4 1966171168
        %v2182 = vunpack.c.0.s8 %v2181
        %v2183 = vlaneseq
        %v2184 = vshrl.u32 %v2183, 7
        %v2185 = vsub.s32 %v2182, %v2184
        %v2186 = vrot.slane %v2065, %v2185
        %v2187 = vcombine.low %v2165, %v2172
        %v2188 = vcombine.low %v2179, %v2186
        %v2190 = vunpack.c.l.s4 1966171168
        %v2191 = vunpack.c.0.s8 %v2190
        %v2192 = vlaneseq
        %v2193 = vshrl.u32 %v2192, 7
        %v2194 = vsub.s32 %v2191, %v2193
        %v2195 = vrot.slane %v2187, %v2194
        %v2197 = vunpack.c.l.s4 1966171168
        %v2198 = vunpack.c.0.s8 %v2197
        %v2199 = vlaneseq
        %v2200 = vshrl.u32 %v2199, 7
        %v2201 = vsub.s32 %v2198, %v2200
        %v2202 = vrot.slane %v2188, %v2201
        %v2203 = vcombine.low %v2195, %v2202
        %v2204 = vcombine.low %v2067, %v2091
        %v2205 = vcombine.low %v2105, %v2113
        %v2206 = vcombine.low %v2115, %v2098
        %v2208 = vunpack.c.l.s4 1966171168
        %v2209 = vunpack.c.0.s8 %v2208
        %v2210 = vlaneseq
        %v2211 = vshrl.u32 %v2210, 7
        %v2212 = vsub.s32 %v2209, %v2211
        %v2213 = vrot.slane %v2204, %v2212
        %v2215 = vunpack.c.l.s4 1966171168
        %v2216 = vunpack.c.0.s8 %v2215
        %v2217 = vlaneseq
        %v2218 = vshrl.u32 %v2217, 7
        %v2219 = vsub.s32 %v2216, %v2218
        %v2220 = vrot.slane %v2205, %v2219
        %v2222 = vunpack.c.l.s4 1966171168
        %v2223 = vunpack.c.0.s8 %v2222
        %v2224 = vlaneseq
        %v2225 = vshrl.u32 %v2224, 7
        %v2226 = vsub.s32 %v2223, %v2225
        %v2227 = vrot.slane %v2206, %v2226
        %v2229 = vunpack.c.l.s4 1966171168
        %v2230 = vunpack.c.0.s8 %v2229
        %v2231 = vlaneseq
        %v2232 = vshrl.u32 %v2231, 7
        %v2233 = vsub.s32 %v2230, %v2232
        %v2234 = vrot.slane %v2112, %v2233
        %v2235 = vcombine.low %v2213, %v2220
        %v2236 = vcombine.low %v2227, %v2234
        %v2238 = vunpack.c.l.s4 1966171168
        %v2239 = vunpack.c.0.s8 %v2238
        %v2240 = vlaneseq
        %v2241 = vshrl.u32 %v2240, 7
        %v2242 = vsub.s32 %v2239, %v2241
        %v2243 = vrot.slane %v2235, %v2242
        %v2245 = vunpack.c.l.s4 1966171168
        %v2246 = vunpack.c.0.s8 %v2245
        %v2247 = vlaneseq
        %v2248 = vshrl.u32 %v2247, 7
        %v2249 = vsub.s32 %v2246, %v2248
        %v2250 = vrot.slane %v2236, %v2249
        %v2251 = vcombine.low %v2243, %v2250
        %v2252 = vcombine.low %v2114, %v2116
        %v2253 = vcombine.low %v2139, %v2153
        %v2254 = vcombine.low %v2154, %v2155
        %v2256 = vunpack.c.l.s4 1966171168
        %v2257 = vunpack.c.0.s8 %v2256
        %v2258 = vlaneseq
        %v2259 = vshrl.u32 %v2258, 7
        %v2260 = vsub.s32 %v2257, %v2259
        %v2261 = vrot.slane %v2252, %v2260
        %v2263 = vunpack.c.l.s4 1966171168
        %v2264 = vunpack.c.0.s8 %v2263
        %v2265 = vlaneseq
        %v2266 = vshrl.u32 %v2265, 7
        %v2267 = vsub.s32 %v2264, %v2266
        %v2268 = vrot.slane %v2253, %v2267
        %v2270 = vunpack.c.l.s4 1966171168
        %v2271 = vunpack.c.0.s8 %v2270
        %v2272 = vlaneseq
        %v2273 = vshrl.u32 %v2272, 7
        %v2274 = vsub.s32 %v2271, %v2273
        %v2275 = vrot.slane %v2254, %v2274
        %v2277 = vunpack.c.l.s4 1966171168
        %v2278 = vunpack.c.0.s8 %v2277
        %v2279 = vlaneseq
        %v2280 = vshrl.u32 %v2279, 7
        %v2281 = vsub.s32 %v2278, %v2280
        %v2282 = vrot.slane %v2146, %v2281
        %v2283 = vcombine.low %v2261, %v2268
        %v2284 = vcombine.low %v2275, %v2282
        %v2286 = vunpack.c.l.s4 1966171168
        %v2287 = vunpack.c.0.s8 %v2286
        %v2288 = vlaneseq
        %v2289 = vshrl.u32 %v2288, 7
        %v2290 = vsub.s32 %v2287, %v2289
        %v2291 = vrot.slane %v2283, %v2290
        %v2293 = vunpack.c.l.s4 1966171168
        %v2294 = vunpack.c.0.s8 %v2293
        %v2295 = vlaneseq
        %v2296 = vshrl.u32 %v2295, 7
        %v2297 = vsub.s32 %v2294, %v2296
        %v2298 = vrot.slane %v2284, %v2297
        %v2299 = vcombine.low %v2291, %v2298
        %v2303 = vadd.f32 %v2013, %v2203
        %v2304 = vadd.f32 %v2014, %v2251
        %v2305 = vadd.f32 %v2015, %v2299
        %2306 = vst.msk [vmem:[#allocation3 + $0x1] sm:$0x7f] %vm1558, %v2303
        %2307 = vst.msk [vmem:[#allocation3 + $0x9] sm:$0x7f] %vm1558, %v2304
        %2308 = vst.msk [vmem:[#allocation3 + $0x11] sm:$0x7f] %vm1558, %v2305
        %v2309 = vpack.c.bf16 %v622, %v621
        %v2310 = vpack.c.bf16 %v623, %v623
        %s2311 = scalar_lea.vmem [#allocation14], 16
        %v2312 = vld [vmem:[%s2311] sm:$0xf]
        %v2313 = vld [vmem:[%s2311 + $0x4] sm:$0xf]
        %v2314 = vld [vmem:[%s2311 + $0x8] sm:$0xf]
        %v2315 = vld [vmem:[%s2311 + $0xc] sm:$0xf]
        %v2320 = vunpack.c.l.b16 %v2312
        %v2321 = vunpack.c.l.b16 %v2313
        %v2322 = vunpack.c.l.b16 %v2314
        %v2323 = vunpack.c.l.b16 %v2315
        %v2324 = vpack.c.b16 %v2321, %v2320
        %v2325 = vpack.c.b16 %v2323, %v2322
        %v2329 = vsel %vm635, %v2309, 0
        %v2332 = vsel %vm635, %v2310, 0
        %2334 = vmatprep.subr.bf16.mxu0 0
        %2335 = vmatpush1.bf16.msra.mxu0 %v2324
        %2336 = vmatprep.subr.bf16.mxu0 0
        %2337 = vmatpush1.bf16.msra.mxu0 %v2325
        %2338 = vmatprep.subr.bf16.mxu0 0
        %2339 = vmatpush1.bf16.msra.mxu0 0
        %2340 = vmatprep.subr.bf16.mxu0 0
        %2341 = vmatpush1.bf16.msra.mxu0 0
        %2342 = vmatprep.subr.bf16.mxu0 0
        %2343 = vmatpush1.bf16.msra.mxu0 0
        %2344 = vmatprep.subr.bf16.mxu0 0
        %2345 = vmatpush1.bf16.msra.mxu0 0
        %2346 = vmatprep.subr.bf16.mxu0 0
        %2347 = vmatpush1.bf16.msra.mxu0 0
        %2348 = vmatprep.subr.bf16.mxu0 0
        %2349 = vmatpush1.bf16.msra.mxu0 0
        %2350 = vmatprep.subr.bf16.mxu0 0
        %2351 = vmatpush1.bf16.msra.mxu0 0
        %2352 = vmatprep.subr.bf16.mxu0 0
        %2353 = vmatpush1.bf16.msra.mxu0 0
        %2354 = vmatprep.subr.bf16.mxu0 0
        %2355 = vmatpush1.bf16.msra.mxu0 0
        %2356 = vmatprep.subr.bf16.mxu0 0
        %2357 = vmatpush1.bf16.msra.mxu0 0
        %2358 = vmatprep.subr.bf16.mxu0 0
        %2359 = vmatpush1.bf16.msra.mxu0 0
        %2360 = vmatprep.subr.bf16.mxu0 0
        %2361 = vmatpush1.bf16.msra.mxu0 0
        %2362 = vmatprep.subr.bf16.mxu0 0
        %2363 = vmatpush1.bf16.msra.mxu0 0
        %2364 = vmatprep.subr.bf16.mxu0 0
        %2365 = vmatpush1.bf16.msra.mxu0 0
        %2366 = vmatprep.mubr.bf16.mxu0 0
        %2367 = vmatmul.mubr.bf16.gmra.mrb[0].mxu0 %v2329
        %v2368 = vpop.f32.mrb[0].mxu0
        %v2369 = vadd.f32 0.0, %v2368
        %v2370 = vpop.f32.mrb[0].mxu0
        %v2371 = vpop.f32.mrb[0].mxu0
        %v2372 = vadd.f32 0.0, %v2371
        %v2373 = vpop.f32.mrb[0].mxu0
        %2374 = vmatprep.mubr.bf16.mxu0 0
        %2375 = vmatmul.mubr.bf16.gmra.mrb[0].mxu0 %v2332
        %v2376 = vpop.f32.mrb[0].mxu0
        %v2377 = vadd.f32 0.0, %v2376
        %v2378 = vpop.f32.mrb[0].mxu0
        %v2379 = vpop.f32.mrb[0].mxu0
        %v2380 = vpop.f32.mrb[0].mxu0
        %2381 = vdwg.mxu0
        %v2382 = vld [vmem:[#allocation3] sm:$0xff]
        %v2383 = vld [vmem:[#allocation3 + $0x8] sm:$0xff]
        %v2384 = vld [vmem:[#allocation3 + $0x10] sm:$0xff]
        %v2385 = vadd.f32 %v2382, %v2369
        %v2386 = vadd.f32 %v2383, %v2372
        %v2387 = vadd.f32 %v2384, %v2377
        %2388 = vst.msk [vmem:[#allocation3] sm:$0xff] %vm635, %v2385
        %2389 = vst.msk [vmem:[#allocation3 + $0x8] sm:$0xff] %vm635, %v2386
        %2390 = vst.msk [vmem:[#allocation3 + $0x10] sm:$0xff] %vm635, %v2387
        %v2391 = vcombine.high %v1701, %v1701
        %v2392 = vcombine.high %v1749, %v1749
        %v2393 = vcombine.high %v1797, %v1797
        %v2394 = vcombine.low %v1694, %v1702
        %v2395 = vcombine.low %v1704, %v1687
        %v2396 = vcombine.low %v1701, %v1703
        %v2397 = vcombine.low %v2391, %v1742
        %v2399 = vunpack.c.l.s4 1966171168
        %v2400 = vunpack.c.0.s8 %v2399
        %v2401 = vlaneseq
        %v2402 = vshrl.u32 %v2401, 7
        %v2403 = vsub.s32 %v2400, %v2402
        %v2404 = vrot.slane %v2394, %v2403
        %v2406 = vunpack.c.l.s4 1966171168
        %v2407 = vunpack.c.0.s8 %v2406
        %v2408 = vlaneseq
        %v2409 = vshrl.u32 %v2408, 7
        %v2410 = vsub.s32 %v2407, %v2409
        %v2411 = vrot.slane %v2395, %v2410
        %v2413 = vunpack.c.l.s4 1966171168
        %v2414 = vunpack.c.0.s8 %v2413
        %v2415 = vlaneseq
        %v2416 = vshrl.u32 %v2415, 7
        %v2417 = vsub.s32 %v2414, %v2416
        %v2418 = vrot.slane %v2396, %v2417
        %v2420 = vunpack.c.l.s4 1966171168
        %v2421 = vunpack.c.0.s8 %v2420
        %v2422 = vlaneseq
        %v2423 = vshrl.u32 %v2422, 7
        %v2424 = vsub.s32 %v2421, %v2423
        %v2425 = vrot.slane %v2397, %v2424
        %v2426 = vcombine.low %v2404, %v2411
        %v2427 = vcombine.low %v2418, %v2425
        %v2429 = vunpack.c.l.s4 1966171168
        %v2430 = vunpack.c.0.s8 %v2429
        %v2431 = vlaneseq
        %v2432 = vshrl.u32 %v2431, 7
        %v2433 = vsub.s32 %v2430, %v2432
        %v2434 = vrot.slane %v2426, %v2433
        %v2436 = vunpack.c.l.s4 1966171168
        %v2437 = vunpack.c.0.s8 %v2436
        %v2438 = vlaneseq
        %v2439 = vshrl.u32 %v2438, 7
        %v2440 = vsub.s32 %v2437, %v2439
        %v2441 = vrot.slane %v2427, %v2440
        %v2442 = vcombine.low %v2434, %v2441
        %v2443 = vcombine.low %v1750, %v1752
        %v2444 = vcombine.low %v1735, %v1749
        %v2445 = vcombine.low %v1751, %v2392
        %v2446 = vcombine.low %v1790, %v1798
        %v2448 = vunpack.c.l.s4 1966171168
        %v2449 = vunpack.c.0.s8 %v2448
        %v2450 = vlaneseq
        %v2451 = vshrl.u32 %v2450, 7
        %v2452 = vsub.s32 %v2449, %v2451
        %v2453 = vrot.slane %v2443, %v2452
        %v2455 = vunpack.c.l.s4 1966171168
        %v2456 = vunpack.c.0.s8 %v2455
        %v2457 = vlaneseq
        %v2458 = vshrl.u32 %v2457, 7
        %v2459 = vsub.s32 %v2456, %v2458
        %v2460 = vrot.slane %v2444, %v2459
        %v2462 = vunpack.c.l.s4 1966171168
        %v2463 = vunpack.c.0.s8 %v2462
        %v2464 = vlaneseq
        %v2465 = vshrl.u32 %v2464, 7
        %v2466 = vsub.s32 %v2463, %v2465
        %v2467 = vrot.slane %v2445, %v2466
        %v2469 = vunpack.c.l.s4 1966171168
        %v2470 = vunpack.c.0.s8 %v2469
        %v2471 = vlaneseq
        %v2472 = vshrl.u32 %v2471, 7
        %v2473 = vsub.s32 %v2470, %v2472
        %v2474 = vrot.slane %v2446, %v2473
        %v2475 = vcombine.low %v2453, %v2460
        %v2476 = vcombine.low %v2467, %v2474
        %v2478 = vunpack.c.l.s4 1966171168
        %v2479 = vunpack.c.0.s8 %v2478
        %v2480 = vlaneseq
        %v2481 = vshrl.u32 %v2480, 7
        %v2482 = vsub.s32 %v2479, %v2481
        %v2483 = vrot.slane %v2475, %v2482
        %v2485 = vunpack.c.l.s4 1966171168
        %v2486 = vunpack.c.0.s8 %v2485
        %v2487 = vlaneseq
        %v2488 = vshrl.u32 %v2487, 7
        %v2489 = vsub.s32 %v2486, %v2488
        %v2490 = vrot.slane %v2476, %v2489
        %v2491 = vcombine.low %v2483, %v2490
        %v2492 = vcombine.low %v1800, %v1783
        %v2493 = vcombine.low %v1797, %v1799
        %v2495 = vunpack.c.l.s4 1966171168
        %v2496 = vunpack.c.0.s8 %v2495
        %v2497 = vlaneseq
        %v2498 = vshrl.u32 %v2497, 7
        %v2499 = vsub.s32 %v2496, %v2498
        %v2500 = vrot.slane %v2492, %v2499
        %v2502 = vunpack.c.l.s4 1966171168
        %v2503 = vunpack.c.0.s8 %v2502
        %v2504 = vlaneseq
        %v2505 = vshrl.u32 %v2504, 7
        %v2506 = vsub.s32 %v2503, %v2505
        %v2507 = vrot.slane %v2493, %v2506
        %v2509 = vunpack.c.l.s4 1966171168
        %v2510 = vunpack.c.0.s8 %v2509
        %v2511 = vlaneseq
        %v2512 = vshrl.u32 %v2511, 7
        %v2513 = vsub.s32 %v2510, %v2512
        %v2514 = vrot.slane %v2393, %v2513
        %v2515 = vcombine.low %v2500, %v2507
        %v2517 = vunpack.c.l.s4 1966171168
        %v2518 = vunpack.c.0.s8 %v2517
        %v2519 = vlaneseq
        %v2520 = vshrl.u32 %v2519, 7
        %v2521 = vsub.s32 %v2518, %v2520
        %v2522 = vrot.slane %v2515, %v2521
        %v2524 = vunpack.c.l.s4 1966171168
        %v2525 = vunpack.c.0.s8 %v2524
        %v2526 = vlaneseq
        %v2527 = vshrl.u32 %v2526, 7
        %v2528 = vsub.s32 %v2525, %v2527
        %v2529 = vrot.slane %v2514, %v2528
        %v2530 = vcombine.low %v2522, %v2529
        %v2534 = vpack.c.bf16 %v2491, %v2442
        %v2535 = vpack.c.bf16 %v2530, %v2530
        %s2536 = scalar_lea.vmem [#allocation14], 32
        %v2537 = vld [vmem:[%s2536] sm:$0xf]
        %v2538 = vld [vmem:[%s2536 + $0x4] sm:$0xf]
        %v2539 = vld [vmem:[%s2536 + $0x8] sm:$0xf]
        %v2540 = vld [vmem:[%s2536 + $0xc] sm:$0xf]
        %v2545 = vunpack.c.l.b16 %v2537
        %v2546 = vunpack.c.l.b16 %v2538
        %v2547 = vunpack.c.l.b16 %v2539
        %v2548 = vunpack.c.l.b16 %v2540
        %v2549 = vpack.c.b16 %v2546, %v2545
        %v2550 = vpack.c.b16 %v2548, %v2547
        %v2554 = vsel %vm635, %v2534, 0
        %v2557 = vsel %vm635, %v2535, 0
        %2559 = vmatprep.subr.bf16.mxu0 0
        %2560 = vmatpush1.bf16.msra.mxu0 %v2549
        %2561 = vmatprep.subr.bf16.mxu0 0
        %2562 = vmatpush1.bf16.msra.mxu0 %v2550
        %2563 = vmatprep.subr.bf16.mxu0 0
        %2564 = vmatpush1.bf16.msra.mxu0 0
        %2565 = vmatprep.subr.bf16.mxu0 0
        %2566 = vmatpush1.bf16.msra.mxu0 0
        %2567 = vmatprep.subr.bf16.mxu0 0
        %2568 = vmatpush1.bf16.msra.mxu0 0
        %2569 = vmatprep.subr.bf16.mxu0 0
        %2570 = vmatpush1.bf16.msra.mxu0 0
        %2571 = vmatprep.subr.bf16.mxu0 0
        %2572 = vmatpush1.bf16.msra.mxu0 0
        %2573 = vmatprep.subr.bf16.mxu0 0
        %2574 = vmatpush1.bf16.msra.mxu0 0
        %2575 = vmatprep.subr.bf16.mxu0 0
        %2576 = vmatpush1.bf16.msra.mxu0 0
        %2577 = vmatprep.subr.bf16.mxu0 0
        %2578 = vmatpush1.bf16.msra.mxu0 0
        %2579 = vmatprep.subr.bf16.mxu0 0
        %2580 = vmatpush1.bf16.msra.mxu0 0
        %2581 = vmatprep.subr.bf16.mxu0 0
        %2582 = vmatpush1.bf16.msra.mxu0 0
        %2583 = vmatprep.subr.bf16.mxu0 0
        %2584 = vmatpush1.bf16.msra.mxu0 0
        %2585 = vmatprep.subr.bf16.mxu0 0
        %2586 = vmatpush1.bf16.msra.mxu0 0
        %2587 = vmatprep.subr.bf16.mxu0 0
        %2588 = vmatpush1.bf16.msra.mxu0 0
        %2589 = vmatprep.subr.bf16.mxu0 0
        %2590 = vmatpush1.bf16.msra.mxu0 0
        %2591 = vmatprep.mubr.bf16.mxu0 0
        %2592 = vmatmul.mubr.bf16.gmra.mrb[0].mxu0 %v2554
        %v2593 = vpop.f32.mrb[0].mxu0
        %v2594 = vadd.f32 0.0, %v2593
        %v2595 = vpop.f32.mrb[0].mxu0
        %v2596 = vpop.f32.mrb[0].mxu0
        %v2597 = vadd.f32 0.0, %v2596
        %v2598 = vpop.f32.mrb[0].mxu0
        %2599 = vmatprep.mubr.bf16.mxu0 0
        %2600 = vmatmul.mubr.bf16.gmra.mrb[0].mxu0 %v2557
        %v2601 = vpop.f32.mrb[0].mxu0
        %v2602 = vadd.f32 0.0, %v2601
        %v2603 = vpop.f32.mrb[0].mxu0
        %v2604 = vpop.f32.mrb[0].mxu0
        %v2605 = vpop.f32.mrb[0].mxu0
        %2606 = vdwg.mxu0
        %v2607 = vld [vmem:[#allocation3] sm:$0x7f]
        %v2608 = vld [vmem:[#allocation3 + $0x8] sm:$0x7f]
        %v2609 = vld [vmem:[#allocation3 + $0x10] sm:$0x7f]
        %v2613 = vcombine.high %v2594, %v2594
        %v2615 = vunpack.c.l.s4 1966171168
        %v2616 = vunpack.c.0.s8 %v2615
        %v2617 = vlaneseq
        %v2618 = vshrl.u32 %v2617, 7
        %v2619 = vsub.s32 %v2616, %v2618
        %v2620 = vrot.slane %v2594, %v2619
        %v2622 = vunpack.c.l.s4 1966171168
        %v2623 = vunpack.c.0.s8 %v2622
        %v2624 = vlaneseq
        %v2625 = vshrl.u32 %v2624, 7
        %v2626 = vsub.s32 %v2623, %v2625
        %v2627 = vrot.slane %v2613, %v2626
        %v2628 = vcombine.high %v2620, %v2620
        %v2629 = vcombine.high %v2627, %v2627
        %v2631 = vunpack.c.l.s4 1966171168
        %v2632 = vunpack.c.0.s8 %v2631
        %v2633 = vlaneseq
        %v2634 = vshrl.u32 %v2633, 7
        %v2635 = vsub.s32 %v2632, %v2634
        %v2636 = vrot.slane %v2620, %v2635
        %v2638 = vunpack.c.l.s4 1966171168
        %v2639 = vunpack.c.0.s8 %v2638
        %v2640 = vlaneseq
        %v2641 = vshrl.u32 %v2640, 7
        %v2642 = vsub.s32 %v2639, %v2641
        %v2643 = vrot.slane %v2627, %v2642
        %v2645 = vunpack.c.l.s4 1966171168
        %v2646 = vunpack.c.0.s8 %v2645
        %v2647 = vlaneseq
        %v2648 = vshrl.u32 %v2647, 7
        %v2649 = vsub.s32 %v2646, %v2648
        %v2650 = vrot.slane %v2628, %v2649
        %v2652 = vunpack.c.l.s4 1966171168
        %v2653 = vunpack.c.0.s8 %v2652
        %v2654 = vlaneseq
        %v2655 = vshrl.u32 %v2654, 7
        %v2656 = vsub.s32 %v2653, %v2655
        %v2657 = vrot.slane %v2629, %v2656
        %v2658 = vcombine.high %v2636, %v2636
        %v2659 = vcombine.high %v2643, %v2643
        %v2660 = vcombine.high %v2650, %v2650
        %v2661 = vcombine.high %v2657, %v2657
        %v2662 = vcombine.high %v2597, %v2597
        %v2664 = vunpack.c.l.s4 1966171168
        %v2665 = vunpack.c.0.s8 %v2664
        %v2666 = vlaneseq
        %v2667 = vshrl.u32 %v2666, 7
        %v2668 = vsub.s32 %v2665, %v2667
        %v2669 = vrot.slane %v2597, %v2668
        %v2671 = vunpack.c.l.s4 1966171168
        %v2672 = vunpack.c.0.s8 %v2671
        %v2673 = vlaneseq
        %v2674 = vshrl.u32 %v2673, 7
        %v2675 = vsub.s32 %v2672, %v2674
        %v2676 = vrot.slane %v2662, %v2675
        %v2677 = vcombine.high %v2669, %v2669
        %v2678 = vcombine.high %v2676, %v2676
        %v2680 = vunpack.c.l.s4 1966171168
        %v2681 = vunpack.c.0.s8 %v2680
        %v2682 = vlaneseq
        %v2683 = vshrl.u32 %v2682, 7
        %v2684 = vsub.s32 %v2681, %v2683
        %v2685 = vrot.slane %v2669, %v2684
        %v2687 = vunpack.c.l.s4 1966171168
        %v2688 = vunpack.c.0.s8 %v2687
        %v2689 = vlaneseq
        %v2690 = vshrl.u32 %v2689, 7
        %v2691 = vsub.s32 %v2688, %v2690
        %v2692 = vrot.slane %v2676, %v2691
        %v2694 = vunpack.c.l.s4 1966171168
        %v2695 = vunpack.c.0.s8 %v2694
        %v2696 = vlaneseq
        %v2697 = vshrl.u32 %v2696, 7
        %v2698 = vsub.s32 %v2695, %v2697
        %v2699 = vrot.slane %v2677, %v2698
        %v2701 = vunpack.c.l.s4 1966171168
        %v2702 = vunpack.c.0.s8 %v2701
        %v2703 = vlaneseq
        %v2704 = vshrl.u32 %v2703, 7
        %v2705 = vsub.s32 %v2702, %v2704
        %v2706 = vrot.slane %v2678, %v2705
        %v2707 = vcombine.high %v2685, %v2685
        %v2708 = vcombine.high %v2692, %v2692
        %v2709 = vcombine.high %v2699, %v2699
        %v2710 = vcombine.high %v2706, %v2706
        %v2711 = vcombine.high %v2602, %v2602
        %v2713 = vunpack.c.l.s4 1966171168
        %v2714 = vunpack.c.0.s8 %v2713
        %v2715 = vlaneseq
        %v2716 = vshrl.u32 %v2715, 7
        %v2717 = vsub.s32 %v2714, %v2716
        %v2718 = vrot.slane %v2602, %v2717
        %v2720 = vunpack.c.l.s4 1966171168
        %v2721 = vunpack.c.0.s8 %v2720
        %v2722 = vlaneseq
        %v2723 = vshrl.u32 %v2722, 7
        %v2724 = vsub.s32 %v2721, %v2723
        %v2725 = vrot.slane %v2711, %v2724
        %v2726 = vcombine.high %v2718, %v2718
        %v2728 = vunpack.c.l.s4 1966171168
        %v2729 = vunpack.c.0.s8 %v2728
        %v2730 = vlaneseq
        %v2731 = vshrl.u32 %v2730, 7
        %v2732 = vsub.s32 %v2729, %v2731
        %v2733 = vrot.slane %v2718, %v2732
        %v2735 = vunpack.c.l.s4 1966171168
        %v2736 = vunpack.c.0.s8 %v2735
        %v2737 = vlaneseq
        %v2738 = vshrl.u32 %v2737, 7
        %v2739 = vsub.s32 %v2736, %v2738
        %v2740 = vrot.slane %v2725, %v2739
        %v2742 = vunpack.c.l.s4 1966171168
        %v2743 = vunpack.c.0.s8 %v2742
        %v2744 = vlaneseq
        %v2745 = vshrl.u32 %v2744, 7
        %v2746 = vsub.s32 %v2743, %v2745
        %v2747 = vrot.slane %v2726, %v2746
        %v2748 = vcombine.high %v2733, %v2733
        %v2749 = vcombine.high %v2747, %v2747
        %v2750 = vcombine.low %v2636, %v2650
        %v2751 = vcombine.low %v2658, %v2660
        %v2752 = vcombine.low %v2643, %v2657
        %v2754 = vunpack.c.l.s4 1966171168
        %v2755 = vunpack.c.0.s8 %v2754
        %v2756 = vlaneseq
        %v2757 = vshrl.u32 %v2756, 7
        %v2758 = vsub.s32 %v2755, %v2757
        %v2759 = vrot.slane %v2750, %v2758
        %v2761 = vunpack.c.l.s4 1966171168
        %v2762 = vunpack.c.0.s8 %v2761
        %v2763 = vlaneseq
        %v2764 = vshrl.u32 %v2763, 7
        %v2765 = vsub.s32 %v2762, %v2764
        %v2766 = vrot.slane %v2751, %v2765
        %v2768 = vunpack.c.l.s4 1966171168
        %v2769 = vunpack.c.0.s8 %v2768
        %v2770 = vlaneseq
        %v2771 = vshrl.u32 %v2770, 7
        %v2772 = vsub.s32 %v2769, %v2771
        %v2773 = vrot.slane %v2752, %v2772
        %v2775 = vunpack.c.l.s4 1966171168
        %v2776 = vunpack.c.0.s8 %v2775
        %v2777 = vlaneseq
        %v2778 = vshrl.u32 %v2777, 7
        %v2779 = vsub.s32 %v2776, %v2778
        %v2780 = vrot.slane %v2659, %v2779
        %v2781 = vcombine.low %v2759, %v2766
        %v2782 = vcombine.low %v2773, %v2780
        %v2784 = vunpack.c.l.s4 1966171168
        %v2785 = vunpack.c.0.s8 %v2784
        %v2786 = vlaneseq
        %v2787 = vshrl.u32 %v2786, 7
        %v2788 = vsub.s32 %v2785, %v2787
        %v2789 = vrot.slane %v2781, %v2788
        %v2791 = vunpack.c.l.s4 1966171168
        %v2792 = vunpack.c.0.s8 %v2791
        %v2793 = vlaneseq
        %v2794 = vshrl.u32 %v2793, 7
        %v2795 = vsub.s32 %v2792, %v2794
        %v2796 = vrot.slane %v2782, %v2795
        %v2797 = vcombine.low %v2789, %v2796
        %v2798 = vcombine.low %v2661, %v2685
        %v2799 = vcombine.low %v2699, %v2707
        %v2800 = vcombine.low %v2709, %v2692
        %v2802 = vunpack.c.l.s4 1966171168
        %v2803 = vunpack.c.0.s8 %v2802
        %v2804 = vlaneseq
        %v2805 = vshrl.u32 %v2804, 7
        %v2806 = vsub.s32 %v2803, %v2805
        %v2807 = vrot.slane %v2798, %v2806
        %v2809 = vunpack.c.l.s4 1966171168
        %v2810 = vunpack.c.0.s8 %v2809
        %v2811 = vlaneseq
        %v2812 = vshrl.u32 %v2811, 7
        %v2813 = vsub.s32 %v2810, %v2812
        %v2814 = vrot.slane %v2799, %v2813
        %v2816 = vunpack.c.l.s4 1966171168
        %v2817 = vunpack.c.0.s8 %v2816
        %v2818 = vlaneseq
        %v2819 = vshrl.u32 %v2818, 7
        %v2820 = vsub.s32 %v2817, %v2819
        %v2821 = vrot.slane %v2800, %v2820
        %v2823 = vunpack.c.l.s4 1966171168
        %v2824 = vunpack.c.0.s8 %v2823
        %v2825 = vlaneseq
        %v2826 = vshrl.u32 %v2825, 7
        %v2827 = vsub.s32 %v2824, %v2826
        %v2828 = vrot.slane %v2706, %v2827
        %v2829 = vcombine.low %v2807, %v2814
        %v2830 = vcombine.low %v2821, %v2828
        %v2832 = vunpack.c.l.s4 1966171168
        %v2833 = vunpack.c.0.s8 %v2832
        %v2834 = vlaneseq
        %v2835 = vshrl.u32 %v2834, 7
        %v2836 = vsub.s32 %v2833, %v2835
        %v2837 = vrot.slane %v2829, %v2836
        %v2839 = vunpack.c.l.s4 1966171168
        %v2840 = vunpack.c.0.s8 %v2839
        %v2841 = vlaneseq
        %v2842 = vshrl.u32 %v2841, 7
        %v2843 = vsub.s32 %v2840, %v2842
        %v2844 = vrot.slane %v2830, %v2843
        %v2845 = vcombine.low %v2837, %v2844
        %v2846 = vcombine.low %v2708, %v2710
        %v2847 = vcombine.low %v2733, %v2747
        %v2848 = vcombine.low %v2748, %v2749
        %v2850 = vunpack.c.l.s4 1966171168
        %v2851 = vunpack.c.0.s8 %v2850
        %v2852 = vlaneseq
        %v2853 = vshrl.u32 %v2852, 7
        %v2854 = vsub.s32 %v2851, %v2853
        %v2855 = vrot.slane %v2846, %v2854
        %v2857 = vunpack.c.l.s4 1966171168
        %v2858 = vunpack.c.0.s8 %v2857
        %v2859 = vlaneseq
        %v2860 = vshrl.u32 %v2859, 7
        %v2861 = vsub.s32 %v2858, %v2860
        %v2862 = vrot.slane %v2847, %v2861
        %v2864 = vunpack.c.l.s4 1966171168
        %v2865 = vunpack.c.0.s8 %v2864
        %v2866 = vlaneseq
        %v2867 = vshrl.u32 %v2866, 7
        %v2868 = vsub.s32 %v2865, %v2867
        %v2869 = vrot.slane %v2848, %v2868
        %v2871 = vunpack.c.l.s4 1966171168
        %v2872 = vunpack.c.0.s8 %v2871
        %v2873 = vlaneseq
        %v2874 = vshrl.u32 %v2873, 7
        %v2875 = vsub.s32 %v2872, %v2874
        %v2876 = vrot.slane %v2740, %v2875
        %v2877 = vcombine.low %v2855, %v2862
        %v2878 = vcombine.low %v2869, %v2876
        %v2880 = vunpack.c.l.s4 1966171168
        %v2881 = vunpack.c.0.s8 %v2880
        %v2882 = vlaneseq
        %v2883 = vshrl.u32 %v2882, 7
        %v2884 = vsub.s32 %v2881, %v2883
        %v2885 = vrot.slane %v2877, %v2884
        %v2887 = vunpack.c.l.s4 1966171168
        %v2888 = vunpack.c.0.s8 %v2887
        %v2889 = vlaneseq
        %v2890 = vshrl.u32 %v2889, 7
        %v2891 = vsub.s32 %v2888, %v2890
        %v2892 = vrot.slane %v2878, %v2891
        %v2893 = vcombine.low %v2885, %v2892
        %v2897 = vadd.f32 %v2607, %v2797
        %v2898 = vadd.f32 %v2608, %v2845
        %v2899 = vadd.f32 %v2609, %v2893
        %2900 = vst.msk [vmem:[#allocation3] sm:$0x7f] %vm1558, %v2897
        %2901 = vst.msk [vmem:[#allocation3 + $0x8] sm:$0x7f] %vm1558, %v2898
        %2902 = vst.msk [vmem:[#allocation3 + $0x10] sm:$0x7f] %vm1558, %v2899
        %v2903 = vpack.c.bf16 %v625, %v624
        %v2904 = vpack.c.bf16 %v626, %v626
        %v2905 = vld [vmem:[%s8] sm:$0xf]
        %v2906 = vld [vmem:[%s8 + $0x4] sm:$0xf]
        %v2907 = vld [vmem:[%s8 + $0x8] sm:$0xf]
        %v2908 = vld [vmem:[%s8 + $0xc] sm:$0xf]
        %v2913 = vunpack.c.l.b16 %v2905
        %v2914 = vunpack.c.l.b16 %v2906
        %v2915 = vunpack.c.l.b16 %v2907
        %v2916 = vunpack.c.l.b16 %v2908
        %v2917 = vpack.c.b16 %v2914, %v2913
        %v2918 = vpack.c.b16 %v2916, %v2915
        %v2922 = vsel %vm635, %v2903, 0
        %v2925 = vsel %vm635, %v2904, 0
        %2927 = vmatprep.subr.bf16.mxu0 0
        %2928 = vmatpush1.bf16.msra.mxu0 %v2917
        %2929 = vmatprep.subr.bf16.mxu0 0
        %2930 = vmatpush1.bf16.msra.mxu0 %v2918
        %2931 = vmatprep.subr.bf16.mxu0 0
        %2932 = vmatpush1.bf16.msra.mxu0 0
        %2933 = vmatprep.subr.bf16.mxu0 0
        %2934 = vmatpush1.bf16.msra.mxu0 0
        %2935 = vmatprep.subr.bf16.mxu0 0
        %2936 = vmatpush1.bf16.msra.mxu0 0
        %2937 = vmatprep.subr.bf16.mxu0 0
        %2938 = vmatpush1.bf16.msra.mxu0 0
        %2939 = vmatprep.subr.bf16.mxu0 0
        %2940 = vmatpush1.bf16.msra.mxu0 0
        %2941 = vmatprep.subr.bf16.mxu0 0
        %2942 = vmatpush1.bf16.msra.mxu0 0
        %2943 = vmatprep.subr.bf16.mxu0 0
        %2944 = vmatpush1.bf16.msra.mxu0 0
        %2945 = vmatprep.subr.bf16.mxu0 0
        %2946 = vmatpush1.bf16.msra.mxu0 0
        %2947 = vmatprep.subr.bf16.mxu0 0
        %2948 = vmatpush1.bf16.msra.mxu0 0
        %2949 = vmatprep.subr.bf16.mxu0 0
        %2950 = vmatpush1.bf16.msra.mxu0 0
        %2951 = vmatprep.subr.bf16.mxu0 0
        %2952 = vmatpush1.bf16.msra.mxu0 0
        %2953 = vmatprep.subr.bf16.mxu0 0
        %2954 = vmatpush1.bf16.msra.mxu0 0
        %2955 = vmatprep.subr.bf16.mxu0 0
        %2956 = vmatpush1.bf16.msra.mxu0 0
        %2957 = vmatprep.subr.bf16.mxu0 0
        %2958 = vmatpush1.bf16.msra.mxu0 0
        %2959 = vmatprep.mubr.bf16.mxu0 0
        %2960 = vmatmul.mubr.bf16.gmra.mrb[0].mxu0 %v2922
        %v2961 = vpop.f32.mrb[0].mxu0
        %v2962 = vadd.f32 0.0, %v2961
        %v2963 = vpop.f32.mrb[0].mxu0
        %v2964 = vpop.f32.mrb[0].mxu0
        %v2965 = vadd.f32 0.0, %v2964
        %v2966 = vpop.f32.mrb[0].mxu0
        %2967 = vmatprep.mubr.bf16.mxu0 0
        %2968 = vmatmul.mubr.bf16.gmra.mrb[0].mxu0 %v2925
        %v2969 = vpop.f32.mrb[0].mxu0
        %v2970 = vadd.f32 0.0, %v2969
        %v2971 = vpop.f32.mrb[0].mxu0
        %v2972 = vpop.f32.mrb[0].mxu0
        %v2973 = vpop.f32.mrb[0].mxu0
        %2974 = vdwg.mxu0
        %v2975 = vld [vmem:[#allocation16] sm:$0x1]
        %v2977 = vlaneseq
        %v2978 = vshrl.u32 %v2977, 7
        %v2979 = vsub.s32 0, %v2978
        %v2980 = vrot.slane %v2975, %v2979
        %v2982 = vadd.f32 %v2962, %v2980
        %v2983 = vadd.f32 %v2965, %v2980
        %v2984 = vadd.f32 %v2970, %v2980
        %v2985 = vpack.c.bf16 %v2982, %v2982
        %v2986 = vpack.c.bf16 %v2983, %v2983
        %v2987 = vpack.c.bf16 %v2984, %v2984
        %v2988 = vld [vmem:[#allocation2] sm:$0xff]
        %v2989 = vld [vmem:[#allocation2 + $0x8] sm:$0xff]
        %v2990 = vld [vmem:[#allocation2 + $0x10] sm:$0xff]
        %v2991 = vpack.c.bf16 %v2988, %v2988
        %v2992 = vpack.c.bf16 %v2989, %v2989
        %v2993 = vpack.c.bf16 %v2990, %v2990
        %v2994 = vld [vmem:[#allocation3] sm:$0xff]
        %v2995 = vld [vmem:[#allocation3 + $0x8] sm:$0xff]
        %v2996 = vld [vmem:[#allocation3 + $0x10] sm:$0xff]
        %2997 = vxpose.xlu0.b32.start [1/16] %v2994, 128
        %2998 = vxpose.xlu0.b32.cont [2/16] 0.0, 128
        %2999 = vxpose.xlu0.b32.cont [3/16] 0.0, 128
        %3000 = vxpose.xlu0.b32.cont [4/16] 0.0, 128
        %3001 = vxpose.xlu0.b32.cont [5/16] 0.0, 128
        %3002 = vxpose.xlu0.b32.cont [6/16] 0.0, 128
        %3003 = vxpose.xlu0.b32.cont [7/16] 0.0, 128
        %3004 = vxpose.xlu0.b32.cont [8/16] 0.0, 128
        %3005 = vxpose.xlu0.b32.cont [9/16] 0.0, 128
        %3006 = vxpose.xlu0.b32.cont [10/16] 0.0, 128
        %3007 = vxpose.xlu0.b32.cont [11/16] 0.0, 128
        %3008 = vxpose.xlu0.b32.cont [12/16] 0.0, 128
        %3009 = vxpose.xlu0.b32.cont [13/16] 0.0, 128
        %3010 = vxpose.xlu0.b32.cont [14/16] 0.0, 128
        %3011 = vxpose.xlu0.b32.cont [15/16] 0.0, 128
        %3012 = vxpose.xlu0.b32.end [16/16] 0.0, 128
        %v3013 = vpop.trf.xlu0
        %v3014 = vpop.trf.xlu0
        %v3015 = vpop.trf.xlu0
        %v3016 = vpop.trf.xlu0
        %v3017 = vpop.trf.xlu0
        %v3018 = vpop.trf.xlu0
        %v3019 = vpop.trf.xlu0
        %v3020 = vpop.trf.xlu0
        %v3021 = vpop.trf.xlu0
        %v3022 = vpop.trf.xlu0
        %v3023 = vpop.trf.xlu0
        %v3024 = vpop.trf.xlu0
        %v3025 = vpop.trf.xlu0
        %v3026 = vpop.trf.xlu0
        %v3027 = vpop.trf.xlu0
        %v3028 = vpop.trf.xlu0
        %3029 = vxpose.xlu0.b32.start [1/16] %v2995, 128
        %3030 = vxpose.xlu0.b32.cont [2/16] 0.0, 128
        %3031 = vxpose.xlu0.b32.cont [3/16] 0.0, 128
        %3032 = vxpose.xlu0.b32.cont [4/16] 0.0, 128
        %3033 = vxpose.xlu0.b32.cont [5/16] 0.0, 128
        %3034 = vxpose.xlu0.b32.cont [6/16] 0.0, 128
        %3035 = vxpose.xlu0.b32.cont [7/16] 0.0, 128
        %3036 = vxpose.xlu0.b32.cont [8/16] 0.0, 128
        %3037 = vxpose.xlu0.b32.cont [9/16] 0.0, 128
        %3038 = vxpose.xlu0.b32.cont [10/16] 0.0, 128
        %3039 = vxpose.xlu0.b32.cont [11/16] 0.0, 128
        %3040 = vxpose.xlu0.b32.cont [12/16] 0.0, 128
        %3041 = vxpose.xlu0.b32.cont [13/16] 0.0, 128
        %3042 = vxpose.xlu0.b32.cont [14/16] 0.0, 128
        %3043 = vxpose.xlu0.b32.cont [15/16] 0.0, 128
        %3044 = vxpose.xlu0.b32.end [16/16] 0.0, 128
        %v3045 = vpop.trf.xlu0
        %v3046 = vpop.trf.xlu0
        %v3047 = vpop.trf.xlu0
        %v3048 = vpop.trf.xlu0
        %v3049 = vpop.trf.xlu0
        %v3050 = vpop.trf.xlu0
        %v3051 = vpop.trf.xlu0
        %v3052 = vpop.trf.xlu0
        %v3053 = vpop.trf.xlu0
        %v3054 = vpop.trf.xlu0
        %v3055 = vpop.trf.xlu0
        %v3056 = vpop.trf.xlu0
        %v3057 = vpop.trf.xlu0
        %v3058 = vpop.trf.xlu0
        %v3059 = vpop.trf.xlu0
        %v3060 = vpop.trf.xlu0
        %3061 = vxpose.xlu0.b32.start [1/16] %v2996, 128
        %3062 = vxpose.xlu0.b32.cont [2/16] 0.0, 128
        %3063 = vxpose.xlu0.b32.cont [3/16] 0.0, 128
        %3064 = vxpose.xlu0.b32.cont [4/16] 0.0, 128
        %3065 = vxpose.xlu0.b32.cont [5/16] 0.0, 128
        %3066 = vxpose.xlu0.b32.cont [6/16] 0.0, 128
        %3067 = vxpose.xlu0.b32.cont [7/16] 0.0, 128
        %3068 = vxpose.xlu0.b32.cont [8/16] 0.0, 128
        %3069 = vxpose.xlu0.b32.cont [9/16] 0.0, 128
        %3070 = vxpose.xlu0.b32.cont [10/16] 0.0, 128
        %3071 = vxpose.xlu0.b32.cont [11/16] 0.0, 128
        %3072 = vxpose.xlu0.b32.cont [12/16] 0.0, 128
        %3073 = vxpose.xlu0.b32.cont [13/16] 0.0, 128
        %3074 = vxpose.xlu0.b32.cont [14/16] 0.0, 128
        %3075 = vxpose.xlu0.b32.cont [15/16] 0.0, 128
        %3076 = vxpose.xlu0.b32.end [16/16] 0.0, 128
        %v3077 = vpop.trf.xlu0
        %v3078 = vpop.trf.xlu0
        %v3079 = vpop.trf.xlu0
        %v3080 = vpop.trf.xlu0
        %v3081 = vpop.trf.xlu0
        %v3082 = vpop.trf.xlu0
        %v3083 = vpop.trf.xlu0
        %v3084 = vpop.trf.xlu0
        %v3085 = vpop.trf.xlu0
        %v3086 = vpop.trf.xlu0
        %v3087 = vpop.trf.xlu0
        %v3088 = vpop.trf.xlu0
        %v3089 = vpop.trf.xlu0
        %v3090 = vpop.trf.xlu0
        %v3091 = vpop.trf.xlu0
        %v3092 = vpop.trf.xlu0
        %v3093 = vpack.c.bf16 %v3014, %v3013
        %v3094 = vpack.c.bf16 %v3016, %v3015
        %v3095 = vpack.c.bf16 %v3046, %v3045
        %v3096 = vpack.c.bf16 %v3048, %v3047
        %v3097 = vpack.c.bf16 %v3078, %v3077
        %v3098 = vpack.c.bf16 %v3080, %v3079
        %vm3099 = vcmask 64512
        %v3101 = vsel %vm3099, %v2991, 0
        %vm3103 = vcmask 1043456
        %v3105 = vsel %vm3103, %v3093, 0
        %3107 = vmatprep.subr.bf16.mxu0 0
        %3108 = vmatpush1.bf16.msra.mxu0 %v3105
        %3109 = vmatprep.subr.bf16.mxu0 0
        %3110 = vmatpush1.bf16.msra.mxu0 0
        %3111 = vmatprep.subr.bf16.mxu0 0
        %3112 = vmatpush1.bf16.msra.mxu0 0
        %3113 = vmatprep.subr.bf16.mxu0 0
        %3114 = vmatpush1.bf16.msra.mxu0 0
        %3115 = vmatprep.subr.bf16.mxu0 0
        %3116 = vmatpush1.bf16.msra.mxu0 0
        %3117 = vmatprep.subr.bf16.mxu0 0
        %3118 = vmatpush1.bf16.msra.mxu0 0
        %3119 = vmatprep.subr.bf16.mxu0 0
        %3120 = vmatpush1.bf16.msra.mxu0 0
        %3121 = vmatprep.subr.bf16.mxu0 0
        %3122 = vmatpush1.bf16.msra.mxu0 0
        %3123 = vmatprep.subr.bf16.mxu0 0
        %3124 = vmatpush1.bf16.msra.mxu0 0
        %3125 = vmatprep.subr.bf16.mxu0 0
        %3126 = vmatpush1.bf16.msra.mxu0 0
        %3127 = vmatprep.subr.bf16.mxu0 0
        %3128 = vmatpush1.bf16.msra.mxu0 0
        %3129 = vmatprep.subr.bf16.mxu0 0
        %3130 = vmatpush1.bf16.msra.mxu0 0
        %3131 = vmatprep.subr.bf16.mxu0 0
        %3132 = vmatpush1.bf16.msra.mxu0 0
        %3133 = vmatprep.subr.bf16.mxu0 0
        %3134 = vmatpush1.bf16.msra.mxu0 0
        %3135 = vmatprep.subr.bf16.mxu0 0
        %3136 = vmatpush1.bf16.msra.mxu0 0
        %3137 = vmatprep.subr.bf16.mxu0 0
        %3138 = vmatpush1.bf16.msra.mxu0 0
        %3139 = vmatprep.mubr.bf16.mxu0 0
        %3140 = vmatmul.mubr.bf16.gmra.mrb[0].mxu0 %v3101
        %v3141 = vpop.f32.mrb[0].mxu0
        %v3142 = vadd.f32 %v627, %v3141
        %v3143 = vpop.f32.mrb[0].mxu0
        %v3144 = vpop.f32.mrb[0].mxu0
        %v3145 = vpop.f32.mrb[0].mxu0
        %3146 = vdwg.mxu0
        %v3148 = vsel %vm3099, %v2992, 0
        %v3151 = vsel %vm3103, %v3095, 0
        %3153 = vmatprep.subr.bf16.mxu0 0
        %3154 = vmatpush1.bf16.msra.mxu0 %v3151
        %3155 = vmatprep.subr.bf16.mxu0 0
        %3156 = vmatpush1.bf16.msra.mxu0 0
        %3157 = vmatprep.subr.bf16.mxu0 0
        %3158 = vmatpush1.bf16.msra.mxu0 0
        %3159 = vmatprep.subr.bf16.mxu0 0
        %3160 = vmatpush1.bf16.msra.mxu0 0
        %3161 = vmatprep.subr.bf16.mxu0 0
        %3162 = vmatpush1.bf16.msra.mxu0 0
        %3163 = vmatprep.subr.bf16.mxu0 0
        %3164 = vmatpush1.bf16.msra.mxu0 0
        %3165 = vmatprep.subr.bf16.mxu0 0
        %3166 = vmatpush1.bf16.msra.mxu0 0
        %3167 = vmatprep.subr.bf16.mxu0 0
        %3168 = vmatpush1.bf16.msra.mxu0 0
        %3169 = vmatprep.subr.bf16.mxu0 0
        %3170 = vmatpush1.bf16.msra.mxu0 0
        %3171 = vmatprep.subr.bf16.mxu0 0
        %3172 = vmatpush1.bf16.msra.mxu0 0
        %3173 = vmatprep.subr.bf16.mxu0 0
        %3174 = vmatpush1.bf16.msra.mxu0 0
        %3175 = vmatprep.subr.bf16.mxu0 0
        %3176 = vmatpush1.bf16.msra.mxu0 0
        %3177 = vmatprep.subr.bf16.mxu0 0
        %3178 = vmatpush1.bf16.msra.mxu0 0
        %3179 = vmatprep.subr.bf16.mxu0 0
        %3180 = vmatpush1.bf16.msra.mxu0 0
        %3181 = vmatprep.subr.bf16.mxu0 0
        %3182 = vmatpush1.bf16.msra.mxu0 0
        %3183 = vmatprep.subr.bf16.mxu0 0
        %3184 = vmatpush1.bf16.msra.mxu0 0
        %3185 = vmatprep.mubr.bf16.mxu0 0
        %3186 = vmatmul.mubr.bf16.gmra.mrb[0].mxu0 %v3148
        %v3187 = vpop.f32.mrb[0].mxu0
        %v3188 = vadd.f32 %v627, %v3187
        %v3189 = vpop.f32.mrb[0].mxu0
        %v3190 = vpop.f32.mrb[0].mxu0
        %v3191 = vpop.f32.mrb[0].mxu0
        %3192 = vdwg.mxu0
        %v3194 = vsel %vm3099, %v2993, 0
        %v3197 = vsel %vm3103, %v3097, 0
        %3199 = vmatprep.subr.bf16.mxu0 0
        %3200 = vmatpush1.bf16.msra.mxu0 %v3197
        %3201 = vmatprep.subr.bf16.mxu0 0
        %3202 = vmatpush1.bf16.msra.mxu0 0
        %3203 = vmatprep.subr.bf16.mxu0 0
        %3204 = vmatpush1.bf16.msra.mxu0 0
        %3205 = vmatprep.subr.bf16.mxu0 0
        %3206 = vmatpush1.bf16.msra.mxu0 0
        %3207 = vmatprep.subr.bf16.mxu0 0
        %3208 = vmatpush1.bf16.msra.mxu0 0
        %3209 = vmatprep.subr.bf16.mxu0 0
        %3210 = vmatpush1.bf16.msra.mxu0 0
        %3211 = vmatprep.subr.bf16.mxu0 0
        %3212 = vmatpush1.bf16.msra.mxu0 0
        %3213 = vmatprep.subr.bf16.mxu0 0
        %3214 = vmatpush1.bf16.msra.mxu0 0
        %3215 = vmatprep.subr.bf16.mxu0 0
        %3216 = vmatpush1.bf16.msra.mxu0 0
        %3217 = vmatprep.subr.bf16.mxu0 0
        %3218 = vmatpush1.bf16.msra.mxu0 0
        %3219 = vmatprep.subr.bf16.mxu0 0
        %3220 = vmatpush1.bf16.msra.mxu0 0
        %3221 = vmatprep.subr.bf16.mxu0 0
        %3222 = vmatpush1.bf16.msra.mxu0 0
        %3223 = vmatprep.subr.bf16.mxu0 0
        %3224 = vmatpush1.bf16.msra.mxu0 0
        %3225 = vmatprep.subr.bf16.mxu0 0
        %3226 = vmatpush1.bf16.msra.mxu0 0
        %3227 = vmatprep.subr.bf16.mxu0 0
        %3228 = vmatpush1.bf16.msra.mxu0 0
        %3229 = vmatprep.subr.bf16.mxu0 0
        %3230 = vmatpush1.bf16.msra.mxu0 0
        %3231 = vmatprep.mubr.bf16.mxu0 0
        %3232 = vmatmul.mubr.bf16.gmra.mrb[0].mxu0 %v3194
        %v3233 = vpop.f32.mrb[0].mxu0
        %v3234 = vadd.f32 %v627, %v3233
        %v3235 = vpop.f32.mrb[0].mxu0
        %v3236 = vpop.f32.mrb[0].mxu0
        %v3237 = vpop.f32.mrb[0].mxu0
        %3238 = vdwg.mxu0
        %v3239 = vsel %vm3099, %v3142, -inf
        %3240 = vmax.xlane.f32.xlu0 %v3239
        %v3241 = vpop.xlane.xlu0 %3240
        %v3242 = vsel %vm3099, %v3188, -inf
        %3243 = vmax.xlane.f32.xlu0 %v3242
        %v3244 = vpop.xlane.xlu0 %3243
        %v3245 = vsel %vm3099, %v3234, -inf
        %3246 = vmax.xlane.f32.xlu0 %v3245
        %v3247 = vpop.xlane.xlu0 %3246
        %v3248 = vsub.f32 %v3142, %v3241
        %v3249 = vsub.f32 %v3188, %v3244
        %v3250 = vsub.f32 %v3234, %v3247
        %v3251 = vmul.f32 %v3248, 1.442695
        %v3252 = vpow.pop %v3251
        %v3253 = vmul.f32 %v3249, 1.442695
        %v3254 = vpow.pop %v3253
        %v3255 = vmul.f32 %v3250, 1.442695
        %v3256 = vpow.pop %v3255
        %v3257 = vsel %vm3099, %v3252, 0.0
        %3258 = vadd.xlane.f32.xlu0 %v3257
        %v3259 = vpop.xlane.xlu0 %3258
        %v3260 = vsel %vm3099, %v3254, 0.0
        %3261 = vadd.xlane.f32.xlu0 %v3260
        %v3262 = vpop.xlane.xlu0 %3261
        %v3263 = vsel %vm3099, %v3256, 0.0
        %3264 = vadd.xlane.f32.xlu0 %v3263
        %v3265 = vpop.xlane.xlu0 %3264
        %v3266 = vrcp.pop %v3259
        %v3267 = vrcp.pop %v3262
        %v3268 = vrcp.pop %v3265
        %v3269 = vmul.f32 %v3252, %v3266
        %v3270 = vmul.f32 %v3254, %v3267
        %v3271 = vmul.f32 %v3256, %v3268
        %v3272 = vpack.c.bf16 %v3269, %v3269
        %v3273 = vpack.c.bf16 %v3270, %v3270
        %v3274 = vpack.c.bf16 %v3271, %v3271
        %v3276 = vsel %vm3099, %v3272, 0
        %v3279 = vsel %vm3103, %v2985, 0
        %3281 = vmatprep.subr.bf16.mxu0 0
        %3282 = vmatpush1.bf16.msra.mxu0 %v3279
        %3283 = vmatprep.subr.bf16.mxu0 0
        %3284 = vmatpush1.bf16.msra.mxu0 0
        %3285 = vmatprep.subr.bf16.mxu0 0
        %3286 = vmatpush1.bf16.msra.mxu0 0
        %3287 = vmatprep.subr.bf16.mxu0 0
        %3288 = vmatpush1.bf16.msra.mxu0 0
        %3289 = vmatprep.subr.bf16.mxu0 0
        %3290 = vmatpush1.bf16.msra.mxu0 0
        %3291 = vmatprep.subr.bf16.mxu0 0
        %3292 = vmatpush1.bf16.msra.mxu0 0
        %3293 = vmatprep.subr.bf16.mxu0 0
        %3294 = vmatpush1.bf16.msra.mxu0 0
        %3295 = vmatprep.subr.bf16.mxu0 0
        %3296 = vmatpush1.bf16.msra.mxu0 0
        %3297 = vmatprep.subr.bf16.mxu0 0
        %3298 = vmatpush1.bf16.msra.mxu0 0
        %3299 = vmatprep.subr.bf16.mxu0 0
        %3300 = vmatpush1.bf16.msra.mxu0 0
        %3301 = vmatprep.subr.bf16.mxu0 0
        %3302 = vmatpush1.bf16.msra.mxu0 0
        %3303 = vmatprep.subr.bf16.mxu0 0
        %3304 = vmatpush1.bf16.msra.mxu0 0
        %3305 = vmatprep.subr.bf16.mxu0 0
        %3306 = vmatpush1.bf16.msra.mxu0 0
        %3307 = vmatprep.subr.bf16.mxu0 0
        %3308 = vmatpush1.bf16.msra.mxu0 0
        %3309 = vmatprep.subr.bf16.mxu0 0
        %3310 = vmatpush1.bf16.msra.mxu0 0
        %3311 = vmatprep.subr.bf16.mxu0 0
        %3312 = vmatpush1.bf16.msra.mxu0 0
        %3313 = vmatprep.mubr.bf16.mxu0 0
        %3314 = vmatmul.mubr.bf16.gmra.mrb[0].mxu0 %v3276
        %v3315 = vpop.f32.mrb[0].mxu0
        %v3316 = vadd.f32 0.0, %v3315
        %v3317 = vpop.f32.mrb[0].mxu0
        %v3318 = vpop.f32.mrb[0].mxu0
        %v3319 = vpop.f32.mrb[0].mxu0
        %3320 = vdwg.mxu0
        %v3322 = vsel %vm3099, %v3273, 0
        %v3325 = vsel %vm3103, %v2986, 0
        %3327 = vmatprep.subr.bf16.mxu0 0
        %3328 = vmatpush1.bf16.msra.mxu0 %v3325
        %3329 = vmatprep.subr.bf16.mxu0 0
        %3330 = vmatpush1.bf16.msra.mxu0 0
        %3331 = vmatprep.subr.bf16.mxu0 0
        %3332 = vmatpush1.bf16.msra.mxu0 0
        %3333 = vmatprep.subr.bf16.mxu0 0
        %3334 = vmatpush1.bf16.msra.mxu0 0
        %3335 = vmatprep.subr.bf16.mxu0 0
        %3336 = vmatpush1.bf16.msra.mxu0 0
        %3337 = vmatprep.subr.bf16.mxu0 0
        %3338 = vmatpush1.bf16.msra.mxu0 0
        %3339 = vmatprep.subr.bf16.mxu0 0
        %3340 = vmatpush1.bf16.msra.mxu0 0
        %3341 = vmatprep.subr.bf16.mxu0 0
        %3342 = vmatpush1.bf16.msra.mxu0 0
        %3343 = vmatprep.subr.bf16.mxu0 0
        %3344 = vmatpush1.bf16.msra.mxu0 0
        %3345 = vmatprep.subr.bf16.mxu0 0
        %3346 = vmatpush1.bf16.msra.mxu0 0
        %3347 = vmatprep.subr.bf16.mxu0 0
        %3348 = vmatpush1.bf16.msra.mxu0 0
        %3349 = vmatprep.subr.bf16.mxu0 0
        %3350 = vmatpush1.bf16.msra.mxu0 0
        %3351 = vmatprep.subr.bf16.mxu0 0
        %3352 = vmatpush1.bf16.msra.mxu0 0
        %3353 = vmatprep.subr.bf16.mxu0 0
        %3354 = vmatpush1.bf16.msra.mxu0 0
        %3355 = vmatprep.subr.bf16.mxu0 0
        %3356 = vmatpush1.bf16.msra.mxu0 0
        %3357 = vmatprep.subr.bf16.mxu0 0
        %3358 = vmatpush1.bf16.msra.mxu0 0
        %3359 = vmatprep.mubr.bf16.mxu0 0
        %3360 = vmatmul.mubr.bf16.gmra.mrb[0].mxu0 %v3322
        %v3361 = vpop.f32.mrb[0].mxu0
        %v3362 = vadd.f32 0.0, %v3361
        %v3363 = vpop.f32.mrb[0].mxu0
        %v3364 = vpop.f32.mrb[0].mxu0
        %v3365 = vpop.f32.mrb[0].mxu0
        %3366 = vdwg.mxu0
        %v3368 = vsel %vm3099, %v3274, 0
        %v3371 = vsel %vm3103, %v2987, 0
        %3373 = vmatprep.subr.bf16.mxu0 0
        %3374 = vmatpush1.bf16.msra.mxu0 %v3371
        %3375 = vmatprep.subr.bf16.mxu0 0
        %3376 = vmatpush1.bf16.msra.mxu0 0
        %3377 = vmatprep.subr.bf16.mxu0 0
        %3378 = vmatpush1.bf16.msra.mxu0 0
        %3379 = vmatprep.subr.bf16.mxu0 0
        %3380 = vmatpush1.bf16.msra.mxu0 0
        %3381 = vmatprep.subr.bf16.mxu0 0
        %3382 = vmatpush1.bf16.msra.mxu0 0
        %3383 = vmatprep.subr.bf16.mxu0 0
        %3384 = vmatpush1.bf16.msra.mxu0 0
        %3385 = vmatprep.subr.bf16.mxu0 0
        %3386 = vmatpush1.bf16.msra.mxu0 0
        %3387 = vmatprep.subr.bf16.mxu0 0
        %3388 = vmatpush1.bf16.msra.mxu0 0
        %3389 = vmatprep.subr.bf16.mxu0 0
        %3390 = vmatpush1.bf16.msra.mxu0 0
        %3391 = vmatprep.subr.bf16.mxu0 0
        %3392 = vmatpush1.bf16.msra.mxu0 0
        %3393 = vmatprep.subr.bf16.mxu0 0
        %3394 = vmatpush1.bf16.msra.mxu0 0
        %3395 = vmatprep.subr.bf16.mxu0 0
        %3396 = vmatpush1.bf16.msra.mxu0 0
        %3397 = vmatprep.subr.bf16.mxu0 0
        %3398 = vmatpush1.bf16.msra.mxu0 0
        %3399 = vmatprep.subr.bf16.mxu0 0
        %3400 = vmatpush1.bf16.msra.mxu0 0
        %3401 = vmatprep.subr.bf16.mxu0 0
        %3402 = vmatpush1.bf16.msra.mxu0 0
        %3403 = vmatprep.subr.bf16.mxu0 0
        %3404 = vmatpush1.bf16.msra.mxu0 0
        %3405 = vmatprep.mubr.bf16.mxu0 0
        %3406 = vmatmul.mubr.bf16.gmra.mrb[0].mxu0 %v3368
        %v3407 = vpop.f32.mrb[0].mxu0
        %v3408 = vadd.f32 0.0, %v3407
        %v3409 = vpop.f32.mrb[0].mxu0
        %v3410 = vpop.f32.mrb[0].mxu0
        %v3411 = vpop.f32.mrb[0].mxu0
        %3412 = vdwg.mxu0
        %3413 = vst.msk [vmem:[#allocation4] sm:$0xff] %vm3099, %v3316
        %3414 = vst.msk [vmem:[#allocation4 + $0x8] sm:$0xff] %vm3099, %v3362
        %3415 = vst.msk [vmem:[#allocation4 + $0x10] sm:$0xff] %vm3099, %v3408
        %3417 = vrot.lane.b32.xlu0 %v2991, 120
        %v3418 = vpop.permute.xlu0 %3417
        %v3420 = vrot.slane %v3093, 4
        %v3422 = vsel %vm3099, %v3418, 0
        %v3425 = vsel %vm3103, %v3420, 0
        %3427 = vmatprep.subr.bf16.mxu0 0
        %3428 = vmatpush1.bf16.msra.mxu0 %v3425
        %3429 = vmatprep.subr.bf16.mxu0 0
        %3430 = vmatpush1.bf16.msra.mxu0 0
        %3431 = vmatprep.subr.bf16.mxu0 0
        %3432 = vmatpush1.bf16.msra.mxu0 0
        %3433 = vmatprep.subr.bf16.mxu0 0
        %3434 = vmatpush1.bf16.msra.mxu0 0
        %3435 = vmatprep.subr.bf16.mxu0 0
        %3436 = vmatpush1.bf16.msra.mxu0 0
        %3437 = vmatprep.subr.bf16.mxu0 0
        %3438 = vmatpush1.bf16.msra.mxu0 0
        %3439 = vmatprep.subr.bf16.mxu0 0
        %3440 = vmatpush1.bf16.msra.mxu0 0
        %3441 = vmatprep.subr.bf16.mxu0 0
        %3442 = vmatpush1.bf16.msra.mxu0 0
        %3443 = vmatprep.subr.bf16.mxu0 0
        %3444 = vmatpush1.bf16.msra.mxu0 0
        %3445 = vmatprep.subr.bf16.mxu0 0
        %3446 = vmatpush1.bf16.msra.mxu0 0
        %3447 = vmatprep.subr.bf16.mxu0 0
        %3448 = vmatpush1.bf16.msra.mxu0 0
        %3449 = vmatprep.subr.bf16.mxu0 0
        %3450 = vmatpush1.bf16.msra.mxu0 0
        %3451 = vmatprep.subr.bf16.mxu0 0
        %3452 = vmatpush1.bf16.msra.mxu0 0
        %3453 = vmatprep.subr.bf16.mxu0 0
        %3454 = vmatpush1.bf16.msra.mxu0 0
        %3455 = vmatprep.subr.bf16.mxu0 0
        %3456 = vmatpush1.bf16.msra.mxu0 0
        %3457 = vmatprep.subr.bf16.mxu0 0
        %3458 = vmatpush1.bf16.msra.mxu0 0
        %3459 = vmatprep.mubr.bf16.mxu0 0
        %3460 = vmatmul.mubr.bf16.gmra.mrb[0].mxu0 %v3422
        %v3461 = vpop.f32.mrb[0].mxu0
        %v3462 = vadd.f32 %v627, %v3461
        %v3463 = vpop.f32.mrb[0].mxu0
        %v3464 = vpop.f32.mrb[0].mxu0
        %v3465 = vpop.f32.mrb[0].mxu0
        %3466 = vdwg.mxu0
        %3468 = vrot.lane.b32.xlu0 %v2992, 120
        %v3469 = vpop.permute.xlu0 %3468
        %v3471 = vrot.slane %v3095, 4
        %v3473 = vsel %vm3099, %v3469, 0
        %v3476 = vsel %vm3103, %v3471, 0
        %3478 = vmatprep.subr.bf16.mxu0 0
        %3479 = vmatpush1.bf16.msra.mxu0 %v3476
        %3480 = vmatprep.subr.bf16.mxu0 0
        %3481 = vmatpush1.bf16.msra.mxu0 0
        %3482 = vmatprep.subr.bf16.mxu0 0
        %3483 = vmatpush1.bf16.msra.mxu0 0
        %3484 = vmatprep.subr.bf16.mxu0 0
        %3485 = vmatpush1.bf16.msra.mxu0 0
        %3486 = vmatprep.subr.bf16.mxu0 0
        %3487 = vmatpush1.bf16.msra.mxu0 0
        %3488 = vmatprep.subr.bf16.mxu0 0
        %3489 = vmatpush1.bf16.msra.mxu0 0
        %3490 = vmatprep.subr.bf16.mxu0 0
        %3491 = vmatpush1.bf16.msra.mxu0 0
        %3492 = vmatprep.subr.bf16.mxu0 0
        %3493 = vmatpush1.bf16.msra.mxu0 0
        %3494 = vmatprep.subr.bf16.mxu0 0
        %3495 = vmatpush1.bf16.msra.mxu0 0
        %3496 = vmatprep.subr.bf16.mxu0 0
        %3497 = vmatpush1.bf16.msra.mxu0 0
        %3498 = vmatprep.subr.bf16.mxu0 0
        %3499 = vmatpush1.bf16.msra.mxu0 0
        %3500 = vmatprep.subr.bf16.mxu0 0
        %3501 = vmatpush1.bf16.msra.mxu0 0
        %3502 = vmatprep.subr.bf16.mxu0 0
        %3503 = vmatpush1.bf16.msra.mxu0 0
        %3504 = vmatprep.subr.bf16.mxu0 0
        %3505 = vmatpush1.bf16.msra.mxu0 0
        %3506 = vmatprep.subr.bf16.mxu0 0
        %3507 = vmatpush1.bf16.msra.mxu0 0
        %3508 = vmatprep.subr.bf16.mxu0 0
        %3509 = vmatpush1.bf16.msra.mxu0 0
        %3510 = vmatprep.mubr.bf16.mxu0 0
        %3511 = vmatmul.mubr.bf16.gmra.mrb[0].mxu0 %v3473
        %v3512 = vpop.f32.mrb[0].mxu0
        %v3513 = vadd.f32 %v627, %v3512
        %v3514 = vpop.f32.mrb[0].mxu0
        %v3515 = vpop.f32.mrb[0].mxu0
        %v3516 = vpop.f32.mrb[0].mxu0
        %3517 = vdwg.mxu0
        %3519 = vrot.lane.b32.xlu0 %v2993, 120
        %v3520 = vpop.permute.xlu0 %3519
        %v3522 = vrot.slane %v3097, 4
        %v3524 = vsel %vm3099, %v3520, 0
        %v3527 = vsel %vm3103, %v3522, 0
        %3529 = vmatprep.subr.bf16.mxu0 0
        %3530 = vmatpush1.bf16.msra.mxu0 %v3527
        %3531 = vmatprep.subr.bf16.mxu0 0
        %3532 = vmatpush1.bf16.msra.mxu0 0
        %3533 = vmatprep.subr.bf16.mxu0 0
        %3534 = vmatpush1.bf16.msra.mxu0 0
        %3535 = vmatprep.subr.bf16.mxu0 0
        %3536 = vmatpush1.bf16.msra.mxu0 0
        %3537 = vmatprep.subr.bf16.mxu0 0
        %3538 = vmatpush1.bf16.msra.mxu0 0
        %3539 = vmatprep.subr.bf16.mxu0 0
        %3540 = vmatpush1.bf16.msra.mxu0 0
        %3541 = vmatprep.subr.bf16.mxu0 0
        %3542 = vmatpush1.bf16.msra.mxu0 0
        %3543 = vmatprep.subr.bf16.mxu0 0
        %3544 = vmatpush1.bf16.msra.mxu0 0
        %3545 = vmatprep.subr.bf16.mxu0 0
        %3546 = vmatpush1.bf16.msra.mxu0 0
        %3547 = vmatprep.subr.bf16.mxu0 0
        %3548 = vmatpush1.bf16.msra.mxu0 0
        %3549 = vmatprep.subr.bf16.mxu0 0
        %3550 = vmatpush1.bf16.msra.mxu0 0
        %3551 = vmatprep.subr.bf16.mxu0 0
        %3552 = vmatpush1.bf16.msra.mxu0 0
        %3553 = vmatprep.subr.bf16.mxu0 0
        %3554 = vmatpush1.bf16.msra.mxu0 0
        %3555 = vmatprep.subr.bf16.mxu0 0
        %3556 = vmatpush1.bf16.msra.mxu0 0
        %3557 = vmatprep.subr.bf16.mxu0 0
        %3558 = vmatpush1.bf16.msra.mxu0 0
        %3559 = vmatprep.subr.bf16.mxu0 0
        %3560 = vmatpush1.bf16.msra.mxu0 0
        %3561 = vmatprep.mubr.bf16.mxu0 0
        %3562 = vmatmul.mubr.bf16.gmra.mrb[0].mxu0 %v3524
        %v3563 = vpop.f32.mrb[0].mxu0
        %v3564 = vadd.f32 %v627, %v3563
        %v3565 = vpop.f32.mrb[0].mxu0
        %v3566 = vpop.f32.mrb[0].mxu0
        %v3567 = vpop.f32.mrb[0].mxu0
        %3568 = vdwg.mxu0
        %v3569 = vsel %vm3099, %v3462, -inf
        %3570 = vmax.xlane.f32.xlu0 %v3569
        %v3571 = vpop.xlane.xlu0 %3570
        %v3572 = vsel %vm3099, %v3513, -inf
        %3573 = vmax.xlane.f32.xlu0 %v3572
        %v3574 = vpop.xlane.xlu0 %3573
        %v3575 = vsel %vm3099, %v3564, -inf
        %3576 = vmax.xlane.f32.xlu0 %v3575
        %v3577 = vpop.xlane.xlu0 %3576
        %v3578 = vsub.f32 %v3462, %v3571
        %v3579 = vsub.f32 %v3513, %v3574
        %v3580 = vsub.f32 %v3564, %v3577
        %v3581 = vmul.f32 %v3578, 1.442695
        %v3582 = vpow.pop %v3581
        %v3583 = vmul.f32 %v3579, 1.442695
        %v3584 = vpow.pop %v3583
        %v3585 = vmul.f32 %v3580, 1.442695
        %v3586 = vpow.pop %v3585
        %v3587 = vsel %vm3099, %v3582, 0.0
        %3588 = vadd.xlane.f32.xlu0 %v3587
        %v3589 = vpop.xlane.xlu0 %3588
        %v3590 = vsel %vm3099, %v3584, 0.0
        %3591 = vadd.xlane.f32.xlu0 %v3590
        %v3592 = vpop.xlane.xlu0 %3591
        %v3593 = vsel %vm3099, %v3586, 0.0
        %3594 = vadd.xlane.f32.xlu0 %v3593
        %v3595 = vpop.xlane.xlu0 %3594
        %v3596 = vrcp.pop %v3589
        %v3597 = vrcp.pop %v3592
        %v3598 = vrcp.pop %v3595
        %v3599 = vmul.f32 %v3582, %v3596
        %v3600 = vmul.f32 %v3584, %v3597
        %v3601 = vmul.f32 %v3586, %v3598
        %v3602 = vpack.c.bf16 %v3599, %v3599
        %v3603 = vpack.c.bf16 %v3600, %v3600
        %v3604 = vpack.c.bf16 %v3601, %v3601
        %3606 = vrot.lane.b32.xlu0 %v2985, 120
        %v3607 = vpop.permute.xlu0 %3606
        %v3609 = vsel %vm3099, %v3602, 0
        %v3612 = vsel %vm3103, %v3607, 0
        %3614 = vmatprep.subr.bf16.mxu0 0
        %3615 = vmatpush1.bf16.msra.mxu0 %v3612
        %3616 = vmatprep.subr.bf16.mxu0 0
        %3617 = vmatpush1.bf16.msra.mxu0 0
        %3618 = vmatprep.subr.bf16.mxu0 0
        %3619 = vmatpush1.bf16.msra.mxu0 0
        %3620 = vmatprep.subr.bf16.mxu0 0
        %3621 = vmatpush1.bf16.msra.mxu0 0
        %3622 = vmatprep.subr.bf16.mxu0 0
        %3623 = vmatpush1.bf16.msra.mxu0 0
        %3624 = vmatprep.subr.bf16.mxu0 0
        %3625 = vmatpush1.bf16.msra.mxu0 0
        %3626 = vmatprep.subr.bf16.mxu0 0
        %3627 = vmatpush1.bf16.msra.mxu0 0
        %3628 = vmatprep.subr.bf16.mxu0 0
        %3629 = vmatpush1.bf16.msra.mxu0 0
        %3630 = vmatprep.subr.bf16.mxu0 0
        %3631 = vmatpush1.bf16.msra.mxu0 0
        %3632 = vmatprep.subr.bf16.mxu0 0
        %3633 = vmatpush1.bf16.msra.mxu0 0
        %3634 = vmatprep.subr.bf16.mxu0 0
        %3635 = vmatpush1.bf16.msra.mxu0 0
        %3636 = vmatprep.subr.bf16.mxu0 0
        %3637 = vmatpush1.bf16.msra.mxu0 0
        %3638 = vmatprep.subr.bf16.mxu0 0
        %3639 = vmatpush1.bf16.msra.mxu0 0
        %3640 = vmatprep.subr.bf16.mxu0 0
        %3641 = vmatpush1.bf16.msra.mxu0 0
        %3642 = vmatprep.subr.bf16.mxu0 0
        %3643 = vmatpush1.bf16.msra.mxu0 0
        %3644 = vmatprep.subr.bf16.mxu0 0
        %3645 = vmatpush1.bf16.msra.mxu0 0
        %3646 = vmatprep.mubr.bf16.mxu0 0
        %3647 = vmatmul.mubr.bf16.gmra.mrb[0].mxu0 %v3609
        %v3648 = vpop.f32.mrb[0].mxu0
        %v3649 = vadd.f32 0.0, %v3648
        %v3650 = vpop.f32.mrb[0].mxu0
        %v3651 = vpop.f32.mrb[0].mxu0
        %v3652 = vpop.f32.mrb[0].mxu0
        %3653 = vdwg.mxu0
        %3655 = vrot.lane.b32.xlu0 %v2986, 120
        %v3656 = vpop.permute.xlu0 %3655
        %v3658 = vsel %vm3099, %v3603, 0
        %v3661 = vsel %vm3103, %v3656, 0
        %3663 = vmatprep.subr.bf16.mxu0 0
        %3664 = vmatpush1.bf16.msra.mxu0 %v3661
        %3665 = vmatprep.subr.bf16.mxu0 0
        %3666 = vmatpush1.bf16.msra.mxu0 0
        %3667 = vmatprep.subr.bf16.mxu0 0
        %3668 = vmatpush1.bf16.msra.mxu0 0
        %3669 = vmatprep.subr.bf16.mxu0 0
        %3670 = vmatpush1.bf16.msra.mxu0 0
        %3671 = vmatprep.subr.bf16.mxu0 0
        %3672 = vmatpush1.bf16.msra.mxu0 0
        %3673 = vmatprep.subr.bf16.mxu0 0
        %3674 = vmatpush1.bf16.msra.mxu0 0
        %3675 = vmatprep.subr.bf16.mxu0 0
        %3676 = vmatpush1.bf16.msra.mxu0 0
        %3677 = vmatprep.subr.bf16.mxu0 0
        %3678 = vmatpush1.bf16.msra.mxu0 0
        %3679 = vmatprep.subr.bf16.mxu0 0
        %3680 = vmatpush1.bf16.msra.mxu0 0
        %3681 = vmatprep.subr.bf16.mxu0 0
        %3682 = vmatpush1.bf16.msra.mxu0 0
        %3683 = vmatprep.subr.bf16.mxu0 0
        %3684 = vmatpush1.bf16.msra.mxu0 0
        %3685 = vmatprep.subr.bf16.mxu0 0
        %3686 = vmatpush1.bf16.msra.mxu0 0
        %3687 = vmatprep.subr.bf16.mxu0 0
        %3688 = vmatpush1.bf16.msra.mxu0 0
        %3689 = vmatprep.subr.bf16.mxu0 0
        %3690 = vmatpush1.bf16.msra.mxu0 0
        %3691 = vmatprep.subr.bf16.mxu0 0
        %3692 = vmatpush1.bf16.msra.mxu0 0
        %3693 = vmatprep.subr.bf16.mxu0 0
        %3694 = vmatpush1.bf16.msra.mxu0 0
        %3695 = vmatprep.mubr.bf16.mxu0 0
        %3696 = vmatmul.mubr.bf16.gmra.mrb[0].mxu0 %v3658
        %v3697 = vpop.f32.mrb[0].mxu0
        %v3698 = vadd.f32 0.0, %v3697
        %v3699 = vpop.f32.mrb[0].mxu0
        %v3700 = vpop.f32.mrb[0].mxu0
        %v3701 = vpop.f32.mrb[0].mxu0
        %3702 = vdwg.mxu0
        %3704 = vrot.lane.b32.xlu0 %v2987, 120
        %v3705 = vpop.permute.xlu0 %3704
        %v3707 = vsel %vm3099, %v3604, 0
        %v3710 = vsel %vm3103, %v3705, 0
        %3712 = vmatprep.subr.bf16.mxu0 0
        %3713 = vmatpush1.bf16.msra.mxu0 %v3710
        %3714 = vmatprep.subr.bf16.mxu0 0
        %3715 = vmatpush1.bf16.msra.mxu0 0
        %3716 = vmatprep.subr.bf16.mxu0 0
        %3717 = vmatpush1.bf16.msra.mxu0 0
        %3718 = vmatprep.subr.bf16.mxu0 0
        %3719 = vmatpush1.bf16.msra.mxu0 0
        %3720 = vmatprep.subr.bf16.mxu0 0
        %3721 = vmatpush1.bf16.msra.mxu0 0
        %3722 = vmatprep.subr.bf16.mxu0 0
        %3723 = vmatpush1.bf16.msra.mxu0 0
        %3724 = vmatprep.subr.bf16.mxu0 0
        %3725 = vmatpush1.bf16.msra.mxu0 0
        %3726 = vmatprep.subr.bf16.mxu0 0
        %3727 = vmatpush1.bf16.msra.mxu0 0
        %3728 = vmatprep.subr.bf16.mxu0 0
        %3729 = vmatpush1.bf16.msra.mxu0 0
        %3730 = vmatprep.subr.bf16.mxu0 0
        %3731 = vmatpush1.bf16.msra.mxu0 0
        %3732 = vmatprep.subr.bf16.mxu0 0
        %3733 = vmatpush1.bf16.msra.mxu0 0
        %3734 = vmatprep.subr.bf16.mxu0 0
        %3735 = vmatpush1.bf16.msra.mxu0 0
        %3736 = vmatprep.subr.bf16.mxu0 0
        %3737 = vmatpush1.bf16.msra.mxu0 0
        %3738 = vmatprep.subr.bf16.mxu0 0
        %3739 = vmatpush1.bf16.msra.mxu0 0
        %3740 = vmatprep.subr.bf16.mxu0 0
        %3741 = vmatpush1.bf16.msra.mxu0 0
        %3742 = vmatprep.subr.bf16.mxu0 0
        %3743 = vmatpush1.bf16.msra.mxu0 0
        %3744 = vmatprep.mubr.bf16.mxu0 0
        %3745 = vmatmul.mubr.bf16.gmra.mrb[0].mxu0 %v3707
        %v3746 = vpop.f32.mrb[0].mxu0
        %v3747 = vadd.f32 0.0, %v3746
        %v3748 = vpop.f32.mrb[0].mxu0
        %v3749 = vpop.f32.mrb[0].mxu0
        %v3750 = vpop.f32.mrb[0].mxu0
        %3751 = vdwg.mxu0
        %3755 = vrot.lane.b32.xlu0 %v3649, 8
        %v3756 = vpop.permute.xlu0 %3755
        %3757 = vrot.lane.b32.xlu0 %v3698, 8
        %v3758 = vpop.permute.xlu0 %3757
        %3759 = vrot.lane.b32.xlu0 %v3747, 8
        %v3760 = vpop.permute.xlu0 %3759
        %vm3764 = vcmask 130112
        %3765 = vst.msk [vmem:[#allocation4] sm:$0xff] %vm3764, %v3756
        %3766 = vst.msk [vmem:[#allocation4 + $0x8] sm:$0xff] %vm3764, %v3758
        %3767 = vst.msk [vmem:[#allocation4 + $0x10] sm:$0xff] %vm3764, %v3760
        %3768 = vrot.lane.b32.xlu0 %v2991, 112
        %v3769 = vpop.permute.xlu0 %3768
        %v3771 = vsel %vm3099, %v3769, 0
        %v3774 = vsel %vm3103, %v3094, 0
        %3776 = vmatprep.subr.bf16.mxu0 0
        %3777 = vmatpush1.bf16.msra.mxu0 %v3774
        %3778 = vmatprep.subr.bf16.mxu0 0
        %3779 = vmatpush1.bf16.msra.mxu0 0
        %3780 = vmatprep.subr.bf16.mxu0 0
        %3781 = vmatpush1.bf16.msra.mxu0 0
        %3782 = vmatprep.subr.bf16.mxu0 0
        %3783 = vmatpush1.bf16.msra.mxu0 0
        %3784 = vmatprep.subr.bf16.mxu0 0
        %3785 = vmatpush1.bf16.msra.mxu0 0
        %3786 = vmatprep.subr.bf16.mxu0 0
        %3787 = vmatpush1.bf16.msra.mxu0 0
        %3788 = vmatprep.subr.bf16.mxu0 0
        %3789 = vmatpush1.bf16.msra.mxu0 0
        %3790 = vmatprep.subr.bf16.mxu0 0
        %3791 = vmatpush1.bf16.msra.mxu0 0
        %3792 = vmatprep.subr.bf16.mxu0 0
        %3793 = vmatpush1.bf16.msra.mxu0 0
        %3794 = vmatprep.subr.bf16.mxu0 0
        %3795 = vmatpush1.bf16.msra.mxu0 0
        %3796 = vmatprep.subr.bf16.mxu0 0
        %3797 = vmatpush1.bf16.msra.mxu0 0
        %3798 = vmatprep.subr.bf16.mxu0 0
        %3799 = vmatpush1.bf16.msra.mxu0 0
        %3800 = vmatprep.subr.bf16.mxu0 0
        %3801 = vmatpush1.bf16.msra.mxu0 0
        %3802 = vmatprep.subr.bf16.mxu0 0
        %3803 = vmatpush1.bf16.msra.mxu0 0
        %3804 = vmatprep.subr.bf16.mxu0 0
        %3805 = vmatpush1.bf16.msra.mxu0 0
        %3806 = vmatprep.subr.bf16.mxu0 0
        %3807 = vmatpush1.bf16.msra.mxu0 0
        %3808 = vmatprep.mubr.bf16.mxu0 0
        %3809 = vmatmul.mubr.bf16.gmra.mrb[0].mxu0 %v3771
        %v3810 = vpop.f32.mrb[0].mxu0
        %v3811 = vadd.f32 %v627, %v3810
        %v3812 = vpop.f32.mrb[0].mxu0
        %v3813 = vpop.f32.mrb[0].mxu0
        %v3814 = vpop.f32.mrb[0].mxu0
        %3815 = vdwg.mxu0
        %3816 = vrot.lane.b32.xlu0 %v2992, 112
        %v3817 = vpop.permute.xlu0 %3816
        %v3819 = vsel %vm3099, %v3817, 0
        %v3822 = vsel %vm3103, %v3096, 0
        %3824 = vmatprep.subr.bf16.mxu0 0
        %3825 = vmatpush1.bf16.msra.mxu0 %v3822
        %3826 = vmatprep.subr.bf16.mxu0 0
        %3827 = vmatpush1.bf16.msra.mxu0 0
        %3828 = vmatprep.subr.bf16.mxu0 0
        %3829 = vmatpush1.bf16.msra.mxu0 0
        %3830 = vmatprep.subr.bf16.mxu0 0
        %3831 = vmatpush1.bf16.msra.mxu0 0
        %3832 = vmatprep.subr.bf16.mxu0 0
        %3833 = vmatpush1.bf16.msra.mxu0 0
        %3834 = vmatprep.subr.bf16.mxu0 0
        %3835 = vmatpush1.bf16.msra.mxu0 0
        %3836 = vmatprep.subr.bf16.mxu0 0
        %3837 = vmatpush1.bf16.msra.mxu0 0
        %3838 = vmatprep.subr.bf16.mxu0 0
        %3839 = vmatpush1.bf16.msra.mxu0 0
        %3840 = vmatprep.subr.bf16.mxu0 0
        %3841 = vmatpush1.bf16.msra.mxu0 0
        %3842 = vmatprep.subr.bf16.mxu0 0
        %3843 = vmatpush1.bf16.msra.mxu0 0
        %3844 = vmatprep.subr.bf16.mxu0 0
        %3845 = vmatpush1.bf16.msra.mxu0 0
        %3846 = vmatprep.subr.bf16.mxu0 0
        %3847 = vmatpush1.bf16.msra.mxu0 0
        %3848 = vmatprep.subr.bf16.mxu0 0
        %3849 = vmatpush1.bf16.msra.mxu0 0
        %3850 = vmatprep.subr.bf16.mxu0 0
        %3851 = vmatpush1.bf16.msra.mxu0 0
        %3852 = vmatprep.subr.bf16.mxu0 0
        %3853 = vmatpush1.bf16.msra.mxu0 0
        %3854 = vmatprep.subr.bf16.mxu0 0
        %3855 = vmatpush1.bf16.msra.mxu0 0
        %3856 = vmatprep.mubr.bf16.mxu0 0
        %3857 = vmatmul.mubr.bf16.gmra.mrb[0].mxu0 %v3819
        %v3858 = vpop.f32.mrb[0].mxu0
        %v3859 = vadd.f32 %v627, %v3858
        %v3860 = vpop.f32.mrb[0].mxu0
        %v3861 = vpop.f32.mrb[0].mxu0
        %v3862 = vpop.f32.mrb[0].mxu0
        %3863 = vdwg.mxu0
        %3864 = vrot.lane.b32.xlu0 %v2993, 112
        %v3865 = vpop.permute.xlu0 %3864
        %v3867 = vsel %vm3099, %v3865, 0
        %v3870 = vsel %vm3103, %v3098, 0
        %3872 = vmatprep.subr.bf16.mxu0 0
        %3873 = vmatpush1.bf16.msra.mxu0 %v3870
        %3874 = vmatprep.subr.bf16.mxu0 0
        %3875 = vmatpush1.bf16.msra.mxu0 0
        %3876 = vmatprep.subr.bf16.mxu0 0
        %3877 = vmatpush1.bf16.msra.mxu0 0
        %3878 = vmatprep.subr.bf16.mxu0 0
        %3879 = vmatpush1.bf16.msra.mxu0 0
        %3880 = vmatprep.subr.bf16.mxu0 0
        %3881 = vmatpush1.bf16.msra.mxu0 0
        %3882 = vmatprep.subr.bf16.mxu0 0
        %3883 = vmatpush1.bf16.msra.mxu0 0
        %3884 = vmatprep.subr.bf16.mxu0 0
        %3885 = vmatpush1.bf16.msra.mxu0 0
        %3886 = vmatprep.subr.bf16.mxu0 0
        %3887 = vmatpush1.bf16.msra.mxu0 0
        %3888 = vmatprep.subr.bf16.mxu0 0
        %3889 = vmatpush1.bf16.msra.mxu0 0
        %3890 = vmatprep.subr.bf16.mxu0 0
        %3891 = vmatpush1.bf16.msra.mxu0 0
        %3892 = vmatprep.subr.bf16.mxu0 0
        %3893 = vmatpush1.bf16.msra.mxu0 0
        %3894 = vmatprep.subr.bf16.mxu0 0
        %3895 = vmatpush1.bf16.msra.mxu0 0
        %3896 = vmatprep.subr.bf16.mxu0 0
        %3897 = vmatpush1.bf16.msra.mxu0 0
        %3898 = vmatprep.subr.bf16.mxu0 0
        %3899 = vmatpush1.bf16.msra.mxu0 0
        %3900 = vmatprep.subr.bf16.mxu0 0
        %3901 = vmatpush1.bf16.msra.mxu0 0
        %3902 = vmatprep.subr.bf16.mxu0 0
        %3903 = vmatpush1.bf16.msra.mxu0 0
        %3904 = vmatprep.mubr.bf16.mxu0 0
        %3905 = vmatmul.mubr.bf16.gmra.mrb[0].mxu0 %v3867
        %v3906 = vpop.f32.mrb[0].mxu0
        %v3907 = vadd.f32 %v627, %v3906
        %v3908 = vpop.f32.mrb[0].mxu0
        %v3909 = vpop.f32.mrb[0].mxu0
        %v3910 = vpop.f32.mrb[0].mxu0
        %3911 = vdwg.mxu0
        %v3912 = vsel %vm3099, %v3811, -inf
        %3913 = vmax.xlane.f32.xlu0 %v3912
        %v3914 = vpop.xlane.xlu0 %3913
        %v3915 = vsel %vm3099, %v3859, -inf
        %3916 = vmax.xlane.f32.xlu0 %v3915
        %v3917 = vpop.xlane.xlu0 %3916
        %v3918 = vsel %vm3099, %v3907, -inf
        %3919 = vmax.xlane.f32.xlu0 %v3918
        %v3920 = vpop.xlane.xlu0 %3919
        %v3921 = vsub.f32 %v3811, %v3914
        %v3922 = vsub.f32 %v3859, %v3917
        %v3923 = vsub.f32 %v3907, %v3920
        %v3924 = vmul.f32 %v3921, 1.442695
        %v3925 = vpow.pop %v3924
        %v3926 = vmul.f32 %v3922, 1.442695
        %v3927 = vpow.pop %v3926
        %v3928 = vmul.f32 %v3923, 1.442695
        %v3929 = vpow.pop %v3928
        %v3930 = vsel %vm3099, %v3925, 0.0
        %3931 = vadd.xlane.f32.xlu0 %v3930
        %v3932 = vpop.xlane.xlu0 %3931
        %v3933 = vsel %vm3099, %v3927, 0.0
        %3934 = vadd.xlane.f32.xlu0 %v3933
        %v3935 = vpop.xlane.xlu0 %3934
        %v3936 = vsel %vm3099, %v3929, 0.0
        %3937 = vadd.xlane.f32.xlu0 %v3936
        %v3938 = vpop.xlane.xlu0 %3937
        %v3939 = vrcp.pop %v3932
        %v3940 = vrcp.pop %v3935
        %v3941 = vrcp.pop %v3938
        %v3942 = vmul.f32 %v3925, %v3939
        %v3943 = vmul.f32 %v3927, %v3940
        %v3944 = vmul.f32 %v3929, %v3941
        %v3945 = vpack.c.bf16 %v3942, %v3942
        %v3946 = vpack.c.bf16 %v3943, %v3943
        %v3947 = vpack.c.bf16 %v3944, %v3944
        %3948 = vrot.lane.b32.xlu0 %v2985, 112
        %v3949 = vpop.permute.xlu0 %3948
        %v3951 = vsel %vm3099, %v3945, 0
        %v3954 = vsel %vm3103, %v3949, 0
        %3956 = vmatprep.subr.bf16.mxu0 0
        %3957 = vmatpush1.bf16.msra.mxu0 %v3954
        %3958 = vmatprep.subr.bf16.mxu0 0
        %3959 = vmatpush1.bf16.msra.mxu0 0
        %3960 = vmatprep.subr.bf16.mxu0 0
        %3961 = vmatpush1.bf16.msra.mxu0 0
        %3962 = vmatprep.subr.bf16.mxu0 0
        %3963 = vmatpush1.bf16.msra.mxu0 0
        %3964 = vmatprep.subr.bf16.mxu0 0
        %3965 = vmatpush1.bf16.msra.mxu0 0
        %3966 = vmatprep.subr.bf16.mxu0 0
        %3967 = vmatpush1.bf16.msra.mxu0 0
        %3968 = vmatprep.subr.bf16.mxu0 0
        %3969 = vmatpush1.bf16.msra.mxu0 0
        %3970 = vmatprep.subr.bf16.mxu0 0
        %3971 = vmatpush1.bf16.msra.mxu0 0
        %3972 = vmatprep.subr.bf16.mxu0 0
        %3973 = vmatpush1.bf16.msra.mxu0 0
        %3974 = vmatprep.subr.bf16.mxu0 0
        %3975 = vmatpush1.bf16.msra.mxu0 0
        %3976 = vmatprep.subr.bf16.mxu0 0
        %3977 = vmatpush1.bf16.msra.mxu0 0
        %3978 = vmatprep.subr.bf16.mxu0 0
        %3979 = vmatpush1.bf16.msra.mxu0 0
        %3980 = vmatprep.subr.bf16.mxu0 0
        %3981 = vmatpush1.bf16.msra.mxu0 0
        %3982 = vmatprep.subr.bf16.mxu0 0
        %3983 = vmatpush1.bf16.msra.mxu0 0
        %3984 = vmatprep.subr.bf16.mxu0 0
        %3985 = vmatpush1.bf16.msra.mxu0 0
        %3986 = vmatprep.subr.bf16.mxu0 0
        %3987 = vmatpush1.bf16.msra.mxu0 0
        %3988 = vmatprep.mubr.bf16.mxu0 0
        %3989 = vmatmul.mubr.bf16.gmra.mrb[0].mxu0 %v3951
        %v3990 = vpop.f32.mrb[0].mxu0
        %v3991 = vadd.f32 0.0, %v3990
        %v3992 = vpop.f32.mrb[0].mxu0
        %v3993 = vpop.f32.mrb[0].mxu0
        %v3994 = vpop.f32.mrb[0].mxu0
        %3995 = vdwg.mxu0
        %3996 = vrot.lane.b32.xlu0 %v2986, 112
        %v3997 = vpop.permute.xlu0 %3996
        %v3999 = vsel %vm3099, %v3946, 0
        %v4002 = vsel %vm3103, %v3997, 0
        %4004 = vmatprep.subr.bf16.mxu0 0
        %4005 = vmatpush1.bf16.msra.mxu0 %v4002
        %4006 = vmatprep.subr.bf16.mxu0 0
        %4007 = vmatpush1.bf16.msra.mxu0 0
        %4008 = vmatprep.subr.bf16.mxu0 0
        %4009 = vmatpush1.bf16.msra.mxu0 0
        %4010 = vmatprep.subr.bf16.mxu0 0
        %4011 = vmatpush1.bf16.msra.mxu0 0
        %4012 = vmatprep.subr.bf16.mxu0 0
        %4013 = vmatpush1.bf16.msra.mxu0 0
        %4014 = vmatprep.subr.bf16.mxu0 0
        %4015 = vmatpush1.bf16.msra.mxu0 0
        %4016 = vmatprep.subr.bf16.mxu0 0
        %4017 = vmatpush1.bf16.msra.mxu0 0
        %4018 = vmatprep.subr.bf16.mxu0 0
        %4019 = vmatpush1.bf16.msra.mxu0 0
        %4020 = vmatprep.subr.bf16.mxu0 0
        %4021 = vmatpush1.bf16.msra.mxu0 0
        %4022 = vmatprep.subr.bf16.mxu0 0
        %4023 = vmatpush1.bf16.msra.mxu0 0
        %4024 = vmatprep.subr.bf16.mxu0 0
        %4025 = vmatpush1.bf16.msra.mxu0 0
        %4026 = vmatprep.subr.bf16.mxu0 0
        %4027 = vmatpush1.bf16.msra.mxu0 0
        %4028 = vmatprep.subr.bf16.mxu0 0
        %4029 = vmatpush1.bf16.msra.mxu0 0
        %4030 = vmatprep.subr.bf16.mxu0 0
        %4031 = vmatpush1.bf16.msra.mxu0 0
        %4032 = vmatprep.subr.bf16.mxu0 0
        %4033 = vmatpush1.bf16.msra.mxu0 0
        %4034 = vmatprep.subr.bf16.mxu0 0
        %4035 = vmatpush1.bf16.msra.mxu0 0
        %4036 = vmatprep.mubr.bf16.mxu0 0
        %4037 = vmatmul.mubr.bf16.gmra.mrb[0].mxu0 %v3999
        %v4038 = vpop.f32.mrb[0].mxu0
        %v4039 = vadd.f32 0.0, %v4038
        %v4040 = vpop.f32.mrb[0].mxu0
        %v4041 = vpop.f32.mrb[0].mxu0
        %v4042 = vpop.f32.mrb[0].mxu0
        %4043 = vdwg.mxu0
        %4044 = vrot.lane.b32.xlu0 %v2987, 112
        %v4045 = vpop.permute.xlu0 %4044
        %v4047 = vsel %vm3099, %v3947, 0
        %v4050 = vsel %vm3103, %v4045, 0
        %4052 = vmatprep.subr.bf16.mxu0 0
        %4053 = vmatpush1.bf16.msra.mxu0 %v4050
        %4054 = vmatprep.subr.bf16.mxu0 0
        %4055 = vmatpush1.bf16.msra.mxu0 0
        %4056 = vmatprep.subr.bf16.mxu0 0
        %4057 = vmatpush1.bf16.msra.mxu0 0
        %4058 = vmatprep.subr.bf16.mxu0 0
        %4059 = vmatpush1.bf16.msra.mxu0 0
        %4060 = vmatprep.subr.bf16.mxu0 0
        %4061 = vmatpush1.bf16.msra.mxu0 0
        %4062 = vmatprep.subr.bf16.mxu0 0
        %4063 = vmatpush1.bf16.msra.mxu0 0
        %4064 = vmatprep.subr.bf16.mxu0 0
        %4065 = vmatpush1.bf16.msra.mxu0 0
        %4066 = vmatprep.subr.bf16.mxu0 0
        %4067 = vmatpush1.bf16.msra.mxu0 0
        %4068 = vmatprep.subr.bf16.mxu0 0
        %4069 = vmatpush1.bf16.msra.mxu0 0
        %4070 = vmatprep.subr.bf16.mxu0 0
        %4071 = vmatpush1.bf16.msra.mxu0 0
        %4072 = vmatprep.subr.bf16.mxu0 0
        %4073 = vmatpush1.bf16.msra.mxu0 0
        %4074 = vmatprep.subr.bf16.mxu0 0
        %4075 = vmatpush1.bf16.msra.mxu0 0
        %4076 = vmatprep.subr.bf16.mxu0 0
        %4077 = vmatpush1.bf16.msra.mxu0 0
        %4078 = vmatprep.subr.bf16.mxu0 0
        %4079 = vmatpush1.bf16.msra.mxu0 0
        %4080 = vmatprep.subr.bf16.mxu0 0
        %4081 = vmatpush1.bf16.msra.mxu0 0
        %4082 = vmatprep.subr.bf16.mxu0 0
        %4083 = vmatpush1.bf16.msra.mxu0 0
        %4084 = vmatprep.mubr.bf16.mxu0 0
        %4085 = vmatmul.mubr.bf16.gmra.mrb[0].mxu0 %v4047
        %v4086 = vpop.f32.mrb[0].mxu0
        %v4087 = vadd.f32 0.0, %v4086
        %v4088 = vpop.f32.mrb[0].mxu0
        %v4089 = vpop.f32.mrb[0].mxu0
        %v4090 = vpop.f32.mrb[0].mxu0
        %4091 = vdwg.mxu0
        %4095 = vrot.lane.b32.xlu0 %v3991, 16
        %v4096 = vpop.permute.xlu0 %4095
        %4097 = vrot.lane.b32.xlu0 %v4039, 16
        %v4098 = vpop.permute.xlu0 %4097
        %4099 = vrot.lane.b32.xlu0 %v4087, 16
        %v4100 = vpop.permute.xlu0 %4099
        %vm4104 = vcmask 195712
        %4105 = vst.msk [vmem:[#allocation4] sm:$0xff] %vm4104, %v4096
        %4106 = vst.msk [vmem:[#allocation4 + $0x8] sm:$0xff] %vm4104, %v4098
        %4107 = vst.msk [vmem:[#allocation4 + $0x10] sm:$0xff] %vm4104, %v4100
        %4108 = vrot.lane.b32.xlu0 %v2991, 104
        %v4109 = vpop.permute.xlu0 %4108
        %v4111 = vrot.slane %v3094, 4
        %v4113 = vsel %vm3099, %v4109, 0
        %v4116 = vsel %vm3103, %v4111, 0
        %4118 = vmatprep.subr.bf16.mxu0 0
        %4119 = vmatpush1.bf16.msra.mxu0 %v4116
        %4120 = vmatprep.subr.bf16.mxu0 0
        %4121 = vmatpush1.bf16.msra.mxu0 0
        %4122 = vmatprep.subr.bf16.mxu0 0
        %4123 = vmatpush1.bf16.msra.mxu0 0
        %4124 = vmatprep.subr.bf16.mxu0 0
        %4125 = vmatpush1.bf16.msra.mxu0 0
        %4126 = vmatprep.subr.bf16.mxu0 0
        %4127 = vmatpush1.bf16.msra.mxu0 0
        %4128 = vmatprep.subr.bf16.mxu0 0
        %4129 = vmatpush1.bf16.msra.mxu0 0
        %4130 = vmatprep.subr.bf16.mxu0 0
        %4131 = vmatpush1.bf16.msra.mxu0 0
        %4132 = vmatprep.subr.bf16.mxu0 0
        %4133 = vmatpush1.bf16.msra.mxu0 0
        %4134 = vmatprep.subr.bf16.mxu0 0
        %4135 = vmatpush1.bf16.msra.mxu0 0
        %4136 = vmatprep.subr.bf16.mxu0 0
        %4137 = vmatpush1.bf16.msra.mxu0 0
        %4138 = vmatprep.subr.bf16.mxu0 0
        %4139 = vmatpush1.bf16.msra.mxu0 0
        %4140 = vmatprep.subr.bf16.mxu0 0
        %4141 = vmatpush1.bf16.msra.mxu0 0
        %4142 = vmatprep.subr.bf16.mxu0 0
        %4143 = vmatpush1.bf16.msra.mxu0 0
        %4144 = vmatprep.subr.bf16.mxu0 0
        %4145 = vmatpush1.bf16.msra.mxu0 0
        %4146 = vmatprep.subr.bf16.mxu0 0
        %4147 = vmatpush1.bf16.msra.mxu0 0
        %4148 = vmatprep.subr.bf16.mxu0 0
        %4149 = vmatpush1.bf16.msra.mxu0 0
        %4150 = vmatprep.mubr.bf16.mxu0 0
        %4151 = vmatmul.mubr.bf16.gmra.mrb[0].mxu0 %v4113
        %v4152 = vpop.f32.mrb[0].mxu0
        %v4153 = vadd.f32 %v627, %v4152
        %v4154 = vpop.f32.mrb[0].mxu0
        %v4155 = vpop.f32.mrb[0].mxu0
        %v4156 = vpop.f32.mrb[0].mxu0
        %4157 = vdwg.mxu0
        %4158 = vrot.lane.b32.xlu0 %v2992, 104
        %v4159 = vpop.permute.xlu0 %4158
        %v4161 = vrot.slane %v3096, 4
        %v4163 = vsel %vm3099, %v4159, 0
        %v4166 = vsel %vm3103, %v4161, 0
        %4168 = vmatprep.subr.bf16.mxu0 0
        %4169 = vmatpush1.bf16.msra.mxu0 %v4166
        %4170 = vmatprep.subr.bf16.mxu0 0
        %4171 = vmatpush1.bf16.msra.mxu0 0
        %4172 = vmatprep.subr.bf16.mxu0 0
        %4173 = vmatpush1.bf16.msra.mxu0 0
        %4174 = vmatprep.subr.bf16.mxu0 0
        %4175 = vmatpush1.bf16.msra.mxu0 0
        %4176 = vmatprep.subr.bf16.mxu0 0
        %4177 = vmatpush1.bf16.msra.mxu0 0
        %4178 = vmatprep.subr.bf16.mxu0 0
        %4179 = vmatpush1.bf16.msra.mxu0 0
        %4180 = vmatprep.subr.bf16.mxu0 0
        %4181 = vmatpush1.bf16.msra.mxu0 0
        %4182 = vmatprep.subr.bf16.mxu0 0
        %4183 = vmatpush1.bf16.msra.mxu0 0
        %4184 = vmatprep.subr.bf16.mxu0 0
        %4185 = vmatpush1.bf16.msra.mxu0 0
        %4186 = vmatprep.subr.bf16.mxu0 0
        %4187 = vmatpush1.bf16.msra.mxu0 0
        %4188 = vmatprep.subr.bf16.mxu0 0
        %4189 = vmatpush1.bf16.msra.mxu0 0
        %4190 = vmatprep.subr.bf16.mxu0 0
        %4191 = vmatpush1.bf16.msra.mxu0 0
        %4192 = vmatprep.subr.bf16.mxu0 0
        %4193 = vmatpush1.bf16.msra.mxu0 0
        %4194 = vmatprep.subr.bf16.mxu0 0
        %4195 = vmatpush1.bf16.msra.mxu0 0
        %4196 = vmatprep.subr.bf16.mxu0 0
        %4197 = vmatpush1.bf16.msra.mxu0 0
        %4198 = vmatprep.subr.bf16.mxu0 0
        %4199 = vmatpush1.bf16.msra.mxu0 0
        %4200 = vmatprep.mubr.bf16.mxu0 0
        %4201 = vmatmul.mubr.bf16.gmra.mrb[0].mxu0 %v4163
        %v4202 = vpop.f32.mrb[0].mxu0
        %v4203 = vadd.f32 %v627, %v4202
        %v4204 = vpop.f32.mrb[0].mxu0
        %v4205 = vpop.f32.mrb[0].mxu0
        %v4206 = vpop.f32.mrb[0].mxu0
        %4207 = vdwg.mxu0
        %4208 = vrot.lane.b32.xlu0 %v2993, 104
        %v4209 = vpop.permute.xlu0 %4208
        %v4211 = vrot.slane %v3098, 4
        %v4213 = vsel %vm3099, %v4209, 0
        %v4216 = vsel %vm3103, %v4211, 0
        %4218 = vmatprep.subr.bf16.mxu0 0
        %4219 = vmatpush1.bf16.msra.mxu0 %v4216
        %4220 = vmatprep.subr.bf16.mxu0 0
        %4221 = vmatpush1.bf16.msra.mxu0 0
        %4222 = vmatprep.subr.bf16.mxu0 0
        %4223 = vmatpush1.bf16.msra.mxu0 0
        %4224 = vmatprep.subr.bf16.mxu0 0
        %4225 = vmatpush1.bf16.msra.mxu0 0
        %4226 = vmatprep.subr.bf16.mxu0 0
        %4227 = vmatpush1.bf16.msra.mxu0 0
        %4228 = vmatprep.subr.bf16.mxu0 0
        %4229 = vmatpush1.bf16.msra.mxu0 0
        %4230 = vmatprep.subr.bf16.mxu0 0
        %4231 = vmatpush1.bf16.msra.mxu0 0
        %4232 = vmatprep.subr.bf16.mxu0 0
        %4233 = vmatpush1.bf16.msra.mxu0 0
        %4234 = vmatprep.subr.bf16.mxu0 0
        %4235 = vmatpush1.bf16.msra.mxu0 0
        %4236 = vmatprep.subr.bf16.mxu0 0
        %4237 = vmatpush1.bf16.msra.mxu0 0
        %4238 = vmatprep.subr.bf16.mxu0 0
        %4239 = vmatpush1.bf16.msra.mxu0 0
        %4240 = vmatprep.subr.bf16.mxu0 0
        %4241 = vmatpush1.bf16.msra.mxu0 0
        %4242 = vmatprep.subr.bf16.mxu0 0
        %4243 = vmatpush1.bf16.msra.mxu0 0
        %4244 = vmatprep.subr.bf16.mxu0 0
        %4245 = vmatpush1.bf16.msra.mxu0 0
        %4246 = vmatprep.subr.bf16.mxu0 0
        %4247 = vmatpush1.bf16.msra.mxu0 0
        %4248 = vmatprep.subr.bf16.mxu0 0
        %4249 = vmatpush1.bf16.msra.mxu0 0
        %4250 = vmatprep.mubr.bf16.mxu0 0
        %4251 = vmatmul.mubr.bf16.gmra.mrb[0].mxu0 %v4213
        %v4252 = vpop.f32.mrb[0].mxu0
        %v4253 = vadd.f32 %v627, %v4252
        %v4254 = vpop.f32.mrb[0].mxu0
        %v4255 = vpop.f32.mrb[0].mxu0
        %v4256 = vpop.f32.mrb[0].mxu0
        %4257 = vdwg.mxu0
        %v4258 = vsel %vm3099, %v4153, -inf
        %4259 = vmax.xlane.f32.xlu0 %v4258
        %v4260 = vpop.xlane.xlu0 %4259
        %v4261 = vsel %vm3099, %v4203, -inf
        %4262 = vmax.xlane.f32.xlu0 %v4261
        %v4263 = vpop.xlane.xlu0 %4262
        %v4264 = vsel %vm3099, %v4253, -inf
        %4265 = vmax.xlane.f32.xlu0 %v4264
        %v4266 = vpop.xlane.xlu0 %4265
        %v4267 = vsub.f32 %v4153, %v4260
        %v4268 = vsub.f32 %v4203, %v4263
        %v4269 = vsub.f32 %v4253, %v4266
        %v4270 = vmul.f32 %v4267, 1.442695
        %v4271 = vpow.pop %v4270
        %v4272 = vmul.f32 %v4268, 1.442695
        %v4273 = vpow.pop %v4272
        %v4274 = vmul.f32 %v4269, 1.442695
        %v4275 = vpow.pop %v4274
        %v4276 = vsel %vm3099, %v4271, 0.0
        %4277 = vadd.xlane.f32.xlu0 %v4276
        %v4278 = vpop.xlane.xlu0 %4277
        %v4279 = vsel %vm3099, %v4273, 0.0
        %4280 = vadd.xlane.f32.xlu0 %v4279
        %v4281 = vpop.xlane.xlu0 %4280
        %v4282 = vsel %vm3099, %v4275, 0.0
        %4283 = vadd.xlane.f32.xlu0 %v4282
        %v4284 = vpop.xlane.xlu0 %4283
        %v4285 = vrcp.pop %v4278
        %v4286 = vrcp.pop %v4281
        %v4287 = vrcp.pop %v4284
        %v4288 = vmul.f32 %v4271, %v4285
        %v4289 = vmul.f32 %v4273, %v4286
        %v4290 = vmul.f32 %v4275, %v4287
        %v4291 = vpack.c.bf16 %v4288, %v4288
        %v4292 = vpack.c.bf16 %v4289, %v4289
        %v4293 = vpack.c.bf16 %v4290, %v4290
        %4294 = vrot.lane.b32.xlu0 %v2985, 104
        %v4295 = vpop.permute.xlu0 %4294
        %v4297 = vsel %vm3099, %v4291, 0
        %v4300 = vsel %vm3103, %v4295, 0
        %4302 = vmatprep.subr.bf16.mxu0 0
        %4303 = vmatpush1.bf16.msra.mxu0 %v4300
        %4304 = vmatprep.subr.bf16.mxu0 0
        %4305 = vmatpush1.bf16.msra.mxu0 0
        %4306 = vmatprep.subr.bf16.mxu0 0
        %4307 = vmatpush1.bf16.msra.mxu0 0
        %4308 = vmatprep.subr.bf16.mxu0 0
        %4309 = vmatpush1.bf16.msra.mxu0 0
        %4310 = vmatprep.subr.bf16.mxu0 0
        %4311 = vmatpush1.bf16.msra.mxu0 0
        %4312 = vmatprep.subr.bf16.mxu0 0
        %4313 = vmatpush1.bf16.msra.mxu0 0
        %4314 = vmatprep.subr.bf16.mxu0 0
        %4315 = vmatpush1.bf16.msra.mxu0 0
        %4316 = vmatprep.subr.bf16.mxu0 0
        %4317 = vmatpush1.bf16.msra.mxu0 0
        %4318 = vmatprep.subr.bf16.mxu0 0
        %4319 = vmatpush1.bf16.msra.mxu0 0
        %4320 = vmatprep.subr.bf16.mxu0 0
        %4321 = vmatpush1.bf16.msra.mxu0 0
        %4322 = vmatprep.subr.bf16.mxu0 0
        %4323 = vmatpush1.bf16.msra.mxu0 0
        %4324 = vmatprep.subr.bf16.mxu0 0
        %4325 = vmatpush1.bf16.msra.mxu0 0
        %4326 = vmatprep.subr.bf16.mxu0 0
        %4327 = vmatpush1.bf16.msra.mxu0 0
        %4328 = vmatprep.subr.bf16.mxu0 0
        %4329 = vmatpush1.bf16.msra.mxu0 0
        %4330 = vmatprep.subr.bf16.mxu0 0
        %4331 = vmatpush1.bf16.msra.mxu0 0
        %4332 = vmatprep.subr.bf16.mxu0 0
        %4333 = vmatpush1.bf16.msra.mxu0 0
        %4334 = vmatprep.mubr.bf16.mxu0 0
        %4335 = vmatmul.mubr.bf16.gmra.mrb[0].mxu0 %v4297
        %v4336 = vpop.f32.mrb[0].mxu0
        %v4337 = vadd.f32 0.0, %v4336
        %v4338 = vpop.f32.mrb[0].mxu0
        %v4339 = vpop.f32.mrb[0].mxu0
        %v4340 = vpop.f32.mrb[0].mxu0
        %4341 = vdwg.mxu0
        %4342 = vrot.lane.b32.xlu0 %v2986, 104
        %v4343 = vpop.permute.xlu0 %4342
        %v4345 = vsel %vm3099, %v4292, 0
        %v4348 = vsel %vm3103, %v4343, 0
        %4350 = vmatprep.subr.bf16.mxu0 0
        %4351 = vmatpush1.bf16.msra.mxu0 %v4348
        %4352 = vmatprep.subr.bf16.mxu0 0
        %4353 = vmatpush1.bf16.msra.mxu0 0
        %4354 = vmatprep.subr.bf16.mxu0 0
        %4355 = vmatpush1.bf16.msra.mxu0 0
        %4356 = vmatprep.subr.bf16.mxu0 0
        %4357 = vmatpush1.bf16.msra.mxu0 0
        %4358 = vmatprep.subr.bf16.mxu0 0
        %4359 = vmatpush1.bf16.msra.mxu0 0
        %4360 = vmatprep.subr.bf16.mxu0 0
        %4361 = vmatpush1.bf16.msra.mxu0 0
        %4362 = vmatprep.subr.bf16.mxu0 0
        %4363 = vmatpush1.bf16.msra.mxu0 0
        %4364 = vmatprep.subr.bf16.mxu0 0
        %4365 = vmatpush1.bf16.msra.mxu0 0
        %4366 = vmatprep.subr.bf16.mxu0 0
        %4367 = vmatpush1.bf16.msra.mxu0 0
        %4368 = vmatprep.subr.bf16.mxu0 0
        %4369 = vmatpush1.bf16.msra.mxu0 0
        %4370 = vmatprep.subr.bf16.mxu0 0
        %4371 = vmatpush1.bf16.msra.mxu0 0
        %4372 = vmatprep.subr.bf16.mxu0 0
        %4373 = vmatpush1.bf16.msra.mxu0 0
        %4374 = vmatprep.subr.bf16.mxu0 0
        %4375 = vmatpush1.bf16.msra.mxu0 0
        %4376 = vmatprep.subr.bf16.mxu0 0
        %4377 = vmatpush1.bf16.msra.mxu0 0
        %4378 = vmatprep.subr.bf16.mxu0 0
        %4379 = vmatpush1.bf16.msra.mxu0 0
        %4380 = vmatprep.subr.bf16.mxu0 0
        %4381 = vmatpush1.bf16.msra.mxu0 0
        %4382 = vmatprep.mubr.bf16.mxu0 0
        %4383 = vmatmul.mubr.bf16.gmra.mrb[0].mxu0 %v4345
        %v4384 = vpop.f32.mrb[0].mxu0
        %v4385 = vadd.f32 0.0, %v4384
        %v4386 = vpop.f32.mrb[0].mxu0
        %v4387 = vpop.f32.mrb[0].mxu0
        %v4388 = vpop.f32.mrb[0].mxu0
        %4389 = vdwg.mxu0
        %4390 = vrot.lane.b32.xlu0 %v2987, 104
        %v4391 = vpop.permute.xlu0 %4390
        %v4393 = vsel %vm3099, %v4293, 0
        %v4396 = vsel %vm3103, %v4391, 0
        %4398 = vmatprep.subr.bf16.mxu0 0
        %4399 = vmatpush1.bf16.msra.mxu0 %v4396
        %4400 = vmatprep.subr.bf16.mxu0 0
        %4401 = vmatpush1.bf16.msra.mxu0 0
        %4402 = vmatprep.subr.bf16.mxu0 0
        %4403 = vmatpush1.bf16.msra.mxu0 0
        %4404 = vmatprep.subr.bf16.mxu0 0
        %4405 = vmatpush1.bf16.msra.mxu0 0
        %4406 = vmatprep.subr.bf16.mxu0 0
        %4407 = vmatpush1.bf16.msra.mxu0 0
        %4408 = vmatprep.subr.bf16.mxu0 0
        %4409 = vmatpush1.bf16.msra.mxu0 0
        %4410 = vmatprep.subr.bf16.mxu0 0
        %4411 = vmatpush1.bf16.msra.mxu0 0
        %4412 = vmatprep.subr.bf16.mxu0 0
        %4413 = vmatpush1.bf16.msra.mxu0 0
        %4414 = vmatprep.subr.bf16.mxu0 0
        %4415 = vmatpush1.bf16.msra.mxu0 0
        %4416 = vmatprep.subr.bf16.mxu0 0
        %4417 = vmatpush1.bf16.msra.mxu0 0
        %4418 = vmatprep.subr.bf16.mxu0 0
        %4419 = vmatpush1.bf16.msra.mxu0 0
        %4420 = vmatprep.subr.bf16.mxu0 0
        %4421 = vmatpush1.bf16.msra.mxu0 0
        %4422 = vmatprep.subr.bf16.mxu0 0
        %4423 = vmatpush1.bf16.msra.mxu0 0
        %4424 = vmatprep.subr.bf16.mxu0 0
        %4425 = vmatpush1.bf16.msra.mxu0 0
        %4426 = vmatprep.subr.bf16.mxu0 0
        %4427 = vmatpush1.bf16.msra.mxu0 0
        %4428 = vmatprep.subr.bf16.mxu0 0
        %4429 = vmatpush1.bf16.msra.mxu0 0
        %4430 = vmatprep.mubr.bf16.mxu0 0
        %4431 = vmatmul.mubr.bf16.gmra.mrb[0].mxu0 %v4393
        %v4432 = vpop.f32.mrb[0].mxu0
        %v4433 = vadd.f32 0.0, %v4432
        %v4434 = vpop.f32.mrb[0].mxu0
        %v4435 = vpop.f32.mrb[0].mxu0
        %v4436 = vpop.f32.mrb[0].mxu0
        %4437 = vdwg.mxu0
        %4441 = vrot.lane.b32.xlu0 %v4337, 24
        %v4442 = vpop.permute.xlu0 %4441
        %4443 = vrot.lane.b32.xlu0 %v4385, 24
        %v4444 = vpop.permute.xlu0 %4443
        %4445 = vrot.lane.b32.xlu0 %v4433, 24
        %v4446 = vpop.permute.xlu0 %4445
        %vm4450 = vcmask 261312
        %4451 = vst.msk [vmem:[#allocation4] sm:$0xff] %vm4450, %v4442
        %4452 = vst.msk [vmem:[#allocation4 + $0x8] sm:$0xff] %vm4450, %v4444
        %4453 = vst.msk [vmem:[#allocation4 + $0x10] sm:$0xff] %vm4450, %v4446
        %v4454 = vld [vmem:[#allocation4] sm:$0xff]
        %v4455 = vld [vmem:[#allocation4 + $0x8] sm:$0xff]
        %v4456 = vld [vmem:[#allocation4 + $0x10] sm:$0xff]
        %v4457 = vpack.c.bf16 %v4454, %v4454
        %v4458 = vpack.c.bf16 %v4455, %v4455
        %v4459 = vpack.c.bf16 %v4456, %v4456
        %v4460 = vld [vmem:[%s10] sm:$0xf]
        %v4461 = vld [vmem:[%s10 + $0x4] sm:$0xf]
        %v4462 = vld [vmem:[%s10 + $0x8] sm:$0xf]
        %v4463 = vld [vmem:[%s10 + $0xc] sm:$0xf]
        %v4467 = vunpack.c.l.b16 %v4457
        %v4468 = vunpack.c.l.b16 %v4458
        %v4469 = vunpack.c.l.b16 %v4459
        %v4470 = vpack.c.b16 %v4468, %v4467
        %v4471 = vpack.c.b16 %v4469, %v4469
        %v4476 = vunpack.c.l.b16 %v4460
        %v4477 = vunpack.c.l.b16 %v4461
        %v4478 = vunpack.c.l.b16 %v4462
        %v4479 = vunpack.c.l.b16 %v4463
        %v4480 = vpack.c.b16 %v4477, %v4476
        %v4481 = vpack.c.b16 %v4479, %v4478
        %v4485 = vsel %vm635, %v4470, 0
        %v4488 = vsel %vm635, %v4471, 0
        %4490 = vmatprep.subr.bf16.mxu0 0
        %4491 = vmatpush1.bf16.msra.mxu0 %v4480
        %4492 = vmatprep.subr.bf16.mxu0 0
        %4493 = vmatpush1.bf16.msra.mxu0 %v4481
        %4494 = vmatprep.subr.bf16.mxu0 0
        %4495 = vmatpush1.bf16.msra.mxu0 0
        %4496 = vmatprep.subr.bf16.mxu0 0
        %4497 = vmatpush1.bf16.msra.mxu0 0
        %4498 = vmatprep.subr.bf16.mxu0 0
        %4499 = vmatpush1.bf16.msra.mxu0 0
        %4500 = vmatprep.subr.bf16.mxu0 0
        %4501 = vmatpush1.bf16.msra.mxu0 0
        %4502 = vmatprep.subr.bf16.mxu0 0
        %4503 = vmatpush1.bf16.msra.mxu0 0
        %4504 = vmatprep.subr.bf16.mxu0 0
        %4505 = vmatpush1.bf16.msra.mxu0 0
        %4506 = vmatprep.subr.bf16.mxu0 0
        %4507 = vmatpush1.bf16.msra.mxu0 0
        %4508 = vmatprep.subr.bf16.mxu0 0
        %4509 = vmatpush1.bf16.msra.mxu0 0
        %4510 = vmatprep.subr.bf16.mxu0 0
        %4511 = vmatpush1.bf16.msra.mxu0 0
        %4512 = vmatprep.subr.bf16.mxu0 0
        %4513 = vmatpush1.bf16.msra.mxu0 0
        %4514 = vmatprep.subr.bf16.mxu0 0
        %4515 = vmatpush1.bf16.msra.mxu0 0
        %4516 = vmatprep.subr.bf16.mxu0 0
        %4517 = vmatpush1.bf16.msra.mxu0 0
        %4518 = vmatprep.subr.bf16.mxu0 0
        %4519 = vmatpush1.bf16.msra.mxu0 0
        %4520 = vmatprep.subr.bf16.mxu0 0
        %4521 = vmatpush1.bf16.msra.mxu0 0
        %4522 = vmatprep.mubr.bf16.mxu0 0
        %4523 = vmatmul.mubr.bf16.gmra.mrb[0].mxu0 %v4485
        %v4524 = vpop.f32.mrb[0].mxu0
        %v4525 = vadd.f32 0.0, %v4524
        %v4526 = vpop.f32.mrb[0].mxu0
        %v4527 = vpop.f32.mrb[0].mxu0
        %v4528 = vadd.f32 0.0, %v4527
        %v4529 = vpop.f32.mrb[0].mxu0
        %4530 = vmatprep.mubr.bf16.mxu0 0
        %4531 = vmatmul.mubr.bf16.gmra.mrb[0].mxu0 %v4488
        %v4532 = vpop.f32.mrb[0].mxu0
        %v4533 = vadd.f32 0.0, %v4532
        %v4534 = vpop.f32.mrb[0].mxu0
        %v4535 = vpop.f32.mrb[0].mxu0
        %v4536 = vpop.f32.mrb[0].mxu0
        %4537 = vdwg.mxu0
        %v4538 = vld [vmem:[%s11] sm:$0x1]
        %v4540 = vlaneseq
        %v4541 = vshrl.u32 %v4540, 7
        %v4542 = vsub.s32 0, %v4541
        %v4543 = vrot.slane %v4538, %v4542
        %v4545 = vadd.f32 %v4525, %v4543
        %v4546 = vadd.f32 %v4528, %v4543
        %v4547 = vadd.f32 %v4533, %v4543
        %4548 = vst.msk [vmem:[%s612] sm:$0xff] %vm635, %v4545
        %4549 = vst.msk [vmem:[%s612 + $0x8] sm:$0xff] %vm635, %v4546
        %4550 = vst.msk [vmem:[%s612 + $0x10] sm:$0xff] %vm635, %v4547
        %s4551 = sand.u32 %s336, 1
        %s4552 = scalar_lea.sflag [#allocation7], %s4551
        %s4553 = sand.u32 %s336, 1
        %s4554 = smul.addr %s4553, 24
        %s4555 = scalar_lea.vmem [#allocation17], %s4554
        // Predicated region
        $region97: #{tpu_custom_call.1} parent=67 // pred_check
          %p4556 = pneg %p346
        $region98: #{tpu_custom_call.1} parent=67 // pred_check_branch
          %4558 = sbr.rel (%p4556) target = $region100
        $region99: #{tpu_custom_call.1} parent=67 // pred_region
          %s4559 = smul.u32 3, %s41
          %s4561 = ssub.s32 384, 384
          %4562 = vsyncadd %s4552, %s4561
          %s4563 = smul.addr %s40, 3
          %s4564 = sadd.s32 %s4559, %s4563
          %s4565 = smul.addr %s4564, 128
          %s4566 = scalar_lea.hbm %s12, %s4565
          %s4567 = sshll.u32 %s4555, 4
          %s4568 = int_to_ptr.vmem [resolvable:$true] %s4567
          %4573 = dma.vmem_to_hbm [thread:$0]  %s4568, 384, %s4566, %s4552, 128, 128, 8
        $region100: #{tpu_custom_call.1} parent=67 // pred_fallthru
          _
      $region68: #{tpu_custom_call.1} parent=5 // pred_fallthru
        _
      %p4574 = scmp.le.s32.totalorder 2, %s31
      // Predicated region
      $region101: #{tpu_custom_call.1} parent=5 // pred_check
        %p4575 = pneg %p4574
      $region102: #{tpu_custom_call.1} parent=5 // pred_check_branch
        %4577 = sbr.rel (%p4575) target = $region104
      $region103: #{tpu_custom_call.1} parent=5 // pred_region
        %s4578 = ssub.s32 %s31, 2
        // Predicated region
        $region105: #{tpu_custom_call.1} parent=103 // pred_check
          %p4579 = pneg %p352
        $region106: #{tpu_custom_call.1} parent=103 // pred_check_branch
          %4581 = sbr.rel (%p4579) target = $region108
        $region107: #{tpu_custom_call.1} parent=103 // pred_region
          %s4582 = sand.u32 %s337, 1
          %s4583 = scalar_lea.sflag [#allocation7], %s4582
          %s4584 = sand.u32 %s337, 1
          %s4585 = smul.addr %s4584, 24
          %s4586 = scalar_lea.vmem [#allocation17], %s4585
          %4587 = dma.done %s4583, 384
        $region108: #{tpu_custom_call.1} parent=103 // pred_fallthru
          _
      $region104: #{tpu_custom_call.1} parent=5 // pred_fallthru
        _
    $region6: #{tpu_custom_call.1} parent=1 // loop_footer
      %s35 = sadd.s32 1, %s31
    $region7: #{tpu_custom_call.1} parent=1 // loop_footer_branch
      %30 = sbr.rel target = $region3
    $region8: #{tpu_custom_call.1} parent=1 // loop_exit
      _
    %4588 = vsyncpa [#allocation6], 1
    %s4589 = scalar_lea.sflag [#allocation6], 1
    %4590 = vsyncpa %s4589, 1
    %4591 = vsyncpa [#allocation9], 1
    %s4592 = scalar_lea.sflag [#allocation9], 1
    %4593 = vsyncpa %s4592, 1
    %4594 = vsyncpa [#allocation12], 1
    %s4595 = scalar_lea.sflag [#allocation12], 1
    %4596 = vsyncpa %s4595, 1
    %4597 = vsyncpa [#allocation15], 1
    %4598 = vsyncpa [#allocation7], 1
    %s4599 = scalar_lea.sflag [#allocation7], 1
    %4600 = vsyncpa %s4599, 1

</llo_original>
